<compile_context>
chip_gen: v5e
topology: v5e:2x2
jax: 0.10.0
libtpu: 0.0.40
codegen_flags: <defaults>
</compile_context>

<pallas_src>
import functools

import jax
import jax.numpy as jnp
from jax import lax
from jax.experimental import pallas as pl
from jax.experimental.pallas import tpu as pltpu


# Keep >= this many LHS rows per shard so M's MXU weight pushes stay amortized
# over a reasonably full LHS (weight staging dominates below ~T rows).
_MIN_SHARD_ROWS = 128
# Full unroll of the CG loop only while the per-iteration live set is small.
_UNROLL_BYTES_CAP = 4 << 20


def _pick_vmem_limit_bytes():
    # Default scoped VMEM is 16 MiB (v5e) / 32 MiB (v6e, v7x); physical is
    # 128 MiB (v5e/v6e) / 64 MiB per TensorCore (v7x). Leave 16 MiB headroom
    # for Mosaic internal scratch.
    try:
        cap = int(pltpu.get_tpu_info().vmem_capacity_bytes)
    except Exception:
        cap = 64 * 1024 * 1024  # conservative (v7x-safe) fallback
    return int(max(cap - 16 * 1024 * 1024, 32 * 1024 * 1024))


def _cg_kernel(x_ref, adj_ref, m_ref, out_ref, *, lam, max_iter, eps, unroll):
    """Solve (M + lam*I) out = adj + lam*x for every (padded) batch row.

    x_ref, adj_ref, out_ref : (tile_b, N) f32 in VMEM
    m_ref                   : (N, N) bf16 symmetric-PSD normal operator
    """
    lam_f = jnp.float32(lam)
    eps_sq = jnp.float32(eps) ** 2

    def aop(v):
        # (A.normal + l2lam*I) v : bf16 x bf16 MXU matvec, f32 accumulation;
        # the Tikhonov term stays in f32 on the VPU.  M is read straight from
        # its VMEM ref (no hoisted copy -> no second (N,N) buffer).
        mv = jnp.dot(v.astype(jnp.bfloat16), m_ref[...],
                     preferred_element_type=jnp.float32)
        return mv + lam_f * v

    def fast_recip(d):
        # EUP approximate reciprocal + one Newton refinement: keeps the divide
        # off the VPU serial chain while matching 1/d to ~f32 precision.
        y = pl.reciprocal(d, approx=True)
        return y * (jnp.float32(2.0) - d * y)

    x_in = x_ref[...]
    adj = adj_ref[...]

    # rhs = adj + lam * x ; CG is started from x0 = rhs (as in the module).
    b = adj + lam_f * x_in
    x0 = b
    r0 = b - aop(x0)
    p0 = r0
    rs0 = jnp.sum(r0 * r0, axis=1, keepdims=True)  # zdot_batch: per-batch ||r||^2

    def body(_, carry):
        x, r, p, rsold = carry
        # PyTorch ConjGrad breaks at the top of the loop when
        # max_b ||r_b||^2 < eps^2.  Compute the flag first: it depends only on
        # the carried rsold, so the XLU reduce + scalar compare overlaps the
        # next matvec's weight push instead of gating it.
        active = jnp.max(rsold) >= eps_sq

        ap = aop(p)
        pap = jnp.sum(p * ap, axis=1, keepdims=True)
        # Frozen state via a single tiny (B,1) select: alpha = 0 keeps x and r
        # unchanged and makes rsnew == rsold exactly, so no full-width selects
        # on x / r / rsold are needed.  jnp.where is a true select, so any
        # post-convergence inf/NaN in the untaken branch is discarded.
        # (pap > 0 is guaranteed by the +lam*I term for non-zero p.)
        alpha = jnp.where(active, rsold * fast_recip(pap), jnp.float32(0.0))
        x = x + alpha * p
        r = r - alpha * ap
        rsnew = jnp.sum(r * r, axis=1, keepdims=True)
        beta = rsnew * fast_recip(rsold)
        # Keep one true select on p: if rsold hits exactly 0, beta is NaN and
        # must be discarded, never blended.
        p = jnp.where(active, beta * p + r, p)
        return x, r, p, rsnew

    # cg_max is static and small: unrolling gives the LLO scheduler visibility
    # across iterations (overlap reductions / axpys with the next matvec).
    x_out, _, _, _ = lax.fori_loop(0, max_iter, body, (x0, r0, p0, rs0),
                                   unroll=unroll)
    out_ref[...] = x_out.astype(out_ref.dtype)


def cg_module_forward(x, adj, normal_mat, *, lam_l2=0.05, cg_max=10, eps=1e-6):
    """Pallas implementation of CG_module.forward.

    x, adj     : [B, C, H, W] float32 (NCHW, as in PyTorch)
    normal_mat : [N, N] float32 symmetric PSD (A.normal as a matrix), N=C*H*W
    """
    B, C, H, W = x.shape
    N = C * H * W
    assert normal_mat.shape == (N, N)
    assert N % 128 == 0, "flattened vector length must be lane-aligned (x128)"

    # Flatten to lane-dense (B, N) and pad the batch up to 16 rows (bf16 LHS
    # vregs are (16,128)).  Edge padding replicates the last real row so (a)
    # no 0/0 appears in padded rows and (b) max_b ||r_b||^2 over the padded
    # batch equals the max over the real batch (exact PyTorch break semantics
    # for the unsharded path).
    x2 = x.reshape(B, N).astype(jnp.float32)
    adj2 = adj.reshape(B, N).astype(jnp.float32)
    B_pad = ((B + 15) // 16) * 16
    if B_pad != B:
        pad = ((0, B_pad - B), (0, 0))
        x2 = jnp.pad(x2, pad, mode="edge")
        adj2 = jnp.pad(adj2, pad, mode="edge")

    # bf16 normal operator: halves VMEM residency and load traffic of the
    # dominant (N, N) operand; the matvec still accumulates in f32 on the MXU.
    m_bf16 = normal_mat.astype(jnp.bfloat16)

    # Shard the batch across TensorCores (v7x has two) only when each shard
    # still keeps the MXU LHS full.  NOTE: when sharded, the ConjGrad
    # early-exit becomes a per-shard max instead of the global batch max —
    # numerically negligible (residual already < eps) but not bit-identical
    # to the PyTorch loop.
    if B_pad >= 2 * _MIN_SHARD_ROWS and (B_pad // 2) % 16 == 0:
        num_shards = 2
    else:
        num_shards = 1
    tile_b = B_pad // num_shards

    vmem_limit = _pick_vmem_limit_bytes()

    # Explicit residency guard for the VMEM-resident-M design (the tiled spec
    # used by the sharded path double-buffers M and the vector blocks).
    m_copies = 2 if num_shards > 1 else 1
    vec_copies = 2 if num_shards > 1 else 1
    m_bytes = m_copies * N * N * 2
    vec_bytes = vec_copies * 3 * tile_b * N * 4
    work_bytes = 6 * tile_b * N * 4          # x, r, p, ap + intermediates
    need = m_bytes + vec_bytes + work_bytes + (4 << 20)
    if need > vmem_limit:
        # TODO(synk): emit_pipeline HBM-streaming fallback for M (tile its
        # contraction dim with pl.Buffered(2-3)) once N^2*2 no longer fits.
        raise ValueError(
            f"normal operator does not fit VMEM-resident path: need ~{need} B "
            f"> vmem_limit {vmem_limit} B (N={N})")

    # Cap the unroll once the per-iteration live set gets large (avoids vreg
    # spills / VMEM temporary growth, which bites first on v7x's 64 MiB).
    per_iter_bytes = 6 * tile_b * N * 4
    unroll = True if per_iter_bytes <= _UNROLL_BYTES_CAP else 2

    kernel = functools.partial(
        _cg_kernel, lam=float(lam_l2), max_iter=int(cg_max), eps=float(eps),
        unroll=unroll)

    flops = 2 * (int(cg_max) + 1) * B_pad * N * N
    bytes_accessed = num_shards * N * N * 2 + 3 * B_pad * N * 4
    cost = pl.CostEstimate(flops=flops,
                           transcendentals=2 * int(cg_max) * B_pad,
                           bytes_accessed=bytes_accessed)

    if num_shards == 1:
        # Single invocation: whole arrays resident in VMEM, single-buffered.
        out2 = pl.pallas_call(
            kernel,
            out_shape=jax.ShapeDtypeStruct((B_pad, N), jnp.float32),
            in_specs=[
                pl.BlockSpec(memory_space=pltpu.MemorySpace.VMEM),
                pl.BlockSpec(memory_space=pltpu.MemorySpace.VMEM),
                pl.BlockSpec(memory_space=pltpu.MemorySpace.VMEM),
            ],
            out_specs=pl.BlockSpec(memory_space=pltpu.MemorySpace.VMEM),
            compiler_params=pltpu.CompilerParams(
                vmem_limit_bytes=vmem_limit),
            cost_estimate=cost,
        )(x2, adj2, m_bf16)
    else:
        # Two batch shards, marked parallel so v7x's two TensorCores split
        # them (serial loop on single-TC chips).  M's index_map is constant so
        # it is DMA'd once per core and stays resident.
        out2 = pl.pallas_call(
            kernel,
            out_shape=jax.ShapeDtypeStruct((B_pad, N), jnp.float32),
            grid=(num_shards,),
            in_specs=[
                pl.BlockSpec((tile_b, N), lambda i: (i, 0)),
                pl.BlockSpec((tile_b, N), lambda i: (i, 0)),
                pl.BlockSpec((N, N), lambda i: (0, 0)),
            ],
            out_specs=pl.BlockSpec((tile_b, N), lambda i: (i, 0)),
            compiler_params=pltpu.CompilerParams(
                dimension_semantics=("parallel",),
                vmem_limit_bytes=vmem_limit),
            cost_estimate=cost,
        )(x2, adj2, m_bf16)

    return out2[:B].reshape(B, C, H, W)


def _cg_reference(x2, adj2, m_bf16, *, lam_l2, cg_max, eps):
    """Pure-JAX mirror of the kernel algorithm (exact division) for checking."""
    lam_f = jnp.float32(lam_l2)

    def aop(v):
        return jnp.dot(v.astype(jnp.bfloat16), m_bf16,
                       preferred_element_type=jnp.float32) + lam_f * v

    b = adj2 + lam_f * x2
    xk = b
    r = b - aop(xk)
    p = r
    rsold = jnp.sum(r * r, axis=1, keepdims=True)
    for _ in range(int(cg_max)):
        if float(jnp.max(rsold)) < float(eps) ** 2:
            break
        ap = aop(p)
        pap = jnp.sum(p * ap, axis=1, keepdims=True)
        alpha = rsold / pap
        xk = xk + alpha * p
        r = r - alpha * ap
        rsnew = jnp.sum(r * r, axis=1, keepdims=True)
        p = (rsnew / rsold) * p + r
        rsold = rsnew
    return xk


if __name__ == "__main__":
    lam_l2 = 0.05
    cg_max = 10

    key = jax.random.PRNGKey(0)
    kx, kadj, kg, kxb, kab = jax.random.split(key, 5)

    # Small shapes consistent with the module: NCHW image-like input.
    B, C, H, W = 2, 2, 16, 16
    N = C * H * W  # 512

    x = jax.random.normal(kx, (B, C, H, W), dtype=jnp.float32)
    adj = jax.random.normal(kadj, (B, C, H, W), dtype=jnp.float32)

    # Synthetic A.normal = G^T G / K (symmetric PSD), standing in for the
    # SENSE/Fourier normal operator the real module receives via initiate().
    K = N // 2  # "undersampled measurement" dimension
    G = jax.random.normal(kg, (K, N), dtype=jnp.float32) / jnp.sqrt(jnp.float32(K))
    normal_mat = G.T @ G
    # TODO(synk): the true MoDL A.normal (coil maps + masked FFT) has no clean
    # Pallas equivalent (needs FFT); modeled here as an explicit SPD matrix.

    def check(x_nchw, adj_nchw, tag):
        out = cg_module_forward(x_nchw, adj_nchw, normal_mat,
                                lam_l2=lam_l2, cg_max=cg_max)
        out = jax.block_until_ready(out)
        assert out.shape == x_nchw.shape
        assert bool(jnp.all(jnp.isfinite(out)))
        bb = x_nchw.shape[0]
        ref = _cg_reference(
            x_nchw.reshape(bb, N).astype(jnp.float32),
            adj_nchw.reshape(bb, N).astype(jnp.float32),
            normal_mat.astype(jnp.bfloat16),
            lam_l2=lam_l2, cg_max=cg_max, eps=1e-6,
        ).reshape(x_nchw.shape)
        rel_err = float(jnp.max(jnp.abs(out - ref)) /
                        jnp.maximum(jnp.max(jnp.abs(ref)), 1.0))
        assert rel_err < 1e-2, f"{tag}: kernel vs reference rel_max_err={rel_err}"

    # 1) Small-batch path: single invocation, whole-VMEM residency.
    check(x, adj, "small")

    # 2) Larger-batch path: exercises the batch-sharded grid
    #    (dimension_semantics=("parallel",) -> both TensorCores on v7x) and
    #    the amortization of M's MXU weight pushes over 128 LHS rows/shard.
    B_big = 256
    x_big = jax.random.normal(kxb, (B_big, C, H, W), dtype=jnp.float32)
    adj_big = jax.random.normal(kab, (B_big, C, H, W), dtype=jnp.float32)
    check(x_big, adj_big, "sharded")

    print("KERNEL_OK")
</pallas_src>

<mosaic_0001>
module attributes {stable_mosaic.version = 11 : i64} {
  func.func @_cg_kernel(%arg0: memref<16x512xf32, #tpu.memory_space<vmem>>, %arg1: memref<16x512xf32, #tpu.memory_space<vmem>>, %arg2: memref<512x512xbf16, #tpu.memory_space<vmem>>, %arg3: memref<16x512xf32, #tpu.memory_space<vmem>>) attributes {dimension_semantics = [], scalar_prefetch = 0 : i64, scratch_operands = 0 : i64, tpu.core_type = #tpu.core_type<tc>} {
    %cst = arith.constant 9.99999997E-7 : f32
    %0 = arith.mulf %cst, %cst : f32
    %c0 = arith.constant 0 : index
    %c0_0 = arith.constant 0 : index
    %1 = vector.load %arg0[%c0, %c0_0] : memref<16x512xf32, #tpu.memory_space<vmem>>, vector<16x512xf32>
    %c0_1 = arith.constant 0 : index
    %c0_2 = arith.constant 0 : index
    %2 = vector.load %arg1[%c0_1, %c0_2] : memref<16x512xf32, #tpu.memory_space<vmem>>, vector<16x512xf32>
    %cst_3 = arith.constant 5.000000e-02 : f32
    %3 = vector.broadcast %cst_3 : f32 to vector<16x512xf32>
    %4 = arith.mulf %3, %1 : vector<16x512xf32>
    %5 = arith.addf %2, %4 : vector<16x512xf32>
    %6 = arith.truncf %5 : vector<16x512xf32> to vector<16x512xbf16>
    %c0_4 = arith.constant 0 : index
    %c0_5 = arith.constant 0 : index
    %7 = vector.load %arg2[%c0_4, %c0_5] : memref<512x512xbf16, #tpu.memory_space<vmem>>, vector<512x512xbf16>
    %cst_6 = arith.constant dense<0.000000e+00> : vector<16x512xf32>
    %8 = tpu.matmul %6, %7, %cst_6 {dimension_numbers = #tpu.dot_dimension_numbers<[1], [0], [0], [1], [0, 0, 1, 1], [], []>} : vector<16x512xbf16>, vector<512x512xbf16>, vector<16x512xf32> -> vector<16x512xf32>
    %cst_7 = arith.constant 5.000000e-02 : f32
    %9 = vector.broadcast %cst_7 : f32 to vector<16x512xf32>
    %10 = arith.mulf %9, %5 : vector<16x512xf32>
    %11 = arith.addf %8, %10 : vector<16x512xf32>
    %12 = arith.subf %5, %11 : vector<16x512xf32>
    %13 = arith.mulf %12, %12 : vector<16x512xf32>
    %cst_8 = arith.constant dense<0.000000e+00> : vector<16xf32>
    %14 = vector.multi_reduction <add>, %13, %cst_8 [1] : vector<16x512xf32> to vector<16xf32>
    %15 = vector.shape_cast %14 : vector<16xf32> to vector<16x1xf32>
    %cst_9 = arith.constant 5.000000e-02 : f32
    %c0_i32 = arith.constant 0 : i32
    %16 = vector.shape_cast %15 : vector<16x1xf32> to vector<1x16x1xf32>
    %cst_10 = arith.constant dense<0xFF800000> : vector<1xf32>
    %17 = vector.multi_reduction <maximumf>, %16, %cst_10 [1, 2] : vector<1x16x1xf32> to vector<1xf32>
    %18 = vector.shape_cast %17 : vector<1xf32> to vector<1x1x1xf32>
    %19 = vector.extract %18[0, 0, 0] : f32 from vector<1x1x1xf32>
    %20 = arith.cmpf oge, %19, %0 : f32
    %21 = arith.truncf %12 : vector<16x512xf32> to vector<16x512xbf16>
    %c0_11 = arith.constant 0 : index
    %c0_12 = arith.constant 0 : index
    %22 = vector.load %arg2[%c0_11, %c0_12] : memref<512x512xbf16, #tpu.memory_space<vmem>>, vector<512x512xbf16>
    %cst_13 = arith.constant dense<0.000000e+00> : vector<16x512xf32>
    %23 = tpu.matmul %21, %22, %cst_13 {dimension_numbers = #tpu.dot_dimension_numbers<[1], [0], [0], [1], [0, 0, 1, 1], [], []>} : vector<16x512xbf16>, vector<512x512xbf16>, vector<16x512xf32> -> vector<16x512xf32>
    %24 = vector.broadcast %cst_9 : f32 to vector<16x512xf32>
    %25 = arith.mulf %24, %12 : vector<16x512xf32>
    %26 = arith.addf %23, %25 : vector<16x512xf32>
    %27 = arith.mulf %12, %26 : vector<16x512xf32>
    %cst_14 = arith.constant dense<0.000000e+00> : vector<16xf32>
    %28 = vector.multi_reduction <add>, %27, %cst_14 [1] : vector<16x512xf32> to vector<16xf32>
    %29 = vector.shape_cast %28 : vector<16xf32> to vector<16x1xf32>
    %30 = tpu.reciprocal %29 {approx = true} : vector<16x1xf32> -> vector<16x1xf32>
    %31 = arith.mulf %29, %30 : vector<16x1xf32>
    %cst_15 = arith.constant 2.000000e+00 : f32
    %32 = vector.broadcast %cst_15 : f32 to vector<16x1xf32>
    %33 = arith.subf %32, %31 : vector<16x1xf32>
    %34 = arith.mulf %30, %33 : vector<16x1xf32>
    %35 = arith.mulf %15, %34 : vector<16x1xf32>
    %cst_16 = arith.constant 0.000000e+00 : f32
    %36 = vector.broadcast %cst_16 : f32 to vector<16x1xf32>
    %37 = arith.select %20, %35, %36 : vector<16x1xf32>
    %38 = vector.broadcast %37 : vector<16x1xf32> to vector<16x512xf32>
    %39 = arith.mulf %38, %12 : vector<16x512xf32>
    %40 = arith.addf %5, %39 : vector<16x512xf32>
    %41 = vector.broadcast %37 : vector<16x1xf32> to vector<16x512xf32>
    %42 = arith.mulf %41, %26 : vector<16x512xf32>
    %43 = arith.subf %12, %42 : vector<16x512xf32>
    %44 = arith.mulf %43, %43 : vector<16x512xf32>
    %cst_17 = arith.constant dense<0.000000e+00> : vector<16xf32>
    %45 = vector.multi_reduction <add>, %44, %cst_17 [1] : vector<16x512xf32> to vector<16xf32>
    %46 = vector.shape_cast %45 : vector<16xf32> to vector<16x1xf32>
    %47 = tpu.reciprocal %15 {approx = true} : vector<16x1xf32> -> vector<16x1xf32>
    %48 = arith.mulf %15, %47 : vector<16x1xf32>
    %cst_18 = arith.constant 2.000000e+00 : f32
    %49 = vector.broadcast %cst_18 : f32 to vector<16x1xf32>
    %50 = arith.subf %49, %48 : vector<16x1xf32>
    %51 = arith.mulf %47, %50 : vector<16x1xf32>
    %52 = arith.mulf %46, %51 : vector<16x1xf32>
    %53 = vector.broadcast %52 : vector<16x1xf32> to vector<16x512xf32>
    %54 = arith.mulf %53, %12 : vector<16x512xf32>
    %55 = arith.addf %54, %43 : vector<16x512xf32>
    %56 = arith.select %20, %55, %12 : vector<16x512xf32>
    %c1_i32 = arith.constant 1 : i32
    %57 = vector.shape_cast %46 : vector<16x1xf32> to vector<1x16x1xf32>
    %cst_19 = arith.constant dense<0xFF800000> : vector<1xf32>
    %58 = vector.multi_reduction <maximumf>, %57, %cst_19 [1, 2] : vector<1x16x1xf32> to vector<1xf32>
    %59 = vector.shape_cast %58 : vector<1xf32> to vector<1x1x1xf32>
    %60 = vector.extract %59[0, 0, 0] : f32 from vector<1x1x1xf32>
    %61 = arith.cmpf oge, %60, %0 : f32
    %62 = arith.truncf %56 : vector<16x512xf32> to vector<16x512xbf16>
    %c0_20 = arith.constant 0 : index
    %c0_21 = arith.constant 0 : index
    %63 = vector.load %arg2[%c0_20, %c0_21] : memref<512x512xbf16, #tpu.memory_space<vmem>>, vector<512x512xbf16>
    %cst_22 = arith.constant dense<0.000000e+00> : vector<16x512xf32>
    %64 = tpu.matmul %62, %63, %cst_22 {dimension_numbers = #tpu.dot_dimension_numbers<[1], [0], [0], [1], [0, 0, 1, 1], [], []>} : vector<16x512xbf16>, vector<512x512xbf16>, vector<16x512xf32> -> vector<16x512xf32>
    %65 = vector.broadcast %cst_9 : f32 to vector<16x512xf32>
    %66 = arith.mulf %65, %56 : vector<16x512xf32>
    %67 = arith.addf %64, %66 : vector<16x512xf32>
    %68 = arith.mulf %56, %67 : vector<16x512xf32>
    %cst_23 = arith.constant dense<0.000000e+00> : vector<16xf32>
    %69 = vector.multi_reduction <add>, %68, %cst_23 [1] : vector<16x512xf32> to vector<16xf32>
    %70 = vector.shape_cast %69 : vector<16xf32> to vector<16x1xf32>
    %71 = tpu.reciprocal %70 {approx = true} : vector<16x1xf32> -> vector<16x1xf32>
    %72 = arith.mulf %70, %71 : vector<16x1xf32>
    %cst_24 = arith.constant 2.000000e+00 : f32
    %73 = vector.broadcast %cst_24 : f32 to vector<16x1xf32>
    %74 = arith.subf %73, %72 : vector<16x1xf32>
    %75 = arith.mulf %71, %74 : vector<16x1xf32>
    %76 = arith.mulf %46, %75 : vector<16x1xf32>
    %cst_25 = arith.constant 0.000000e+00 : f32
    %77 = vector.broadcast %cst_25 : f32 to vector<16x1xf32>
    %78 = arith.select %61, %76, %77 : vector<16x1xf32>
    %79 = vector.broadcast %78 : vector<16x1xf32> to vector<16x512xf32>
    %80 = arith.mulf %79, %56 : vector<16x512xf32>
    %81 = arith.addf %40, %80 : vector<16x512xf32>
    %82 = vector.broadcast %78 : vector<16x1xf32> to vector<16x512xf32>
    %83 = arith.mulf %82, %67 : vector<16x512xf32>
    %84 = arith.subf %43, %83 : vector<16x512xf32>
    %85 = arith.mulf %84, %84 : vector<16x512xf32>
    %cst_26 = arith.constant dense<0.000000e+00> : vector<16xf32>
    %86 = vector.multi_reduction <add>, %85, %cst_26 [1] : vector<16x512xf32> to vector<16xf32>
    %87 = vector.shape_cast %86 : vector<16xf32> to vector<16x1xf32>
    %88 = tpu.reciprocal %46 {approx = true} : vector<16x1xf32> -> vector<16x1xf32>
    %89 = arith.mulf %46, %88 : vector<16x1xf32>
    %cst_27 = arith.constant 2.000000e+00 : f32
    %90 = vector.broadcast %cst_27 : f32 to vector<16x1xf32>
    %91 = arith.subf %90, %89 : vector<16x1xf32>
    %92 = arith.mulf %88, %91 : vector<16x1xf32>
    %93 = arith.mulf %87, %92 : vector<16x1xf32>
    %94 = vector.broadcast %93 : vector<16x1xf32> to vector<16x512xf32>
    %95 = arith.mulf %94, %56 : vector<16x512xf32>
    %96 = arith.addf %95, %84 : vector<16x512xf32>
    %97 = arith.select %61, %96, %56 : vector<16x512xf32>
    %c2_i32 = arith.constant 2 : i32
    %98 = vector.shape_cast %87 : vector<16x1xf32> to vector<1x16x1xf32>
    %cst_28 = arith.constant dense<0xFF800000> : vector<1xf32>
    %99 = vector.multi_reduction <maximumf>, %98, %cst_28 [1, 2] : vector<1x16x1xf32> to vector<1xf32>
    %100 = vector.shape_cast %99 : vector<1xf32> to vector<1x1x1xf32>
    %101 = vector.extract %100[0, 0, 0] : f32 from vector<1x1x1xf32>
    %102 = arith.cmpf oge, %101, %0 : f32
    %103 = arith.truncf %97 : vector<16x512xf32> to vector<16x512xbf16>
    %c0_29 = arith.constant 0 : index
    %c0_30 = arith.constant 0 : index
    %104 = vector.load %arg2[%c0_29, %c0_30] : memref<512x512xbf16, #tpu.memory_space<vmem>>, vector<512x512xbf16>
    %cst_31 = arith.constant dense<0.000000e+00> : vector<16x512xf32>
    %105 = tpu.matmul %103, %104, %cst_31 {dimension_numbers = #tpu.dot_dimension_numbers<[1], [0], [0], [1], [0, 0, 1, 1], [], []>} : vector<16x512xbf16>, vector<512x512xbf16>, vector<16x512xf32> -> vector<16x512xf32>
    %106 = vector.broadcast %cst_9 : f32 to vector<16x512xf32>
    %107 = arith.mulf %106, %97 : vector<16x512xf32>
    %108 = arith.addf %105, %107 : vector<16x512xf32>
    %109 = arith.mulf %97, %108 : vector<16x512xf32>
    %cst_32 = arith.constant dense<0.000000e+00> : vector<16xf32>
    %110 = vector.multi_reduction <add>, %109, %cst_32 [1] : vector<16x512xf32> to vector<16xf32>
    %111 = vector.shape_cast %110 : vector<16xf32> to vector<16x1xf32>
    %112 = tpu.reciprocal %111 {approx = true} : vector<16x1xf32> -> vector<16x1xf32>
    %113 = arith.mulf %111, %112 : vector<16x1xf32>
    %cst_33 = arith.constant 2.000000e+00 : f32
    %114 = vector.broadcast %cst_33 : f32 to vector<16x1xf32>
    %115 = arith.subf %114, %113 : vector<16x1xf32>
    %116 = arith.mulf %112, %115 : vector<16x1xf32>
    %117 = arith.mulf %87, %116 : vector<16x1xf32>
    %cst_34 = arith.constant 0.000000e+00 : f32
    %118 = vector.broadcast %cst_34 : f32 to vector<16x1xf32>
    %119 = arith.select %102, %117, %118 : vector<16x1xf32>
    %120 = vector.broadcast %119 : vector<16x1xf32> to vector<16x512xf32>
    %121 = arith.mulf %120, %97 : vector<16x512xf32>
    %122 = arith.addf %81, %121 : vector<16x512xf32>
    %123 = vector.broadcast %119 : vector<16x1xf32> to vector<16x512xf32>
    %124 = arith.mulf %123, %108 : vector<16x512xf32>
    %125 = arith.subf %84, %124 : vector<16x512xf32>
    %126 = arith.mulf %125, %125 : vector<16x512xf32>
    %cst_35 = arith.constant dense<0.000000e+00> : vector<16xf32>
    %127 = vector.multi_reduction <add>, %126, %cst_35 [1] : vector<16x512xf32> to vector<16xf32>
    %128 = vector.shape_cast %127 : vector<16xf32> to vector<16x1xf32>
    %129 = tpu.reciprocal %87 {approx = true} : vector<16x1xf32> -> vector<16x1xf32>
    %130 = arith.mulf %87, %129 : vector<16x1xf32>
    %cst_36 = arith.constant 2.000000e+00 : f32
    %131 = vector.broadcast %cst_36 : f32 to vector<16x1xf32>
    %132 = arith.subf %131, %130 : vector<16x1xf32>
    %133 = arith.mulf %129, %132 : vector<16x1xf32>
    %134 = arith.mulf %128, %133 : vector<16x1xf32>
    %135 = vector.broadcast %134 : vector<16x1xf32> to vector<16x512xf32>
    %136 = arith.mulf %135, %97 : vector<16x512xf32>
    %137 = arith.addf %136, %125 : vector<16x512xf32>
    %138 = arith.select %102, %137, %97 : vector<16x512xf32>
    %c3_i32 = arith.constant 3 : i32
    %139 = vector.shape_cast %128 : vector<16x1xf32> to vector<1x16x1xf32>
    %cst_37 = arith.constant dense<0xFF800000> : vector<1xf32>
    %140 = vector.multi_reduction <maximumf>, %139, %cst_37 [1, 2] : vector<1x16x1xf32> to vector<1xf32>
    %141 = vector.shape_cast %140 : vector<1xf32> to vector<1x1x1xf32>
    %142 = vector.extract %141[0, 0, 0] : f32 from vector<1x1x1xf32>
    %143 = arith.cmpf oge, %142, %0 : f32
    %144 = arith.truncf %138 : vector<16x512xf32> to vector<16x512xbf16>
    %c0_38 = arith.constant 0 : index
    %c0_39 = arith.constant 0 : index
    %145 = vector.load %arg2[%c0_38, %c0_39] : memref<512x512xbf16, #tpu.memory_space<vmem>>, vector<512x512xbf16>
    %cst_40 = arith.constant dense<0.000000e+00> : vector<16x512xf32>
    %146 = tpu.matmul %144, %145, %cst_40 {dimension_numbers = #tpu.dot_dimension_numbers<[1], [0], [0], [1], [0, 0, 1, 1], [], []>} : vector<16x512xbf16>, vector<512x512xbf16>, vector<16x512xf32> -> vector<16x512xf32>
    %147 = vector.broadcast %cst_9 : f32 to vector<16x512xf32>
    %148 = arith.mulf %147, %138 : vector<16x512xf32>
    %149 = arith.addf %146, %148 : vector<16x512xf32>
    %150 = arith.mulf %138, %149 : vector<16x512xf32>
    %cst_41 = arith.constant dense<0.000000e+00> : vector<16xf32>
    %151 = vector.multi_reduction <add>, %150, %cst_41 [1] : vector<16x512xf32> to vector<16xf32>
    %152 = vector.shape_cast %151 : vector<16xf32> to vector<16x1xf32>
    %153 = tpu.reciprocal %152 {approx = true} : vector<16x1xf32> -> vector<16x1xf32>
    %154 = arith.mulf %152, %153 : vector<16x1xf32>
    %cst_42 = arith.constant 2.000000e+00 : f32
    %155 = vector.broadcast %cst_42 : f32 to vector<16x1xf32>
    %156 = arith.subf %155, %154 : vector<16x1xf32>
    %157 = arith.mulf %153, %156 : vector<16x1xf32>
    %158 = arith.mulf %128, %157 : vector<16x1xf32>
    %cst_43 = arith.constant 0.000000e+00 : f32
    %159 = vector.broadcast %cst_43 : f32 to vector<16x1xf32>
    %160 = arith.select %143, %158, %159 : vector<16x1xf32>
    %161 = vector.broadcast %160 : vector<16x1xf32> to vector<16x512xf32>
    %162 = arith.mulf %161, %138 : vector<16x512xf32>
    %163 = arith.addf %122, %162 : vector<16x512xf32>
    %164 = vector.broadcast %160 : vector<16x1xf32> to vector<16x512xf32>
    %165 = arith.mulf %164, %149 : vector<16x512xf32>
    %166 = arith.subf %125, %165 : vector<16x512xf32>
    %167 = arith.mulf %166, %166 : vector<16x512xf32>
    %cst_44 = arith.constant dense<0.000000e+00> : vector<16xf32>
    %168 = vector.multi_reduction <add>, %167, %cst_44 [1] : vector<16x512xf32> to vector<16xf32>
    %169 = vector.shape_cast %168 : vector<16xf32> to vector<16x1xf32>
    %170 = tpu.reciprocal %128 {approx = true} : vector<16x1xf32> -> vector<16x1xf32>
    %171 = arith.mulf %128, %170 : vector<16x1xf32>
    %cst_45 = arith.constant 2.000000e+00 : f32
    %172 = vector.broadcast %cst_45 : f32 to vector<16x1xf32>
    %173 = arith.subf %172, %171 : vector<16x1xf32>
    %174 = arith.mulf %170, %173 : vector<16x1xf32>
    %175 = arith.mulf %169, %174 : vector<16x1xf32>
    %176 = vector.broadcast %175 : vector<16x1xf32> to vector<16x512xf32>
    %177 = arith.mulf %176, %138 : vector<16x512xf32>
    %178 = arith.addf %177, %166 : vector<16x512xf32>
    %179 = arith.select %143, %178, %138 : vector<16x512xf32>
    %c4_i32 = arith.constant 4 : i32
    %180 = vector.shape_cast %169 : vector<16x1xf32> to vector<1x16x1xf32>
    %cst_46 = arith.constant dense<0xFF800000> : vector<1xf32>
    %181 = vector.multi_reduction <maximumf>, %180, %cst_46 [1, 2] : vector<1x16x1xf32> to vector<1xf32>
    %182 = vector.shape_cast %181 : vector<1xf32> to vector<1x1x1xf32>
    %183 = vector.extract %182[0, 0, 0] : f32 from vector<1x1x1xf32>
    %184 = arith.cmpf oge, %183, %0 : f32
    %185 = arith.truncf %179 : vector<16x512xf32> to vector<16x512xbf16>
    %c0_47 = arith.constant 0 : index
    %c0_48 = arith.constant 0 : index
    %186 = vector.load %arg2[%c0_47, %c0_48] : memref<512x512xbf16, #tpu.memory_space<vmem>>, vector<512x512xbf16>
    %cst_49 = arith.constant dense<0.000000e+00> : vector<16x512xf32>
    %187 = tpu.matmul %185, %186, %cst_49 {dimension_numbers = #tpu.dot_dimension_numbers<[1], [0], [0], [1], [0, 0, 1, 1], [], []>} : vector<16x512xbf16>, vector<512x512xbf16>, vector<16x512xf32> -> vector<16x512xf32>
    %188 = vector.broadcast %cst_9 : f32 to vector<16x512xf32>
    %189 = arith.mulf %188, %179 : vector<16x512xf32>
    %190 = arith.addf %187, %189 : vector<16x512xf32>
    %191 = arith.mulf %179, %190 : vector<16x512xf32>
    %cst_50 = arith.constant dense<0.000000e+00> : vector<16xf32>
    %192 = vector.multi_reduction <add>, %191, %cst_50 [1] : vector<16x512xf32> to vector<16xf32>
    %193 = vector.shape_cast %192 : vector<16xf32> to vector<16x1xf32>
    %194 = tpu.reciprocal %193 {approx = true} : vector<16x1xf32> -> vector<16x1xf32>
    %195 = arith.mulf %193, %194 : vector<16x1xf32>
    %cst_51 = arith.constant 2.000000e+00 : f32
    %196 = vector.broadcast %cst_51 : f32 to vector<16x1xf32>
    %197 = arith.subf %196, %195 : vector<16x1xf32>
    %198 = arith.mulf %194, %197 : vector<16x1xf32>
    %199 = arith.mulf %169, %198 : vector<16x1xf32>
    %cst_52 = arith.constant 0.000000e+00 : f32
    %200 = vector.broadcast %cst_52 : f32 to vector<16x1xf32>
    %201 = arith.select %184, %199, %200 : vector<16x1xf32>
    %202 = vector.broadcast %201 : vector<16x1xf32> to vector<16x512xf32>
    %203 = arith.mulf %202, %179 : vector<16x512xf32>
    %204 = arith.addf %163, %203 : vector<16x512xf32>
    %205 = vector.broadcast %201 : vector<16x1xf32> to vector<16x512xf32>
    %206 = arith.mulf %205, %190 : vector<16x512xf32>
    %207 = arith.subf %166, %206 : vector<16x512xf32>
    %208 = arith.mulf %207, %207 : vector<16x512xf32>
    %cst_53 = arith.constant dense<0.000000e+00> : vector<16xf32>
    %209 = vector.multi_reduction <add>, %208, %cst_53 [1] : vector<16x512xf32> to vector<16xf32>
    %210 = vector.shape_cast %209 : vector<16xf32> to vector<16x1xf32>
    %211 = tpu.reciprocal %169 {approx = true} : vector<16x1xf32> -> vector<16x1xf32>
    %212 = arith.mulf %169, %211 : vector<16x1xf32>
    %cst_54 = arith.constant 2.000000e+00 : f32
    %213 = vector.broadcast %cst_54 : f32 to vector<16x1xf32>
    %214 = arith.subf %213, %212 : vector<16x1xf32>
    %215 = arith.mulf %211, %214 : vector<16x1xf32>
    %216 = arith.mulf %210, %215 : vector<16x1xf32>
    %217 = vector.broadcast %216 : vector<16x1xf32> to vector<16x512xf32>
    %218 = arith.mulf %217, %179 : vector<16x512xf32>
    %219 = arith.addf %218, %207 : vector<16x512xf32>
    %220 = arith.select %184, %219, %179 : vector<16x512xf32>
    %c5_i32 = arith.constant 5 : i32
    %221 = vector.shape_cast %210 : vector<16x1xf32> to vector<1x16x1xf32>
    %cst_55 = arith.constant dense<0xFF800000> : vector<1xf32>
    %222 = vector.multi_reduction <maximumf>, %221, %cst_55 [1, 2] : vector<1x16x1xf32> to vector<1xf32>
    %223 = vector.shape_cast %222 : vector<1xf32> to vector<1x1x1xf32>
    %224 = vector.extract %223[0, 0, 0] : f32 from vector<1x1x1xf32>
    %225 = arith.cmpf oge, %224, %0 : f32
    %226 = arith.truncf %220 : vector<16x512xf32> to vector<16x512xbf16>
    %c0_56 = arith.constant 0 : index
    %c0_57 = arith.constant 0 : index
    %227 = vector.load %arg2[%c0_56, %c0_57] : memref<512x512xbf16, #tpu.memory_space<vmem>>, vector<512x512xbf16>
    %cst_58 = arith.constant dense<0.000000e+00> : vector<16x512xf32>
    %228 = tpu.matmul %226, %227, %cst_58 {dimension_numbers = #tpu.dot_dimension_numbers<[1], [0], [0], [1], [0, 0, 1, 1], [], []>} : vector<16x512xbf16>, vector<512x512xbf16>, vector<16x512xf32> -> vector<16x512xf32>
    %229 = vector.broadcast %cst_9 : f32 to vector<16x512xf32>
    %230 = arith.mulf %229, %220 : vector<16x512xf32>
    %231 = arith.addf %228, %230 : vector<16x512xf32>
    %232 = arith.mulf %220, %231 : vector<16x512xf32>
    %cst_59 = arith.constant dense<0.000000e+00> : vector<16xf32>
    %233 = vector.multi_reduction <add>, %232, %cst_59 [1] : vector<16x512xf32> to vector<16xf32>
    %234 = vector.shape_cast %233 : vector<16xf32> to vector<16x1xf32>
    %235 = tpu.reciprocal %234 {approx = true} : vector<16x1xf32> -> vector<16x1xf32>
    %236 = arith.mulf %234, %235 : vector<16x1xf32>
    %cst_60 = arith.constant 2.000000e+00 : f32
    %237 = vector.broadcast %cst_60 : f32 to vector<16x1xf32>
    %238 = arith.subf %237, %236 : vector<16x1xf32>
    %239 = arith.mulf %235, %238 : vector<16x1xf32>
    %240 = arith.mulf %210, %239 : vector<16x1xf32>
    %cst_61 = arith.constant 0.000000e+00 : f32
    %241 = vector.broadcast %cst_61 : f32 to vector<16x1xf32>
    %242 = arith.select %225, %240, %241 : vector<16x1xf32>
    %243 = vector.broadcast %242 : vector<16x1xf32> to vector<16x512xf32>
    %244 = arith.mulf %243, %220 : vector<16x512xf32>
    %245 = arith.addf %204, %244 : vector<16x512xf32>
    %246 = vector.broadcast %242 : vector<16x1xf32> to vector<16x512xf32>
    %247 = arith.mulf %246, %231 : vector<16x512xf32>
    %248 = arith.subf %207, %247 : vector<16x512xf32>
    %249 = arith.mulf %248, %248 : vector<16x512xf32>
    %cst_62 = arith.constant dense<0.000000e+00> : vector<16xf32>
    %250 = vector.multi_reduction <add>, %249, %cst_62 [1] : vector<16x512xf32> to vector<16xf32>
    %251 = vector.shape_cast %250 : vector<16xf32> to vector<16x1xf32>
    %252 = tpu.reciprocal %210 {approx = true} : vector<16x1xf32> -> vector<16x1xf32>
    %253 = arith.mulf %210, %252 : vector<16x1xf32>
    %cst_63 = arith.constant 2.000000e+00 : f32
    %254 = vector.broadcast %cst_63 : f32 to vector<16x1xf32>
    %255 = arith.subf %254, %253 : vector<16x1xf32>
    %256 = arith.mulf %252, %255 : vector<16x1xf32>
    %257 = arith.mulf %251, %256 : vector<16x1xf32>
    %258 = vector.broadcast %257 : vector<16x1xf32> to vector<16x512xf32>
    %259 = arith.mulf %258, %220 : vector<16x512xf32>
    %260 = arith.addf %259, %248 : vector<16x512xf32>
    %261 = arith.select %225, %260, %220 : vector<16x512xf32>
    %c6_i32 = arith.constant 6 : i32
    %262 = vector.shape_cast %251 : vector<16x1xf32> to vector<1x16x1xf32>
    %cst_64 = arith.constant dense<0xFF800000> : vector<1xf32>
    %263 = vector.multi_reduction <maximumf>, %262, %cst_64 [1, 2] : vector<1x16x1xf32> to vector<1xf32>
    %264 = vector.shape_cast %263 : vector<1xf32> to vector<1x1x1xf32>
    %265 = vector.extract %264[0, 0, 0] : f32 from vector<1x1x1xf32>
    %266 = arith.cmpf oge, %265, %0 : f32
    %267 = arith.truncf %261 : vector<16x512xf32> to vector<16x512xbf16>
    %c0_65 = arith.constant 0 : index
    %c0_66 = arith.constant 0 : index
    %268 = vector.load %arg2[%c0_65, %c0_66] : memref<512x512xbf16, #tpu.memory_space<vmem>>, vector<512x512xbf16>
    %cst_67 = arith.constant dense<0.000000e+00> : vector<16x512xf32>
    %269 = tpu.matmul %267, %268, %cst_67 {dimension_numbers = #tpu.dot_dimension_numbers<[1], [0], [0], [1], [0, 0, 1, 1], [], []>} : vector<16x512xbf16>, vector<512x512xbf16>, vector<16x512xf32> -> vector<16x512xf32>
    %270 = vector.broadcast %cst_9 : f32 to vector<16x512xf32>
    %271 = arith.mulf %270, %261 : vector<16x512xf32>
    %272 = arith.addf %269, %271 : vector<16x512xf32>
    %273 = arith.mulf %261, %272 : vector<16x512xf32>
    %cst_68 = arith.constant dense<0.000000e+00> : vector<16xf32>
    %274 = vector.multi_reduction <add>, %273, %cst_68 [1] : vector<16x512xf32> to vector<16xf32>
    %275 = vector.shape_cast %274 : vector<16xf32> to vector<16x1xf32>
    %276 = tpu.reciprocal %275 {approx = true} : vector<16x1xf32> -> vector<16x1xf32>
    %277 = arith.mulf %275, %276 : vector<16x1xf32>
    %cst_69 = arith.constant 2.000000e+00 : f32
    %278 = vector.broadcast %cst_69 : f32 to vector<16x1xf32>
    %279 = arith.subf %278, %277 : vector<16x1xf32>
    %280 = arith.mulf %276, %279 : vector<16x1xf32>
    %281 = arith.mulf %251, %280 : vector<16x1xf32>
    %cst_70 = arith.constant 0.000000e+00 : f32
    %282 = vector.broadcast %cst_70 : f32 to vector<16x1xf32>
    %283 = arith.select %266, %281, %282 : vector<16x1xf32>
    %284 = vector.broadcast %283 : vector<16x1xf32> to vector<16x512xf32>
    %285 = arith.mulf %284, %261 : vector<16x512xf32>
    %286 = arith.addf %245, %285 : vector<16x512xf32>
    %287 = vector.broadcast %283 : vector<16x1xf32> to vector<16x512xf32>
    %288 = arith.mulf %287, %272 : vector<16x512xf32>
    %289 = arith.subf %248, %288 : vector<16x512xf32>
    %290 = arith.mulf %289, %289 : vector<16x512xf32>
    %cst_71 = arith.constant dense<0.000000e+00> : vector<16xf32>
    %291 = vector.multi_reduction <add>, %290, %cst_71 [1] : vector<16x512xf32> to vector<16xf32>
    %292 = vector.shape_cast %291 : vector<16xf32> to vector<16x1xf32>
    %293 = tpu.reciprocal %251 {approx = true} : vector<16x1xf32> -> vector<16x1xf32>
    %294 = arith.mulf %251, %293 : vector<16x1xf32>
    %cst_72 = arith.constant 2.000000e+00 : f32
    %295 = vector.broadcast %cst_72 : f32 to vector<16x1xf32>
    %296 = arith.subf %295, %294 : vector<16x1xf32>
    %297 = arith.mulf %293, %296 : vector<16x1xf32>
    %298 = arith.mulf %292, %297 : vector<16x1xf32>
    %299 = vector.broadcast %298 : vector<16x1xf32> to vector<16x512xf32>
    %300 = arith.mulf %299, %261 : vector<16x512xf32>
    %301 = arith.addf %300, %289 : vector<16x512xf32>
    %302 = arith.select %266, %301, %261 : vector<16x512xf32>
    %c7_i32 = arith.constant 7 : i32
    %303 = vector.shape_cast %292 : vector<16x1xf32> to vector<1x16x1xf32>
    %cst_73 = arith.constant dense<0xFF800000> : vector<1xf32>
    %304 = vector.multi_reduction <maximumf>, %303, %cst_73 [1, 2] : vector<1x16x1xf32> to vector<1xf32>
    %305 = vector.shape_cast %304 : vector<1xf32> to vector<1x1x1xf32>
    %306 = vector.extract %305[0, 0, 0] : f32 from vector<1x1x1xf32>
    %307 = arith.cmpf oge, %306, %0 : f32
    %308 = arith.truncf %302 : vector<16x512xf32> to vector<16x512xbf16>
    %c0_74 = arith.constant 0 : index
    %c0_75 = arith.constant 0 : index
    %309 = vector.load %arg2[%c0_74, %c0_75] : memref<512x512xbf16, #tpu.memory_space<vmem>>, vector<512x512xbf16>
    %cst_76 = arith.constant dense<0.000000e+00> : vector<16x512xf32>
    %310 = tpu.matmul %308, %309, %cst_76 {dimension_numbers = #tpu.dot_dimension_numbers<[1], [0], [0], [1], [0, 0, 1, 1], [], []>} : vector<16x512xbf16>, vector<512x512xbf16>, vector<16x512xf32> -> vector<16x512xf32>
    %311 = vector.broadcast %cst_9 : f32 to vector<16x512xf32>
    %312 = arith.mulf %311, %302 : vector<16x512xf32>
    %313 = arith.addf %310, %312 : vector<16x512xf32>
    %314 = arith.mulf %302, %313 : vector<16x512xf32>
    %cst_77 = arith.constant dense<0.000000e+00> : vector<16xf32>
    %315 = vector.multi_reduction <add>, %314, %cst_77 [1] : vector<16x512xf32> to vector<16xf32>
    %316 = vector.shape_cast %315 : vector<16xf32> to vector<16x1xf32>
    %317 = tpu.reciprocal %316 {approx = true} : vector<16x1xf32> -> vector<16x1xf32>
    %318 = arith.mulf %316, %317 : vector<16x1xf32>
    %cst_78 = arith.constant 2.000000e+00 : f32
    %319 = vector.broadcast %cst_78 : f32 to vector<16x1xf32>
    %320 = arith.subf %319, %318 : vector<16x1xf32>
    %321 = arith.mulf %317, %320 : vector<16x1xf32>
    %322 = arith.mulf %292, %321 : vector<16x1xf32>
    %cst_79 = arith.constant 0.000000e+00 : f32
    %323 = vector.broadcast %cst_79 : f32 to vector<16x1xf32>
    %324 = arith.select %307, %322, %323 : vector<16x1xf32>
    %325 = vector.broadcast %324 : vector<16x1xf32> to vector<16x512xf32>
    %326 = arith.mulf %325, %302 : vector<16x512xf32>
    %327 = arith.addf %286, %326 : vector<16x512xf32>
    %328 = vector.broadcast %324 : vector<16x1xf32> to vector<16x512xf32>
    %329 = arith.mulf %328, %313 : vector<16x512xf32>
    %330 = arith.subf %289, %329 : vector<16x512xf32>
    %331 = arith.mulf %330, %330 : vector<16x512xf32>
    %cst_80 = arith.constant dense<0.000000e+00> : vector<16xf32>
    %332 = vector.multi_reduction <add>, %331, %cst_80 [1] : vector<16x512xf32> to vector<16xf32>
    %333 = vector.shape_cast %332 : vector<16xf32> to vector<16x1xf32>
    %334 = tpu.reciprocal %292 {approx = true} : vector<16x1xf32> -> vector<16x1xf32>
    %335 = arith.mulf %292, %334 : vector<16x1xf32>
    %cst_81 = arith.constant 2.000000e+00 : f32
    %336 = vector.broadcast %cst_81 : f32 to vector<16x1xf32>
    %337 = arith.subf %336, %335 : vector<16x1xf32>
    %338 = arith.mulf %334, %337 : vector<16x1xf32>
    %339 = arith.mulf %333, %338 : vector<16x1xf32>
    %340 = vector.broadcast %339 : vector<16x1xf32> to vector<16x512xf32>
    %341 = arith.mulf %340, %302 : vector<16x512xf32>
    %342 = arith.addf %341, %330 : vector<16x512xf32>
    %343 = arith.select %307, %342, %302 : vector<16x512xf32>
    %c8_i32 = arith.constant 8 : i32
    %344 = vector.shape_cast %333 : vector<16x1xf32> to vector<1x16x1xf32>
    %cst_82 = arith.constant dense<0xFF800000> : vector<1xf32>
    %345 = vector.multi_reduction <maximumf>, %344, %cst_82 [1, 2] : vector<1x16x1xf32> to vector<1xf32>
    %346 = vector.shape_cast %345 : vector<1xf32> to vector<1x1x1xf32>
    %347 = vector.extract %346[0, 0, 0] : f32 from vector<1x1x1xf32>
    %348 = arith.cmpf oge, %347, %0 : f32
    %349 = arith.truncf %343 : vector<16x512xf32> to vector<16x512xbf16>
    %c0_83 = arith.constant 0 : index
    %c0_84 = arith.constant 0 : index
    %350 = vector.load %arg2[%c0_83, %c0_84] : memref<512x512xbf16, #tpu.memory_space<vmem>>, vector<512x512xbf16>
    %cst_85 = arith.constant dense<0.000000e+00> : vector<16x512xf32>
    %351 = tpu.matmul %349, %350, %cst_85 {dimension_numbers = #tpu.dot_dimension_numbers<[1], [0], [0], [1], [0, 0, 1, 1], [], []>} : vector<16x512xbf16>, vector<512x512xbf16>, vector<16x512xf32> -> vector<16x512xf32>
    %352 = vector.broadcast %cst_9 : f32 to vector<16x512xf32>
    %353 = arith.mulf %352, %343 : vector<16x512xf32>
    %354 = arith.addf %351, %353 : vector<16x512xf32>
    %355 = arith.mulf %343, %354 : vector<16x512xf32>
    %cst_86 = arith.constant dense<0.000000e+00> : vector<16xf32>
    %356 = vector.multi_reduction <add>, %355, %cst_86 [1] : vector<16x512xf32> to vector<16xf32>
    %357 = vector.shape_cast %356 : vector<16xf32> to vector<16x1xf32>
    %358 = tpu.reciprocal %357 {approx = true} : vector<16x1xf32> -> vector<16x1xf32>
    %359 = arith.mulf %357, %358 : vector<16x1xf32>
    %cst_87 = arith.constant 2.000000e+00 : f32
    %360 = vector.broadcast %cst_87 : f32 to vector<16x1xf32>
    %361 = arith.subf %360, %359 : vector<16x1xf32>
    %362 = arith.mulf %358, %361 : vector<16x1xf32>
    %363 = arith.mulf %333, %362 : vector<16x1xf32>
    %cst_88 = arith.constant 0.000000e+00 : f32
    %364 = vector.broadcast %cst_88 : f32 to vector<16x1xf32>
    %365 = arith.select %348, %363, %364 : vector<16x1xf32>
    %366 = vector.broadcast %365 : vector<16x1xf32> to vector<16x512xf32>
    %367 = arith.mulf %366, %343 : vector<16x512xf32>
    %368 = arith.addf %327, %367 : vector<16x512xf32>
    %369 = vector.broadcast %365 : vector<16x1xf32> to vector<16x512xf32>
    %370 = arith.mulf %369, %354 : vector<16x512xf32>
    %371 = arith.subf %330, %370 : vector<16x512xf32>
    %372 = arith.mulf %371, %371 : vector<16x512xf32>
    %cst_89 = arith.constant dense<0.000000e+00> : vector<16xf32>
    %373 = vector.multi_reduction <add>, %372, %cst_89 [1] : vector<16x512xf32> to vector<16xf32>
    %374 = vector.shape_cast %373 : vector<16xf32> to vector<16x1xf32>
    %375 = tpu.reciprocal %333 {approx = true} : vector<16x1xf32> -> vector<16x1xf32>
    %376 = arith.mulf %333, %375 : vector<16x1xf32>
    %cst_90 = arith.constant 2.000000e+00 : f32
    %377 = vector.broadcast %cst_90 : f32 to vector<16x1xf32>
    %378 = arith.subf %377, %376 : vector<16x1xf32>
    %379 = arith.mulf %375, %378 : vector<16x1xf32>
    %380 = arith.mulf %374, %379 : vector<16x1xf32>
    %381 = vector.broadcast %380 : vector<16x1xf32> to vector<16x512xf32>
    %382 = arith.mulf %381, %343 : vector<16x512xf32>
    %383 = arith.addf %382, %371 : vector<16x512xf32>
    %384 = arith.select %348, %383, %343 : vector<16x512xf32>
    %c9_i32 = arith.constant 9 : i32
    %385 = vector.shape_cast %374 : vector<16x1xf32> to vector<1x16x1xf32>
    %cst_91 = arith.constant dense<0xFF800000> : vector<1xf32>
    %386 = vector.multi_reduction <maximumf>, %385, %cst_91 [1, 2] : vector<1x16x1xf32> to vector<1xf32>
    %387 = vector.shape_cast %386 : vector<1xf32> to vector<1x1x1xf32>
    %388 = vector.extract %387[0, 0, 0] : f32 from vector<1x1x1xf32>
    %389 = arith.cmpf oge, %388, %0 : f32
    %390 = arith.truncf %384 : vector<16x512xf32> to vector<16x512xbf16>
    %c0_92 = arith.constant 0 : index
    %c0_93 = arith.constant 0 : index
    %391 = vector.load %arg2[%c0_92, %c0_93] : memref<512x512xbf16, #tpu.memory_space<vmem>>, vector<512x512xbf16>
    %cst_94 = arith.constant dense<0.000000e+00> : vector<16x512xf32>
    %392 = tpu.matmul %390, %391, %cst_94 {dimension_numbers = #tpu.dot_dimension_numbers<[1], [0], [0], [1], [0, 0, 1, 1], [], []>} : vector<16x512xbf16>, vector<512x512xbf16>, vector<16x512xf32> -> vector<16x512xf32>
    %393 = vector.broadcast %cst_9 : f32 to vector<16x512xf32>
    %394 = arith.mulf %393, %384 : vector<16x512xf32>
    %395 = arith.addf %392, %394 : vector<16x512xf32>
    %396 = arith.mulf %384, %395 : vector<16x512xf32>
    %cst_95 = arith.constant dense<0.000000e+00> : vector<16xf32>
    %397 = vector.multi_reduction <add>, %396, %cst_95 [1] : vector<16x512xf32> to vector<16xf32>
    %398 = vector.shape_cast %397 : vector<16xf32> to vector<16x1xf32>
    %399 = tpu.reciprocal %398 {approx = true} : vector<16x1xf32> -> vector<16x1xf32>
    %400 = arith.mulf %398, %399 : vector<16x1xf32>
    %cst_96 = arith.constant 2.000000e+00 : f32
    %401 = vector.broadcast %cst_96 : f32 to vector<16x1xf32>
    %402 = arith.subf %401, %400 : vector<16x1xf32>
    %403 = arith.mulf %399, %402 : vector<16x1xf32>
    %404 = arith.mulf %374, %403 : vector<16x1xf32>
    %cst_97 = arith.constant 0.000000e+00 : f32
    %405 = vector.broadcast %cst_97 : f32 to vector<16x1xf32>
    %406 = arith.select %389, %404, %405 : vector<16x1xf32>
    %407 = vector.broadcast %406 : vector<16x1xf32> to vector<16x512xf32>
    %408 = arith.mulf %407, %384 : vector<16x512xf32>
    %409 = arith.addf %368, %408 : vector<16x512xf32>
    %410 = vector.broadcast %406 : vector<16x1xf32> to vector<16x512xf32>
    %411 = arith.mulf %410, %395 : vector<16x512xf32>
    %412 = arith.subf %371, %411 : vector<16x512xf32>
    %413 = arith.mulf %412, %412 : vector<16x512xf32>
    %cst_98 = arith.constant dense<0.000000e+00> : vector<16xf32>
    %414 = vector.multi_reduction <add>, %413, %cst_98 [1] : vector<16x512xf32> to vector<16xf32>
    %415 = vector.shape_cast %414 : vector<16xf32> to vector<16x1xf32>
    %416 = tpu.reciprocal %374 {approx = true} : vector<16x1xf32> -> vector<16x1xf32>
    %417 = arith.mulf %374, %416 : vector<16x1xf32>
    %cst_99 = arith.constant 2.000000e+00 : f32
    %418 = vector.broadcast %cst_99 : f32 to vector<16x1xf32>
    %419 = arith.subf %418, %417 : vector<16x1xf32>
    %420 = arith.mulf %416, %419 : vector<16x1xf32>
    %421 = arith.mulf %415, %420 : vector<16x1xf32>
    %422 = vector.broadcast %421 : vector<16x1xf32> to vector<16x512xf32>
    %423 = arith.mulf %422, %384 : vector<16x512xf32>
    %424 = arith.addf %423, %412 : vector<16x512xf32>
    %425 = arith.select %389, %424, %384 : vector<16x512xf32>
    %c0_100 = arith.constant 0 : index
    %c0_101 = arith.constant 0 : index
    %426 = vector.load %arg3[%c0_100, %c0_101] : memref<16x512xf32, #tpu.memory_space<vmem>>, vector<16x512xf32>
    tpu.vector_store %arg3[%c0_100, %c0_101], %409 {strides = array<i32>} : memref<16x512xf32, #tpu.memory_space<vmem>>, vector<16x512xf32>,
    return
  }
}

</mosaic_0001>

<llo_original>
// kernel: tpu_custom_call.1
$region0: #{tpu_custom_call.1}
  #allocation0 [shape = 'u32[]', space=smem, size = 0x4, offset = 0x4, fixed_abs, tag = 'smem constant byte address 0x4 - core index']
  #allocation1 [shape = 'u32[72,128]{1,0:T(1,128)}', space=vmem, size = 0x9000, scoped, tag = 'internal scratch']
  %s0 = inlined_call_operand.hbm [shape: f32[16,512], index: 0, kind: input, shape index: {}]
  %s1 = inlined_call_operand.hbm [shape: f32[16,512], index: 1, kind: input, shape index: {}]
  %s2 = inlined_call_operand.hbm [shape: bf16[512,512], index: 2, kind: input, shape index: {}]
  %s3 = inlined_call_operand.hbm [shape: f32[16,512], index: 3, kind: output, shape index: {}]
  %s4 = sld [smem:[#allocation0]]
  $region34: #{tpu_custom_call.1} parent=0
    _
  %s6 = ssub.s32 1, %s4
  %s7 = scalar_select 0, %s6, %s4
  $region1: #{tpu_custom_call.1} parent=0
    #allocation2 [shape = 'u8[32768]{0}', space=vmem, size = 0x8000, scoped, tag = 'input window, operand 0, single buffered']
    #allocation3 [shape = 's32[1]{0}', space=sflag, size = 0x4, scoped, tag = 'scoped memory for tpu_custom_call.1']
    #allocation4 [shape = 's32[1]{0}', space=sflag, size = 0x4, scoped, tag = 'scoped memory for tpu_custom_call.1']
    #allocation5 [shape = 'u8[32768]{0}', space=vmem, size = 0x8000, scoped, tag = 'input window, operand 1, single buffered']
    #allocation6 [shape = 's32[1]{0}', space=sflag, size = 0x4, scoped, tag = 'scoped memory for tpu_custom_call.1']
    #allocation7 [shape = 'u8[524288]{0}', space=vmem, size = 0x80000, scoped, tag = 'input window, operand 2, single buffered']
    #allocation8 [shape = 'u8[32768]{0}', space=vmem, size = 0x8000, scoped, tag = 'output window, operand 0, single buffered']
    %8 = vsyncpa [#allocation3], 0
    %9 = vsyncpa [#allocation6], 0
    %10 = vsyncpa [#allocation4], 0
    // Predicated region
    $region2: #{tpu_custom_call.1} parent=1 // pred_check
      _
    $region3: #{tpu_custom_call.1} parent=1 // pred_check_branch
      %12 = sbr.rel (0) target = $region5
    $region4: #{tpu_custom_call.1} parent=1 // pred_region
      %14 = vsyncadd [#allocation3], 0
      %s15 = sshll.u32 %s0, 4
      %s16 = int_to_ptr.hbm [resolvable:$true] %s15
      %s17 = sshll.u32 [#allocation2], 4
      %s18 = int_to_ptr.vmem [resolvable:$true] %s17
      %23 = dma.hbm_to_vmem [thread:$0]  %s16, 1024, %s18, [#allocation3], 512, 512, 32
    $region5: #{tpu_custom_call.1} parent=1 // pred_fallthru
      _
    // Predicated region
    $region6: #{tpu_custom_call.1} parent=1 // pred_check
      _
    $region7: #{tpu_custom_call.1} parent=1 // pred_check_branch
      %25 = sbr.rel (0) target = $region9
    $region8: #{tpu_custom_call.1} parent=1 // pred_region
      %27 = vsyncadd [#allocation6], 0
      %s28 = sshll.u32 %s1, 4
      %s29 = int_to_ptr.hbm [resolvable:$true] %s28
      %s30 = sshll.u32 [#allocation5], 4
      %s31 = int_to_ptr.vmem [resolvable:$true] %s30
      %36 = dma.hbm_to_vmem [thread:$0]  %s29, 1024, %s31, [#allocation6], 512, 512, 32
    $region9: #{tpu_custom_call.1} parent=1 // pred_fallthru
      _
    // Predicated region
    $region10: #{tpu_custom_call.1} parent=1 // pred_check
      _
    $region11: #{tpu_custom_call.1} parent=1 // pred_check_branch
      %38 = sbr.rel (0) target = $region13
    $region12: #{tpu_custom_call.1} parent=1 // pred_region
      %40 = vsyncadd [#allocation6], 0
      %s41 = sshll.u32 %s2, 4
      %s42 = int_to_ptr.hbm [resolvable:$true] %s41
      %s43 = sshll.u32 [#allocation7], 4
      %s44 = int_to_ptr.vmem [resolvable:$true] %s43
      %49 = dma.hbm_to_vmem [thread:$0]  %s42, 16384, %s44, [#allocation6], 256, 256, 16
    $region13: #{tpu_custom_call.1} parent=1 // pred_fallthru
      _
    // Predicated region
    $region14: #{tpu_custom_call.1} parent=1 // pred_check
      _
    $region15: #{tpu_custom_call.1} parent=1 // pred_check_branch
      %51 = sbr.rel (0) target = $region17
    $region16: #{tpu_custom_call.1} parent=1 // pred_region
      %53 = dma.done [#allocation3], 1024
    $region17: #{tpu_custom_call.1} parent=1 // pred_fallthru
      _
    // Predicated region
    $region18: #{tpu_custom_call.1} parent=1 // pred_check
      _
    $region19: #{tpu_custom_call.1} parent=1 // pred_check_branch
      %55 = sbr.rel (0) target = $region21
    $region20: #{tpu_custom_call.1} parent=1 // pred_region
      %57 = dma.done [#allocation6], 1024
    $region21: #{tpu_custom_call.1} parent=1 // pred_fallthru
      _
    // Predicated region
    $region22: #{tpu_custom_call.1} parent=1 // pred_check
      _
    $region23: #{tpu_custom_call.1} parent=1 // pred_check_branch
      %59 = sbr.rel (0) target = $region25
    $region24: #{tpu_custom_call.1} parent=1 // pred_region
      %61 = dma.done [#allocation6], 16384
    $region25: #{tpu_custom_call.1} parent=1 // pred_fallthru
      _
    %v62 = vld [vmem:[#allocation2] sm:$0xff]
    %v63 = vld [vmem:[#allocation2 + $0x8] sm:$0xff]
    %v64 = vld [vmem:[#allocation2 + $0x10] sm:$0xff]
    %v65 = vld [vmem:[#allocation2 + $0x18] sm:$0xff]
    %v66 = vld [vmem:[#allocation2 + $0x20] sm:$0xff]
    %v67 = vld [vmem:[#allocation2 + $0x28] sm:$0xff]
    %v68 = vld [vmem:[#allocation2 + $0x30] sm:$0xff]
    %v69 = vld [vmem:[#allocation2 + $0x38] sm:$0xff]
    %v70 = vld [vmem:[#allocation5] sm:$0xff]
    %v71 = vld [vmem:[#allocation5 + $0x8] sm:$0xff]
    %v72 = vld [vmem:[#allocation5 + $0x10] sm:$0xff]
    %v73 = vld [vmem:[#allocation5 + $0x18] sm:$0xff]
    %v74 = vld [vmem:[#allocation5 + $0x20] sm:$0xff]
    %v75 = vld [vmem:[#allocation5 + $0x28] sm:$0xff]
    %v76 = vld [vmem:[#allocation5 + $0x30] sm:$0xff]
    %v77 = vld [vmem:[#allocation5 + $0x38] sm:$0xff]
    %v78 = vmul.f32 %v62, 0.05
    %v79 = vmul.f32 %v63, 0.05
    %v80 = vmul.f32 %v64, 0.05
    %v81 = vmul.f32 %v65, 0.05
    %v82 = vmul.f32 %v66, 0.05
    %v83 = vmul.f32 %v67, 0.05
    %v84 = vmul.f32 %v68, 0.05
    %v85 = vmul.f32 %v69, 0.05
    %v86 = vadd.f32 %v70, %v78
    %v87 = vadd.f32 %v71, %v79
    %v88 = vadd.f32 %v72, %v80
    %v89 = vadd.f32 %v73, %v81
    %v90 = vadd.f32 %v74, %v82
    %v91 = vadd.f32 %v75, %v83
    %v92 = vadd.f32 %v76, %v84
    %v93 = vadd.f32 %v77, %v85
    %v94 = vpack.c.bf16 %v90, %v86
    %v95 = vpack.c.bf16 %v91, %v87
    %v96 = vpack.c.bf16 %v92, %v88
    %v97 = vpack.c.bf16 %v93, %v89
    %v98 = vld [vmem:[#allocation7] sm:$0xff]
    %v99 = vld [vmem:[#allocation7 + $0x8] sm:$0xff]
    %v100 = vld [vmem:[#allocation7 + $0x10] sm:$0xff]
    %v101 = vld [vmem:[#allocation7 + $0x18] sm:$0xff]
    %v102 = vld [vmem:[#allocation7 + $0x20] sm:$0xff]
    %v103 = vld [vmem:[#allocation7 + $0x28] sm:$0xff]
    %v104 = vld [vmem:[#allocation7 + $0x30] sm:$0xff]
    %v105 = vld [vmem:[#allocation7 + $0x38] sm:$0xff]
    %v106 = vld [vmem:[#allocation7 + $0x40] sm:$0xff]
    %v107 = vld [vmem:[#allocation7 + $0x48] sm:$0xff]
    %v108 = vld [vmem:[#allocation7 + $0x50] sm:$0xff]
    %v109 = vld [vmem:[#allocation7 + $0x58] sm:$0xff]
    %v110 = vld [vmem:[#allocation7 + $0x60] sm:$0xff]
    %v111 = vld [vmem:[#allocation7 + $0x68] sm:$0xff]
    %v112 = vld [vmem:[#allocation7 + $0x70] sm:$0xff]
    %v113 = vld [vmem:[#allocation7 + $0x78] sm:$0xff]
    %v114 = vld [vmem:[#allocation7 + $0x80] sm:$0xff]
    %v115 = vld [vmem:[#allocation7 + $0x88] sm:$0xff]
    %v116 = vld [vmem:[#allocation7 + $0x90] sm:$0xff]
    %v117 = vld [vmem:[#allocation7 + $0x98] sm:$0xff]
    %v118 = vld [vmem:[#allocation7 + $0xa0] sm:$0xff]
    %v119 = vld [vmem:[#allocation7 + $0xa8] sm:$0xff]
    %v120 = vld [vmem:[#allocation7 + $0xb0] sm:$0xff]
    %v121 = vld [vmem:[#allocation7 + $0xb8] sm:$0xff]
    %v122 = vld [vmem:[#allocation7 + $0xc0] sm:$0xff]
    %v123 = vld [vmem:[#allocation7 + $0xc8] sm:$0xff]
    %v124 = vld [vmem:[#allocation7 + $0xd0] sm:$0xff]
    %v125 = vld [vmem:[#allocation7 + $0xd8] sm:$0xff]
    %v126 = vld [vmem:[#allocation7 + $0xe0] sm:$0xff]
    %v127 = vld [vmem:[#allocation7 + $0xe8] sm:$0xff]
    %v128 = vld [vmem:[#allocation7 + $0xf0] sm:$0xff]
    %v129 = vld [vmem:[#allocation7 + $0xf8] sm:$0xff]
    %v130 = vld [vmem:[#allocation7 + $0x100] sm:$0xff]
    %v131 = vld [vmem:[#allocation7 + $0x108] sm:$0xff]
    %v132 = vld [vmem:[#allocation7 + $0x110] sm:$0xff]
    %v133 = vld [vmem:[#allocation7 + $0x118] sm:$0xff]
    %v134 = vld [vmem:[#allocation7 + $0x120] sm:$0xff]
    %v135 = vld [vmem:[#allocation7 + $0x128] sm:$0xff]
    %v136 = vld [vmem:[#allocation7 + $0x130] sm:$0xff]
    %v137 = vld [vmem:[#allocation7 + $0x138] sm:$0xff]
    %v138 = vld [vmem:[#allocation7 + $0x140] sm:$0xff]
    %v139 = vld [vmem:[#allocation7 + $0x148] sm:$0xff]
    %v140 = vld [vmem:[#allocation7 + $0x150] sm:$0xff]
    %v141 = vld [vmem:[#allocation7 + $0x158] sm:$0xff]
    %v142 = vld [vmem:[#allocation7 + $0x160] sm:$0xff]
    %v143 = vld [vmem:[#allocation7 + $0x168] sm:$0xff]
    %v144 = vld [vmem:[#allocation7 + $0x170] sm:$0xff]
    %v145 = vld [vmem:[#allocation7 + $0x178] sm:$0xff]
    %v146 = vld [vmem:[#allocation7 + $0x180] sm:$0xff]
    %v147 = vld [vmem:[#allocation7 + $0x188] sm:$0xff]
    %v148 = vld [vmem:[#allocation7 + $0x190] sm:$0xff]
    %v149 = vld [vmem:[#allocation7 + $0x198] sm:$0xff]
    %v150 = vld [vmem:[#allocation7 + $0x1a0] sm:$0xff]
    %v151 = vld [vmem:[#allocation7 + $0x1a8] sm:$0xff]
    %v152 = vld [vmem:[#allocation7 + $0x1b0] sm:$0xff]
    %v153 = vld [vmem:[#allocation7 + $0x1b8] sm:$0xff]
    %v154 = vld [vmem:[#allocation7 + $0x1c0] sm:$0xff]
    %v155 = vld [vmem:[#allocation7 + $0x1c8] sm:$0xff]
    %v156 = vld [vmem:[#allocation7 + $0x1d0] sm:$0xff]
    %v157 = vld [vmem:[#allocation7 + $0x1d8] sm:$0xff]
    %v158 = vld [vmem:[#allocation7 + $0x1e0] sm:$0xff]
    %v159 = vld [vmem:[#allocation7 + $0x1e8] sm:$0xff]
    %v160 = vld [vmem:[#allocation7 + $0x1f0] sm:$0xff]
    %v161 = vld [vmem:[#allocation7 + $0x1f8] sm:$0xff]
    %v162 = vld [vmem:[#allocation7 + $0x200] sm:$0xff]
    %v163 = vld [vmem:[#allocation7 + $0x208] sm:$0xff]
    %v164 = vld [vmem:[#allocation7 + $0x210] sm:$0xff]
    %v165 = vld [vmem:[#allocation7 + $0x218] sm:$0xff]
    %v166 = vld [vmem:[#allocation7 + $0x220] sm:$0xff]
    %v167 = vld [vmem:[#allocation7 + $0x228] sm:$0xff]
    %v168 = vld [vmem:[#allocation7 + $0x230] sm:$0xff]
    %v169 = vld [vmem:[#allocation7 + $0x238] sm:$0xff]
    %v170 = vld [vmem:[#allocation7 + $0x240] sm:$0xff]
    %v171 = vld [vmem:[#allocation7 + $0x248] sm:$0xff]
    %v172 = vld [vmem:[#allocation7 + $0x250] sm:$0xff]
    %v173 = vld [vmem:[#allocation7 + $0x258] sm:$0xff]
    %v174 = vld [vmem:[#allocation7 + $0x260] sm:$0xff]
    %v175 = vld [vmem:[#allocation7 + $0x268] sm:$0xff]
    %v176 = vld [vmem:[#allocation7 + $0x270] sm:$0xff]
    %v177 = vld [vmem:[#allocation7 + $0x278] sm:$0xff]
    %v178 = vld [vmem:[#allocation7 + $0x280] sm:$0xff]
    %v179 = vld [vmem:[#allocation7 + $0x288] sm:$0xff]
    %v180 = vld [vmem:[#allocation7 + $0x290] sm:$0xff]
    %v181 = vld [vmem:[#allocation7 + $0x298] sm:$0xff]
    %v182 = vld [vmem:[#allocation7 + $0x2a0] sm:$0xff]
    %v183 = vld [vmem:[#allocation7 + $0x2a8] sm:$0xff]
    %v184 = vld [vmem:[#allocation7 + $0x2b0] sm:$0xff]
    %v185 = vld [vmem:[#allocation7 + $0x2b8] sm:$0xff]
    %v186 = vld [vmem:[#allocation7 + $0x2c0] sm:$0xff]
    %v187 = vld [vmem:[#allocation7 + $0x2c8] sm:$0xff]
    %v188 = vld [vmem:[#allocation7 + $0x2d0] sm:$0xff]
    %v189 = vld [vmem:[#allocation7 + $0x2d8] sm:$0xff]
    %v190 = vld [vmem:[#allocation7 + $0x2e0] sm:$0xff]
    %v191 = vld [vmem:[#allocation7 + $0x2e8] sm:$0xff]
    %v192 = vld [vmem:[#allocation7 + $0x2f0] sm:$0xff]
    %v193 = vld [vmem:[#allocation7 + $0x2f8] sm:$0xff]
    %v194 = vld [vmem:[#allocation7 + $0x300] sm:$0xff]
    %v195 = vld [vmem:[#allocation7 + $0x308] sm:$0xff]
    %v196 = vld [vmem:[#allocation7 + $0x310] sm:$0xff]
    %v197 = vld [vmem:[#allocation7 + $0x318] sm:$0xff]
    %v198 = vld [vmem:[#allocation7 + $0x320] sm:$0xff]
    %v199 = vld [vmem:[#allocation7 + $0x328] sm:$0xff]
    %v200 = vld [vmem:[#allocation7 + $0x330] sm:$0xff]
    %v201 = vld [vmem:[#allocation7 + $0x338] sm:$0xff]
    %v202 = vld [vmem:[#allocation7 + $0x340] sm:$0xff]
    %v203 = vld [vmem:[#allocation7 + $0x348] sm:$0xff]
    %v204 = vld [vmem:[#allocation7 + $0x350] sm:$0xff]
    %v205 = vld [vmem:[#allocation7 + $0x358] sm:$0xff]
    %v206 = vld [vmem:[#allocation7 + $0x360] sm:$0xff]
    %v207 = vld [vmem:[#allocation7 + $0x368] sm:$0xff]
    %v208 = vld [vmem:[#allocation7 + $0x370] sm:$0xff]
    %v209 = vld [vmem:[#allocation7 + $0x378] sm:$0xff]
    %v210 = vld [vmem:[#allocation7 + $0x380] sm:$0xff]
    %v211 = vld [vmem:[#allocation7 + $0x388] sm:$0xff]
    %v212 = vld [vmem:[#allocation7 + $0x390] sm:$0xff]
    %v213 = vld [vmem:[#allocation7 + $0x398] sm:$0xff]
    %v214 = vld [vmem:[#allocation7 + $0x3a0] sm:$0xff]
    %v215 = vld [vmem:[#allocation7 + $0x3a8] sm:$0xff]
    %v216 = vld [vmem:[#allocation7 + $0x3b0] sm:$0xff]
    %v217 = vld [vmem:[#allocation7 + $0x3b8] sm:$0xff]
    %v218 = vld [vmem:[#allocation7 + $0x3c0] sm:$0xff]
    %v219 = vld [vmem:[#allocation7 + $0x3c8] sm:$0xff]
    %v220 = vld [vmem:[#allocation7 + $0x3d0] sm:$0xff]
    %v221 = vld [vmem:[#allocation7 + $0x3d8] sm:$0xff]
    %v222 = vld [vmem:[#allocation7 + $0x3e0] sm:$0xff]
    %v223 = vld [vmem:[#allocation7 + $0x3e8] sm:$0xff]
    %v224 = vld [vmem:[#allocation7 + $0x3f0] sm:$0xff]
    %v225 = vld [vmem:[#allocation7 + $0x3f8] sm:$0xff]
    %v226 = vmul.f32 %v86, 0.05
    %v227 = vmul.f32 %v87, 0.05
    %v228 = vmul.f32 %v88, 0.05
    %v229 = vmul.f32 %v89, 0.05
    %v230 = vmul.f32 %v90, 0.05
    %v231 = vmul.f32 %v91, 0.05
    %v232 = vmul.f32 %v92, 0.05
    %v233 = vmul.f32 %v93, 0.05
    %v362 = vunpack.c.l.b16 %v98
    %v363 = vunpack.c.h.b16 %v98
    %v364 = vunpack.c.l.b16 %v99
    %v365 = vunpack.c.h.b16 %v99
    %v366 = vunpack.c.l.b16 %v100
    %v367 = vunpack.c.h.b16 %v100
    %v368 = vunpack.c.l.b16 %v101
    %v369 = vunpack.c.h.b16 %v101
    %v370 = vunpack.c.l.b16 %v102
    %v371 = vunpack.c.h.b16 %v102
    %v372 = vunpack.c.l.b16 %v103
    %v373 = vunpack.c.h.b16 %v103
    %v374 = vunpack.c.l.b16 %v104
    %v375 = vunpack.c.h.b16 %v104
    %v376 = vunpack.c.l.b16 %v105
    %v377 = vunpack.c.h.b16 %v105
    %v378 = vunpack.c.l.b16 %v106
    %v379 = vunpack.c.h.b16 %v106
    %v380 = vunpack.c.l.b16 %v107
    %v381 = vunpack.c.h.b16 %v107
    %v382 = vunpack.c.l.b16 %v108
    %v383 = vunpack.c.h.b16 %v108
    %v384 = vunpack.c.l.b16 %v109
    %v385 = vunpack.c.h.b16 %v109
    %v386 = vunpack.c.l.b16 %v110
    %v387 = vunpack.c.h.b16 %v110
    %v388 = vunpack.c.l.b16 %v111
    %v389 = vunpack.c.h.b16 %v111
    %v390 = vunpack.c.l.b16 %v112
    %v391 = vunpack.c.h.b16 %v112
    %v392 = vunpack.c.l.b16 %v113
    %v393 = vunpack.c.h.b16 %v113
    %v394 = vunpack.c.l.b16 %v114
    %v395 = vunpack.c.h.b16 %v114
    %v396 = vunpack.c.l.b16 %v115
    %v397 = vunpack.c.h.b16 %v115
    %v398 = vunpack.c.l.b16 %v116
    %v399 = vunpack.c.h.b16 %v116
    %v400 = vunpack.c.l.b16 %v117
    %v401 = vunpack.c.h.b16 %v117
    %v402 = vunpack.c.l.b16 %v118
    %v403 = vunpack.c.h.b16 %v118
    %v404 = vunpack.c.l.b16 %v119
    %v405 = vunpack.c.h.b16 %v119
    %v406 = vunpack.c.l.b16 %v120
    %v407 = vunpack.c.h.b16 %v120
    %v408 = vunpack.c.l.b16 %v121
    %v409 = vunpack.c.h.b16 %v121
    %v410 = vunpack.c.l.b16 %v122
    %v411 = vunpack.c.h.b16 %v122
    %v412 = vunpack.c.l.b16 %v123
    %v413 = vunpack.c.h.b16 %v123
    %v414 = vunpack.c.l.b16 %v124
    %v415 = vunpack.c.h.b16 %v124
    %v416 = vunpack.c.l.b16 %v125
    %v417 = vunpack.c.h.b16 %v125
    %v418 = vunpack.c.l.b16 %v126
    %v419 = vunpack.c.h.b16 %v126
    %v420 = vunpack.c.l.b16 %v127
    %v421 = vunpack.c.h.b16 %v127
    %v422 = vunpack.c.l.b16 %v128
    %v423 = vunpack.c.h.b16 %v128
    %v424 = vunpack.c.l.b16 %v129
    %v425 = vunpack.c.h.b16 %v129
    %v426 = vunpack.c.l.b16 %v130
    %v427 = vunpack.c.h.b16 %v130
    %v428 = vunpack.c.l.b16 %v131
    %v429 = vunpack.c.h.b16 %v131
    %v430 = vunpack.c.l.b16 %v132
    %v431 = vunpack.c.h.b16 %v132
    %v432 = vunpack.c.l.b16 %v133
    %v433 = vunpack.c.h.b16 %v133
    %v434 = vunpack.c.l.b16 %v134
    %v435 = vunpack.c.h.b16 %v134
    %v436 = vunpack.c.l.b16 %v135
    %v437 = vunpack.c.h.b16 %v135
    %v438 = vunpack.c.l.b16 %v136
    %v439 = vunpack.c.h.b16 %v136
    %v440 = vunpack.c.l.b16 %v137
    %v441 = vunpack.c.h.b16 %v137
    %v442 = vunpack.c.l.b16 %v138
    %v443 = vunpack.c.h.b16 %v138
    %v444 = vunpack.c.l.b16 %v139
    %v445 = vunpack.c.h.b16 %v139
    %v446 = vunpack.c.l.b16 %v140
    %v447 = vunpack.c.h.b16 %v140
    %v448 = vunpack.c.l.b16 %v141
    %v449 = vunpack.c.h.b16 %v141
    %v450 = vunpack.c.l.b16 %v142
    %v451 = vunpack.c.h.b16 %v142
    %v452 = vunpack.c.l.b16 %v143
    %v453 = vunpack.c.h.b16 %v143
    %v454 = vunpack.c.l.b16 %v144
    %v455 = vunpack.c.h.b16 %v144
    %v456 = vunpack.c.l.b16 %v145
    %v457 = vunpack.c.h.b16 %v145
    %v458 = vunpack.c.l.b16 %v146
    %v459 = vunpack.c.h.b16 %v146
    %v460 = vunpack.c.l.b16 %v147
    %v461 = vunpack.c.h.b16 %v147
    %v462 = vunpack.c.l.b16 %v148
    %v463 = vunpack.c.h.b16 %v148
    %v464 = vunpack.c.l.b16 %v149
    %v465 = vunpack.c.h.b16 %v149
    %v466 = vunpack.c.l.b16 %v150
    %v467 = vunpack.c.h.b16 %v150
    %v468 = vunpack.c.l.b16 %v151
    %v469 = vunpack.c.h.b16 %v151
    %v470 = vunpack.c.l.b16 %v152
    %v471 = vunpack.c.h.b16 %v152
    %v472 = vunpack.c.l.b16 %v153
    %v473 = vunpack.c.h.b16 %v153
    %v474 = vunpack.c.l.b16 %v154
    %v475 = vunpack.c.h.b16 %v154
    %v476 = vunpack.c.l.b16 %v155
    %v477 = vunpack.c.h.b16 %v155
    %v478 = vunpack.c.l.b16 %v156
    %v479 = vunpack.c.h.b16 %v156
    %v480 = vunpack.c.l.b16 %v157
    %v481 = vunpack.c.h.b16 %v157
    %v482 = vunpack.c.l.b16 %v158
    %v483 = vunpack.c.h.b16 %v158
    %v484 = vunpack.c.l.b16 %v159
    %v485 = vunpack.c.h.b16 %v159
    %v486 = vunpack.c.l.b16 %v160
    %v487 = vunpack.c.h.b16 %v160
    %v488 = vunpack.c.l.b16 %v161
    %v489 = vunpack.c.h.b16 %v161
    %v490 = vunpack.c.l.b16 %v162
    %v491 = vunpack.c.h.b16 %v162
    %v492 = vunpack.c.l.b16 %v163
    %v493 = vunpack.c.h.b16 %v163
    %v494 = vunpack.c.l.b16 %v164
    %v495 = vunpack.c.h.b16 %v164
    %v496 = vunpack.c.l.b16 %v165
    %v497 = vunpack.c.h.b16 %v165
    %v498 = vunpack.c.l.b16 %v166
    %v499 = vunpack.c.h.b16 %v166
    %v500 = vunpack.c.l.b16 %v167
    %v501 = vunpack.c.h.b16 %v167
    %v502 = vunpack.c.l.b16 %v168
    %v503 = vunpack.c.h.b16 %v168
    %v504 = vunpack.c.l.b16 %v169
    %v505 = vunpack.c.h.b16 %v169
    %v506 = vunpack.c.l.b16 %v170
    %v507 = vunpack.c.h.b16 %v170
    %v508 = vunpack.c.l.b16 %v171
    %v509 = vunpack.c.h.b16 %v171
    %v510 = vunpack.c.l.b16 %v172
    %v511 = vunpack.c.h.b16 %v172
    %v512 = vunpack.c.l.b16 %v173
    %v513 = vunpack.c.h.b16 %v173
    %v514 = vunpack.c.l.b16 %v174
    %v515 = vunpack.c.h.b16 %v174
    %v516 = vunpack.c.l.b16 %v175
    %v517 = vunpack.c.h.b16 %v175
    %v518 = vunpack.c.l.b16 %v176
    %v519 = vunpack.c.h.b16 %v176
    %v520 = vunpack.c.l.b16 %v177
    %v521 = vunpack.c.h.b16 %v177
    %v522 = vunpack.c.l.b16 %v178
    %v523 = vunpack.c.h.b16 %v178
    %v524 = vunpack.c.l.b16 %v179
    %v525 = vunpack.c.h.b16 %v179
    %v526 = vunpack.c.l.b16 %v180
    %v527 = vunpack.c.h.b16 %v180
    %v528 = vunpack.c.l.b16 %v181
    %v529 = vunpack.c.h.b16 %v181
    %v530 = vunpack.c.l.b16 %v182
    %v531 = vunpack.c.h.b16 %v182
    %v532 = vunpack.c.l.b16 %v183
    %v533 = vunpack.c.h.b16 %v183
    %v534 = vunpack.c.l.b16 %v184
    %v535 = vunpack.c.h.b16 %v184
    %v536 = vunpack.c.l.b16 %v185
    %v537 = vunpack.c.h.b16 %v185
    %v538 = vunpack.c.l.b16 %v186
    %v539 = vunpack.c.h.b16 %v186
    %v540 = vunpack.c.l.b16 %v187
    %v541 = vunpack.c.h.b16 %v187
    %v542 = vunpack.c.l.b16 %v188
    %v543 = vunpack.c.h.b16 %v188
    %v544 = vunpack.c.l.b16 %v189
    %v545 = vunpack.c.h.b16 %v189
    %v546 = vunpack.c.l.b16 %v190
    %v547 = vunpack.c.h.b16 %v190
    %v548 = vunpack.c.l.b16 %v191
    %v549 = vunpack.c.h.b16 %v191
    %v550 = vunpack.c.l.b16 %v192
    %v551 = vunpack.c.h.b16 %v192
    %v552 = vunpack.c.l.b16 %v193
    %v553 = vunpack.c.h.b16 %v193
    %v554 = vunpack.c.l.b16 %v194
    %v555 = vunpack.c.h.b16 %v194
    %v556 = vunpack.c.l.b16 %v195
    %v557 = vunpack.c.h.b16 %v195
    %v558 = vunpack.c.l.b16 %v196
    %v559 = vunpack.c.h.b16 %v196
    %v560 = vunpack.c.l.b16 %v197
    %v561 = vunpack.c.h.b16 %v197
    %v562 = vunpack.c.l.b16 %v198
    %v563 = vunpack.c.h.b16 %v198
    %v564 = vunpack.c.l.b16 %v199
    %v565 = vunpack.c.h.b16 %v199
    %v566 = vunpack.c.l.b16 %v200
    %v567 = vunpack.c.h.b16 %v200
    %v568 = vunpack.c.l.b16 %v201
    %v569 = vunpack.c.h.b16 %v201
    %v570 = vunpack.c.l.b16 %v202
    %v571 = vunpack.c.h.b16 %v202
    %v572 = vunpack.c.l.b16 %v203
    %v573 = vunpack.c.h.b16 %v203
    %v574 = vunpack.c.l.b16 %v204
    %v575 = vunpack.c.h.b16 %v204
    %v576 = vunpack.c.l.b16 %v205
    %v577 = vunpack.c.h.b16 %v205
    %v578 = vunpack.c.l.b16 %v206
    %v579 = vunpack.c.h.b16 %v206
    %v580 = vunpack.c.l.b16 %v207
    %v581 = vunpack.c.h.b16 %v207
    %v582 = vunpack.c.l.b16 %v208
    %v583 = vunpack.c.h.b16 %v208
    %v584 = vunpack.c.l.b16 %v209
    %v585 = vunpack.c.h.b16 %v209
    %v586 = vunpack.c.l.b16 %v210
    %v587 = vunpack.c.h.b16 %v210
    %v588 = vunpack.c.l.b16 %v211
    %v589 = vunpack.c.h.b16 %v211
    %v590 = vunpack.c.l.b16 %v212
    %v591 = vunpack.c.h.b16 %v212
    %v592 = vunpack.c.l.b16 %v213
    %v593 = vunpack.c.h.b16 %v213
    %v594 = vunpack.c.l.b16 %v214
    %v595 = vunpack.c.h.b16 %v214
    %v596 = vunpack.c.l.b16 %v215
    %v597 = vunpack.c.h.b16 %v215
    %v598 = vunpack.c.l.b16 %v216
    %v599 = vunpack.c.h.b16 %v216
    %v600 = vunpack.c.l.b16 %v217
    %v601 = vunpack.c.h.b16 %v217
    %v602 = vunpack.c.l.b16 %v218
    %v603 = vunpack.c.h.b16 %v218
    %v604 = vunpack.c.l.b16 %v219
    %v605 = vunpack.c.h.b16 %v219
    %v606 = vunpack.c.l.b16 %v220
    %v607 = vunpack.c.h.b16 %v220
    %v608 = vunpack.c.l.b16 %v221
    %v609 = vunpack.c.h.b16 %v221
    %v610 = vunpack.c.l.b16 %v222
    %v611 = vunpack.c.h.b16 %v222
    %v612 = vunpack.c.l.b16 %v223
    %v613 = vunpack.c.h.b16 %v223
    %v614 = vunpack.c.l.b16 %v224
    %v615 = vunpack.c.h.b16 %v224
    %v616 = vunpack.c.l.b16 %v225
    %v617 = vunpack.c.h.b16 %v225
    %v618 = vpack.c.b16 %v366, %v362
    %v619 = vpack.c.b16 %v367, %v363
    %v620 = vpack.c.b16 %v368, %v364
    %v621 = vpack.c.b16 %v369, %v365
    %v622 = vpack.c.b16 %v374, %v370
    %v623 = vpack.c.b16 %v375, %v371
    %v624 = vpack.c.b16 %v376, %v372
    %v625 = vpack.c.b16 %v377, %v373
    %v626 = vpack.c.b16 %v382, %v378
    %v627 = vpack.c.b16 %v383, %v379
    %v628 = vpack.c.b16 %v384, %v380
    %v629 = vpack.c.b16 %v385, %v381
    %v630 = vpack.c.b16 %v390, %v386
    %v631 = vpack.c.b16 %v391, %v387
    %v632 = vpack.c.b16 %v392, %v388
    %v633 = vpack.c.b16 %v393, %v389
    %v634 = vpack.c.b16 %v398, %v394
    %v635 = vpack.c.b16 %v399, %v395
    %v636 = vpack.c.b16 %v400, %v396
    %v637 = vpack.c.b16 %v401, %v397
    %v638 = vpack.c.b16 %v406, %v402
    %v639 = vpack.c.b16 %v407, %v403
    %v640 = vpack.c.b16 %v408, %v404
    %v641 = vpack.c.b16 %v409, %v405
    %v642 = vpack.c.b16 %v414, %v410
    %v643 = vpack.c.b16 %v415, %v411
    %v644 = vpack.c.b16 %v416, %v412
    %v645 = vpack.c.b16 %v417, %v413
    %v646 = vpack.c.b16 %v422, %v418
    %v647 = vpack.c.b16 %v423, %v419
    %v648 = vpack.c.b16 %v424, %v420
    %v649 = vpack.c.b16 %v425, %v421
    %v650 = vpack.c.b16 %v430, %v426
    %v651 = vpack.c.b16 %v431, %v427
    %v652 = vpack.c.b16 %v432, %v428
    %v653 = vpack.c.b16 %v433, %v429
    %v654 = vpack.c.b16 %v438, %v434
    %v655 = vpack.c.b16 %v439, %v435
    %v656 = vpack.c.b16 %v440, %v436
    %v657 = vpack.c.b16 %v441, %v437
    %v658 = vpack.c.b16 %v446, %v442
    %v659 = vpack.c.b16 %v447, %v443
    %v660 = vpack.c.b16 %v448, %v444
    %v661 = vpack.c.b16 %v449, %v445
    %v662 = vpack.c.b16 %v454, %v450
    %v663 = vpack.c.b16 %v455, %v451
    %v664 = vpack.c.b16 %v456, %v452
    %v665 = vpack.c.b16 %v457, %v453
    %v666 = vpack.c.b16 %v462, %v458
    %v667 = vpack.c.b16 %v463, %v459
    %v668 = vpack.c.b16 %v464, %v460
    %v669 = vpack.c.b16 %v465, %v461
    %v670 = vpack.c.b16 %v470, %v466
    %v671 = vpack.c.b16 %v471, %v467
    %v672 = vpack.c.b16 %v472, %v468
    %v673 = vpack.c.b16 %v473, %v469
    %v674 = vpack.c.b16 %v478, %v474
    %v675 = vpack.c.b16 %v479, %v475
    %v676 = vpack.c.b16 %v480, %v476
    %v677 = vpack.c.b16 %v481, %v477
    %v678 = vpack.c.b16 %v486, %v482
    %v679 = vpack.c.b16 %v487, %v483
    %v680 = vpack.c.b16 %v488, %v484
    %v681 = vpack.c.b16 %v489, %v485
    %v682 = vpack.c.b16 %v494, %v490
    %v683 = vpack.c.b16 %v495, %v491
    %v684 = vpack.c.b16 %v496, %v492
    %v685 = vpack.c.b16 %v497, %v493
    %v686 = vpack.c.b16 %v502, %v498
    %v687 = vpack.c.b16 %v503, %v499
    %v688 = vpack.c.b16 %v504, %v500
    %v689 = vpack.c.b16 %v505, %v501
    %v690 = vpack.c.b16 %v510, %v506
    %v691 = vpack.c.b16 %v511, %v507
    %v692 = vpack.c.b16 %v512, %v508
    %v693 = vpack.c.b16 %v513, %v509
    %v694 = vpack.c.b16 %v518, %v514
    %v695 = vpack.c.b16 %v519, %v515
    %v696 = vpack.c.b16 %v520, %v516
    %v697 = vpack.c.b16 %v521, %v517
    %v698 = vpack.c.b16 %v526, %v522
    %v699 = vpack.c.b16 %v527, %v523
    %v700 = vpack.c.b16 %v528, %v524
    %v701 = vpack.c.b16 %v529, %v525
    %v702 = vpack.c.b16 %v534, %v530
    %v703 = vpack.c.b16 %v535, %v531
    %v704 = vpack.c.b16 %v536, %v532
    %v705 = vpack.c.b16 %v537, %v533
    %v706 = vpack.c.b16 %v542, %v538
    %v707 = vpack.c.b16 %v543, %v539
    %v708 = vpack.c.b16 %v544, %v540
    %v709 = vpack.c.b16 %v545, %v541
    %v710 = vpack.c.b16 %v550, %v546
    %v711 = vpack.c.b16 %v551, %v547
    %v712 = vpack.c.b16 %v552, %v548
    %v713 = vpack.c.b16 %v553, %v549
    %v714 = vpack.c.b16 %v558, %v554
    %v715 = vpack.c.b16 %v559, %v555
    %v716 = vpack.c.b16 %v560, %v556
    %v717 = vpack.c.b16 %v561, %v557
    %v718 = vpack.c.b16 %v566, %v562
    %v719 = vpack.c.b16 %v567, %v563
    %v720 = vpack.c.b16 %v568, %v564
    %v721 = vpack.c.b16 %v569, %v565
    %v722 = vpack.c.b16 %v574, %v570
    %v723 = vpack.c.b16 %v575, %v571
    %v724 = vpack.c.b16 %v576, %v572
    %v725 = vpack.c.b16 %v577, %v573
    %v726 = vpack.c.b16 %v582, %v578
    %v727 = vpack.c.b16 %v583, %v579
    %v728 = vpack.c.b16 %v584, %v580
    %v729 = vpack.c.b16 %v585, %v581
    %v730 = vpack.c.b16 %v590, %v586
    %v731 = vpack.c.b16 %v591, %v587
    %v732 = vpack.c.b16 %v592, %v588
    %v733 = vpack.c.b16 %v593, %v589
    %v734 = vpack.c.b16 %v598, %v594
    %v735 = vpack.c.b16 %v599, %v595
    %v736 = vpack.c.b16 %v600, %v596
    %v737 = vpack.c.b16 %v601, %v597
    %v738 = vpack.c.b16 %v606, %v602
    %v739 = vpack.c.b16 %v607, %v603
    %v740 = vpack.c.b16 %v608, %v604
    %v741 = vpack.c.b16 %v609, %v605
    %v742 = vpack.c.b16 %v614, %v610
    %v743 = vpack.c.b16 %v615, %v611
    %v744 = vpack.c.b16 %v616, %v612
    %v745 = vpack.c.b16 %v617, %v613
    %874 = vmatpush.bf16.msra.mxu0 %v646
    %875 = vmatpush.bf16.msra.mxu0 %v642
    %876 = vmatpush.bf16.msra.mxu0 %v638
    %877 = vmatpush.bf16.msra.mxu0 %v634
    %878 = vmatpush.bf16.msra.mxu0 %v630
    %879 = vmatpush.bf16.msra.mxu0 %v626
    %880 = vmatpush.bf16.msra.mxu0 %v622
    %881 = vmatpush.bf16.msra.mxu0 %v618
    %882 = vmatmul.bf16.gmra.mxu0 %v94
    %v883 = vpop.f32.mrf.mxu0
    %v884 = vadd.f32 %v226, %v883
    %v885 = vpop.f32.mrf.mxu0
    %v886 = vadd.f32 %v230, %v885
    %887 = vdwg.mxu0
    %888 = vmatpush.bf16.msra.mxu0 %v678
    %889 = vmatpush.bf16.msra.mxu0 %v674
    %890 = vmatpush.bf16.msra.mxu0 %v670
    %891 = vmatpush.bf16.msra.mxu0 %v666
    %892 = vmatpush.bf16.msra.mxu0 %v662
    %893 = vmatpush.bf16.msra.mxu0 %v658
    %894 = vmatpush.bf16.msra.mxu0 %v654
    %895 = vmatpush.bf16.msra.mxu0 %v650
    %896 = vmatmul.bf16.gmra.mxu0 %v95
    %v897 = vpop.f32.mrf.mxu0
    %v898 = vadd.f32 %v884, %v897
    %v899 = vpop.f32.mrf.mxu0
    %v900 = vadd.f32 %v886, %v899
    %901 = vdwg.mxu0
    %902 = vmatpush.bf16.msra.mxu0 %v710
    %903 = vmatpush.bf16.msra.mxu0 %v706
    %904 = vmatpush.bf16.msra.mxu0 %v702
    %905 = vmatpush.bf16.msra.mxu0 %v698
    %906 = vmatpush.bf16.msra.mxu0 %v694
    %907 = vmatpush.bf16.msra.mxu0 %v690
    %908 = vmatpush.bf16.msra.mxu0 %v686
    %909 = vmatpush.bf16.msra.mxu0 %v682
    %910 = vmatmul.bf16.gmra.mxu0 %v96
    %v911 = vpop.f32.mrf.mxu0
    %v912 = vadd.f32 %v898, %v911
    %v913 = vpop.f32.mrf.mxu0
    %v914 = vadd.f32 %v900, %v913
    %915 = vdwg.mxu0
    %916 = vmatpush.bf16.msra.mxu0 %v742
    %917 = vmatpush.bf16.msra.mxu0 %v738
    %918 = vmatpush.bf16.msra.mxu0 %v734
    %919 = vmatpush.bf16.msra.mxu0 %v730
    %920 = vmatpush.bf16.msra.mxu0 %v726
    %921 = vmatpush.bf16.msra.mxu0 %v722
    %922 = vmatpush.bf16.msra.mxu0 %v718
    %923 = vmatpush.bf16.msra.mxu0 %v714
    %924 = vmatmul.bf16.gmra.mxu0 %v97
    %v925 = vpop.f32.mrf.mxu0
    %v926 = vadd.f32 %v912, %v925
    %v927 = vpop.f32.mrf.mxu0
    %v928 = vadd.f32 %v914, %v927
    %929 = vdwg.mxu0
    %930 = vmatpush.bf16.msra.mxu0 %v647
    %931 = vmatpush.bf16.msra.mxu0 %v643
    %932 = vmatpush.bf16.msra.mxu0 %v639
    %933 = vmatpush.bf16.msra.mxu0 %v635
    %934 = vmatpush.bf16.msra.mxu0 %v631
    %935 = vmatpush.bf16.msra.mxu0 %v627
    %936 = vmatpush.bf16.msra.mxu0 %v623
    %937 = vmatpush.bf16.msra.mxu0 %v619
    %938 = vmatmul.bf16.gmra.mxu0 %v94
    %v939 = vpop.f32.mrf.mxu0
    %v940 = vadd.f32 %v227, %v939
    %v941 = vpop.f32.mrf.mxu0
    %v942 = vadd.f32 %v231, %v941
    %943 = vdwg.mxu0
    %944 = vmatpush.bf16.msra.mxu0 %v679
    %945 = vmatpush.bf16.msra.mxu0 %v675
    %946 = vmatpush.bf16.msra.mxu0 %v671
    %947 = vmatpush.bf16.msra.mxu0 %v667
    %948 = vmatpush.bf16.msra.mxu0 %v663
    %949 = vmatpush.bf16.msra.mxu0 %v659
    %950 = vmatpush.bf16.msra.mxu0 %v655
    %951 = vmatpush.bf16.msra.mxu0 %v651
    %952 = vmatmul.bf16.gmra.mxu0 %v95
    %v953 = vpop.f32.mrf.mxu0
    %v954 = vadd.f32 %v940, %v953
    %v955 = vpop.f32.mrf.mxu0
    %v956 = vadd.f32 %v942, %v955
    %957 = vdwg.mxu0
    %958 = vmatpush.bf16.msra.mxu0 %v711
    %959 = vmatpush.bf16.msra.mxu0 %v707
    %960 = vmatpush.bf16.msra.mxu0 %v703
    %961 = vmatpush.bf16.msra.mxu0 %v699
    %962 = vmatpush.bf16.msra.mxu0 %v695
    %963 = vmatpush.bf16.msra.mxu0 %v691
    %964 = vmatpush.bf16.msra.mxu0 %v687
    %965 = vmatpush.bf16.msra.mxu0 %v683
    %966 = vmatmul.bf16.gmra.mxu0 %v96
    %v967 = vpop.f32.mrf.mxu0
    %v968 = vadd.f32 %v954, %v967
    %v969 = vpop.f32.mrf.mxu0
    %v970 = vadd.f32 %v956, %v969
    %971 = vdwg.mxu0
    %972 = vmatpush.bf16.msra.mxu0 %v743
    %973 = vmatpush.bf16.msra.mxu0 %v739
    %974 = vmatpush.bf16.msra.mxu0 %v735
    %975 = vmatpush.bf16.msra.mxu0 %v731
    %976 = vmatpush.bf16.msra.mxu0 %v727
    %977 = vmatpush.bf16.msra.mxu0 %v723
    %978 = vmatpush.bf16.msra.mxu0 %v719
    %979 = vmatpush.bf16.msra.mxu0 %v715
    %980 = vmatmul.bf16.gmra.mxu0 %v97
    %v981 = vpop.f32.mrf.mxu0
    %v982 = vadd.f32 %v968, %v981
    %v983 = vpop.f32.mrf.mxu0
    %v984 = vadd.f32 %v970, %v983
    %985 = vdwg.mxu0
    %986 = vmatpush.bf16.msra.mxu0 %v648
    %987 = vmatpush.bf16.msra.mxu0 %v644
    %988 = vmatpush.bf16.msra.mxu0 %v640
    %989 = vmatpush.bf16.msra.mxu0 %v636
    %990 = vmatpush.bf16.msra.mxu0 %v632
    %991 = vmatpush.bf16.msra.mxu0 %v628
    %992 = vmatpush.bf16.msra.mxu0 %v624
    %993 = vmatpush.bf16.msra.mxu0 %v620
    %994 = vmatmul.bf16.gmra.mxu0 %v94
    %v995 = vpop.f32.mrf.mxu0
    %v996 = vadd.f32 %v228, %v995
    %v997 = vpop.f32.mrf.mxu0
    %v998 = vadd.f32 %v232, %v997
    %999 = vdwg.mxu0
    %1000 = vmatpush.bf16.msra.mxu0 %v680
    %1001 = vmatpush.bf16.msra.mxu0 %v676
    %1002 = vmatpush.bf16.msra.mxu0 %v672
    %1003 = vmatpush.bf16.msra.mxu0 %v668
    %1004 = vmatpush.bf16.msra.mxu0 %v664
    %1005 = vmatpush.bf16.msra.mxu0 %v660
    %1006 = vmatpush.bf16.msra.mxu0 %v656
    %1007 = vmatpush.bf16.msra.mxu0 %v652
    %1008 = vmatmul.bf16.gmra.mxu0 %v95
    %v1009 = vpop.f32.mrf.mxu0
    %v1010 = vadd.f32 %v996, %v1009
    %v1011 = vpop.f32.mrf.mxu0
    %v1012 = vadd.f32 %v998, %v1011
    %1013 = vdwg.mxu0
    %1014 = vmatpush.bf16.msra.mxu0 %v712
    %1015 = vmatpush.bf16.msra.mxu0 %v708
    %1016 = vmatpush.bf16.msra.mxu0 %v704
    %1017 = vmatpush.bf16.msra.mxu0 %v700
    %1018 = vmatpush.bf16.msra.mxu0 %v696
    %1019 = vmatpush.bf16.msra.mxu0 %v692
    %1020 = vmatpush.bf16.msra.mxu0 %v688
    %1021 = vmatpush.bf16.msra.mxu0 %v684
    %1022 = vmatmul.bf16.gmra.mxu0 %v96
    %v1023 = vpop.f32.mrf.mxu0
    %v1024 = vadd.f32 %v1010, %v1023
    %v1025 = vpop.f32.mrf.mxu0
    %v1026 = vadd.f32 %v1012, %v1025
    %1027 = vdwg.mxu0
    %1028 = vmatpush.bf16.msra.mxu0 %v744
    %1029 = vmatpush.bf16.msra.mxu0 %v740
    %1030 = vmatpush.bf16.msra.mxu0 %v736
    %1031 = vmatpush.bf16.msra.mxu0 %v732
    %1032 = vmatpush.bf16.msra.mxu0 %v728
    %1033 = vmatpush.bf16.msra.mxu0 %v724
    %1034 = vmatpush.bf16.msra.mxu0 %v720
    %1035 = vmatpush.bf16.msra.mxu0 %v716
    %1036 = vmatmul.bf16.gmra.mxu0 %v97
    %v1037 = vpop.f32.mrf.mxu0
    %v1038 = vadd.f32 %v1024, %v1037
    %v1039 = vpop.f32.mrf.mxu0
    %v1040 = vadd.f32 %v1026, %v1039
    %1041 = vdwg.mxu0
    %1042 = vmatpush.bf16.msra.mxu0 %v649
    %1043 = vmatpush.bf16.msra.mxu0 %v645
    %1044 = vmatpush.bf16.msra.mxu0 %v641
    %1045 = vmatpush.bf16.msra.mxu0 %v637
    %1046 = vmatpush.bf16.msra.mxu0 %v633
    %1047 = vmatpush.bf16.msra.mxu0 %v629
    %1048 = vmatpush.bf16.msra.mxu0 %v625
    %1049 = vmatpush.bf16.msra.mxu0 %v621
    %1050 = vmatmul.bf16.gmra.mxu0 %v94
    %v1051 = vpop.f32.mrf.mxu0
    %v1052 = vadd.f32 %v229, %v1051
    %v1053 = vpop.f32.mrf.mxu0
    %v1054 = vadd.f32 %v233, %v1053
    %1055 = vdwg.mxu0
    %1056 = vmatpush.bf16.msra.mxu0 %v681
    %1057 = vmatpush.bf16.msra.mxu0 %v677
    %1058 = vmatpush.bf16.msra.mxu0 %v673
    %1059 = vmatpush.bf16.msra.mxu0 %v669
    %1060 = vmatpush.bf16.msra.mxu0 %v665
    %1061 = vmatpush.bf16.msra.mxu0 %v661
    %1062 = vmatpush.bf16.msra.mxu0 %v657
    %1063 = vmatpush.bf16.msra.mxu0 %v653
    %1064 = vmatmul.bf16.gmra.mxu0 %v95
    %v1065 = vpop.f32.mrf.mxu0
    %v1066 = vadd.f32 %v1052, %v1065
    %v1067 = vpop.f32.mrf.mxu0
    %v1068 = vadd.f32 %v1054, %v1067
    %1069 = vdwg.mxu0
    %1070 = vmatpush.bf16.msra.mxu0 %v713
    %1071 = vmatpush.bf16.msra.mxu0 %v709
    %1072 = vmatpush.bf16.msra.mxu0 %v705
    %1073 = vmatpush.bf16.msra.mxu0 %v701
    %1074 = vmatpush.bf16.msra.mxu0 %v697
    %1075 = vmatpush.bf16.msra.mxu0 %v693
    %1076 = vmatpush.bf16.msra.mxu0 %v689
    %1077 = vmatpush.bf16.msra.mxu0 %v685
    %1078 = vmatmul.bf16.gmra.mxu0 %v96
    %v1079 = vpop.f32.mrf.mxu0
    %v1080 = vadd.f32 %v1066, %v1079
    %v1081 = vpop.f32.mrf.mxu0
    %v1082 = vadd.f32 %v1068, %v1081
    %1083 = vdwg.mxu0
    %1084 = vmatpush.bf16.msra.mxu0 %v745
    %1085 = vmatpush.bf16.msra.mxu0 %v741
    %1086 = vmatpush.bf16.msra.mxu0 %v737
    %1087 = vmatpush.bf16.msra.mxu0 %v733
    %1088 = vmatpush.bf16.msra.mxu0 %v729
    %1089 = vmatpush.bf16.msra.mxu0 %v725
    %1090 = vmatpush.bf16.msra.mxu0 %v721
    %1091 = vmatpush.bf16.msra.mxu0 %v717
    %1092 = vmatmul.bf16.gmra.mxu0 %v97
    %v1093 = vpop.f32.mrf.mxu0
    %v1094 = vadd.f32 %v1080, %v1093
    %v1095 = vpop.f32.mrf.mxu0
    %v1096 = vadd.f32 %v1082, %v1095
    %1097 = vdwg.mxu0
    %v1098 = vsub.f32 %v86, %v926
    %v1099 = vsub.f32 %v87, %v982
    %v1100 = vsub.f32 %v88, %v1038
    %v1101 = vsub.f32 %v89, %v1094
    %v1102 = vsub.f32 %v90, %v928
    %v1103 = vsub.f32 %v91, %v984
    %v1104 = vsub.f32 %v92, %v1040
    %v1105 = vsub.f32 %v93, %v1096
    %v1106 = vmul.f32 %v1098, %v1098
    %v1107 = vmul.f32 %v1099, %v1099
    %v1108 = vmul.f32 %v1100, %v1100
    %v1109 = vmul.f32 %v1101, %v1101
    %v1110 = vmul.f32 %v1102, %v1102
    %v1111 = vmul.f32 %v1103, %v1103
    %v1112 = vmul.f32 %v1104, %v1104
    %v1113 = vmul.f32 %v1105, %v1105
    %v1114 = vadd.f32 %v1106, %v1107
    %v1115 = vadd.f32 %v1114, %v1108
    %v1116 = vadd.f32 %v1115, %v1109
    %1117 = vadd.xlane.f32.xlu0 %v1116
    %v1118 = vpop.xlane.xlu0 %1117
    %v1119 = vadd.f32 %v1110, %v1111
    %v1120 = vadd.f32 %v1119, %v1112
    %v1121 = vadd.f32 %v1120, %v1113
    %1122 = vadd.xlane.f32.xlu0 %v1121
    %v1123 = vpop.xlane.xlu0 %1122
    %v1124 = vmax.f32 %v1118, %v1123
    %v1125 = vrot.slane %v1124, 4
    %v1126 = vmax.f32 %v1124, %v1125
    %v1127 = vrot.slane %v1126, 2
    %v1128 = vmax.f32 %v1126, %v1127
    %v1129 = vrot.slane %v1128, 1
    %v1130 = vmax.f32 %v1128, %v1129
    %s1131 = vtos %v1130
    %p1132 = scmp.ge.f32.partialorder %s1131, 1e-12
    %v1133 = vpack.c.bf16 %v1102, %v1098
    %v1134 = vpack.c.bf16 %v1103, %v1099
    %v1135 = vpack.c.bf16 %v1104, %v1100
    %v1136 = vpack.c.bf16 %v1105, %v1101
    %v1137 = vmul.f32 %v1098, 0.05
    %v1138 = vmul.f32 %v1099, 0.05
    %v1139 = vmul.f32 %v1100, 0.05
    %v1140 = vmul.f32 %v1101, 0.05
    %v1141 = vmul.f32 %v1102, 0.05
    %v1142 = vmul.f32 %v1103, 0.05
    %v1143 = vmul.f32 %v1104, 0.05
    %v1144 = vmul.f32 %v1105, 0.05
    %1145 = vmatpush.bf16.msra.mxu0 %v646
    %1146 = vmatpush.bf16.msra.mxu0 %v642
    %1147 = vmatpush.bf16.msra.mxu0 %v638
    %1148 = vmatpush.bf16.msra.mxu0 %v634
    %1149 = vmatpush.bf16.msra.mxu0 %v630
    %1150 = vmatpush.bf16.msra.mxu0 %v626
    %1151 = vmatpush.bf16.msra.mxu0 %v622
    %1152 = vmatpush.bf16.msra.mxu0 %v618
    %1153 = vmatmul.bf16.gmra.mxu0 %v1133
    %v1154 = vpop.f32.mrf.mxu0
    %v1155 = vadd.f32 %v1137, %v1154
    %v1156 = vpop.f32.mrf.mxu0
    %v1157 = vadd.f32 %v1141, %v1156
    %1158 = vdwg.mxu0
    %1159 = vmatpush.bf16.msra.mxu0 %v678
    %1160 = vmatpush.bf16.msra.mxu0 %v674
    %1161 = vmatpush.bf16.msra.mxu0 %v670
    %1162 = vmatpush.bf16.msra.mxu0 %v666
    %1163 = vmatpush.bf16.msra.mxu0 %v662
    %1164 = vmatpush.bf16.msra.mxu0 %v658
    %1165 = vmatpush.bf16.msra.mxu0 %v654
    %1166 = vmatpush.bf16.msra.mxu0 %v650
    %1167 = vmatmul.bf16.gmra.mxu0 %v1134
    %v1168 = vpop.f32.mrf.mxu0
    %v1169 = vadd.f32 %v1155, %v1168
    %v1170 = vpop.f32.mrf.mxu0
    %v1171 = vadd.f32 %v1157, %v1170
    %1172 = vdwg.mxu0
    %1173 = vmatpush.bf16.msra.mxu0 %v710
    %1174 = vmatpush.bf16.msra.mxu0 %v706
    %1175 = vmatpush.bf16.msra.mxu0 %v702
    %1176 = vmatpush.bf16.msra.mxu0 %v698
    %1177 = vmatpush.bf16.msra.mxu0 %v694
    %1178 = vmatpush.bf16.msra.mxu0 %v690
    %1179 = vmatpush.bf16.msra.mxu0 %v686
    %1180 = vmatpush.bf16.msra.mxu0 %v682
    %1181 = vmatmul.bf16.gmra.mxu0 %v1135
    %v1182 = vpop.f32.mrf.mxu0
    %v1183 = vadd.f32 %v1169, %v1182
    %v1184 = vpop.f32.mrf.mxu0
    %v1185 = vadd.f32 %v1171, %v1184
    %1186 = vdwg.mxu0
    %1187 = vmatpush.bf16.msra.mxu0 %v742
    %1188 = vmatpush.bf16.msra.mxu0 %v738
    %1189 = vmatpush.bf16.msra.mxu0 %v734
    %1190 = vmatpush.bf16.msra.mxu0 %v730
    %1191 = vmatpush.bf16.msra.mxu0 %v726
    %1192 = vmatpush.bf16.msra.mxu0 %v722
    %1193 = vmatpush.bf16.msra.mxu0 %v718
    %1194 = vmatpush.bf16.msra.mxu0 %v714
    %1195 = vmatmul.bf16.gmra.mxu0 %v1136
    %v1196 = vpop.f32.mrf.mxu0
    %v1197 = vadd.f32 %v1183, %v1196
    %v1198 = vpop.f32.mrf.mxu0
    %v1199 = vadd.f32 %v1185, %v1198
    %1200 = vdwg.mxu0
    %1201 = vmatpush.bf16.msra.mxu0 %v647
    %1202 = vmatpush.bf16.msra.mxu0 %v643
    %1203 = vmatpush.bf16.msra.mxu0 %v639
    %1204 = vmatpush.bf16.msra.mxu0 %v635
    %1205 = vmatpush.bf16.msra.mxu0 %v631
    %1206 = vmatpush.bf16.msra.mxu0 %v627
    %1207 = vmatpush.bf16.msra.mxu0 %v623
    %1208 = vmatpush.bf16.msra.mxu0 %v619
    %1209 = vmatmul.bf16.gmra.mxu0 %v1133
    %v1210 = vpop.f32.mrf.mxu0
    %v1211 = vadd.f32 %v1138, %v1210
    %v1212 = vpop.f32.mrf.mxu0
    %v1213 = vadd.f32 %v1142, %v1212
    %1214 = vdwg.mxu0
    %1215 = vmatpush.bf16.msra.mxu0 %v679
    %1216 = vmatpush.bf16.msra.mxu0 %v675
    %1217 = vmatpush.bf16.msra.mxu0 %v671
    %1218 = vmatpush.bf16.msra.mxu0 %v667
    %1219 = vmatpush.bf16.msra.mxu0 %v663
    %1220 = vmatpush.bf16.msra.mxu0 %v659
    %1221 = vmatpush.bf16.msra.mxu0 %v655
    %1222 = vmatpush.bf16.msra.mxu0 %v651
    %1223 = vmatmul.bf16.gmra.mxu0 %v1134
    %v1224 = vpop.f32.mrf.mxu0
    %v1225 = vadd.f32 %v1211, %v1224
    %v1226 = vpop.f32.mrf.mxu0
    %v1227 = vadd.f32 %v1213, %v1226
    %1228 = vdwg.mxu0
    %1229 = vmatpush.bf16.msra.mxu0 %v711
    %1230 = vmatpush.bf16.msra.mxu0 %v707
    %1231 = vmatpush.bf16.msra.mxu0 %v703
    %1232 = vmatpush.bf16.msra.mxu0 %v699
    %1233 = vmatpush.bf16.msra.mxu0 %v695
    %1234 = vmatpush.bf16.msra.mxu0 %v691
    %1235 = vmatpush.bf16.msra.mxu0 %v687
    %1236 = vmatpush.bf16.msra.mxu0 %v683
    %1237 = vmatmul.bf16.gmra.mxu0 %v1135
    %v1238 = vpop.f32.mrf.mxu0
    %v1239 = vadd.f32 %v1225, %v1238
    %v1240 = vpop.f32.mrf.mxu0
    %v1241 = vadd.f32 %v1227, %v1240
    %1242 = vdwg.mxu0
    %1243 = vmatpush.bf16.msra.mxu0 %v743
    %1244 = vmatpush.bf16.msra.mxu0 %v739
    %1245 = vmatpush.bf16.msra.mxu0 %v735
    %1246 = vmatpush.bf16.msra.mxu0 %v731
    %1247 = vmatpush.bf16.msra.mxu0 %v727
    %1248 = vmatpush.bf16.msra.mxu0 %v723
    %1249 = vmatpush.bf16.msra.mxu0 %v719
    %1250 = vmatpush.bf16.msra.mxu0 %v715
    %1251 = vmatmul.bf16.gmra.mxu0 %v1136
    %v1252 = vpop.f32.mrf.mxu0
    %v1253 = vadd.f32 %v1239, %v1252
    %v1254 = vpop.f32.mrf.mxu0
    %v1255 = vadd.f32 %v1241, %v1254
    %1256 = vdwg.mxu0
    %1257 = vmatpush.bf16.msra.mxu0 %v648
    %1258 = vmatpush.bf16.msra.mxu0 %v644
    %1259 = vmatpush.bf16.msra.mxu0 %v640
    %1260 = vmatpush.bf16.msra.mxu0 %v636
    %1261 = vmatpush.bf16.msra.mxu0 %v632
    %1262 = vmatpush.bf16.msra.mxu0 %v628
    %1263 = vmatpush.bf16.msra.mxu0 %v624
    %1264 = vmatpush.bf16.msra.mxu0 %v620
    %1265 = vmatmul.bf16.gmra.mxu0 %v1133
    %v1266 = vpop.f32.mrf.mxu0
    %v1267 = vadd.f32 %v1139, %v1266
    %v1268 = vpop.f32.mrf.mxu0
    %v1269 = vadd.f32 %v1143, %v1268
    %1270 = vdwg.mxu0
    %1271 = vmatpush.bf16.msra.mxu0 %v680
    %1272 = vmatpush.bf16.msra.mxu0 %v676
    %1273 = vmatpush.bf16.msra.mxu0 %v672
    %1274 = vmatpush.bf16.msra.mxu0 %v668
    %1275 = vmatpush.bf16.msra.mxu0 %v664
    %1276 = vmatpush.bf16.msra.mxu0 %v660
    %1277 = vmatpush.bf16.msra.mxu0 %v656
    %1278 = vmatpush.bf16.msra.mxu0 %v652
    %1279 = vmatmul.bf16.gmra.mxu0 %v1134
    %v1280 = vpop.f32.mrf.mxu0
    %v1281 = vadd.f32 %v1267, %v1280
    %v1282 = vpop.f32.mrf.mxu0
    %v1283 = vadd.f32 %v1269, %v1282
    %1284 = vdwg.mxu0
    %1285 = vmatpush.bf16.msra.mxu0 %v712
    %1286 = vmatpush.bf16.msra.mxu0 %v708
    %1287 = vmatpush.bf16.msra.mxu0 %v704
    %1288 = vmatpush.bf16.msra.mxu0 %v700
    %1289 = vmatpush.bf16.msra.mxu0 %v696
    %1290 = vmatpush.bf16.msra.mxu0 %v692
    %1291 = vmatpush.bf16.msra.mxu0 %v688
    %1292 = vmatpush.bf16.msra.mxu0 %v684
    %1293 = vmatmul.bf16.gmra.mxu0 %v1135
    %v1294 = vpop.f32.mrf.mxu0
    %v1295 = vadd.f32 %v1281, %v1294
    %v1296 = vpop.f32.mrf.mxu0
    %v1297 = vadd.f32 %v1283, %v1296
    %1298 = vdwg.mxu0
    %1299 = vmatpush.bf16.msra.mxu0 %v744
    %1300 = vmatpush.bf16.msra.mxu0 %v740
    %1301 = vmatpush.bf16.msra.mxu0 %v736
    %1302 = vmatpush.bf16.msra.mxu0 %v732
    %1303 = vmatpush.bf16.msra.mxu0 %v728
    %1304 = vmatpush.bf16.msra.mxu0 %v724
    %1305 = vmatpush.bf16.msra.mxu0 %v720
    %1306 = vmatpush.bf16.msra.mxu0 %v716
    %1307 = vmatmul.bf16.gmra.mxu0 %v1136
    %v1308 = vpop.f32.mrf.mxu0
    %v1309 = vadd.f32 %v1295, %v1308
    %v1310 = vpop.f32.mrf.mxu0
    %v1311 = vadd.f32 %v1297, %v1310
    %1312 = vdwg.mxu0
    %1313 = vmatpush.bf16.msra.mxu0 %v649
    %1314 = vmatpush.bf16.msra.mxu0 %v645
    %1315 = vmatpush.bf16.msra.mxu0 %v641
    %1316 = vmatpush.bf16.msra.mxu0 %v637
    %1317 = vmatpush.bf16.msra.mxu0 %v633
    %1318 = vmatpush.bf16.msra.mxu0 %v629
    %1319 = vmatpush.bf16.msra.mxu0 %v625
    %1320 = vmatpush.bf16.msra.mxu0 %v621
    %1321 = vmatmul.bf16.gmra.mxu0 %v1133
    %v1322 = vpop.f32.mrf.mxu0
    %v1323 = vadd.f32 %v1140, %v1322
    %v1324 = vpop.f32.mrf.mxu0
    %v1325 = vadd.f32 %v1144, %v1324
    %1326 = vdwg.mxu0
    %1327 = vmatpush.bf16.msra.mxu0 %v681
    %1328 = vmatpush.bf16.msra.mxu0 %v677
    %1329 = vmatpush.bf16.msra.mxu0 %v673
    %1330 = vmatpush.bf16.msra.mxu0 %v669
    %1331 = vmatpush.bf16.msra.mxu0 %v665
    %1332 = vmatpush.bf16.msra.mxu0 %v661
    %1333 = vmatpush.bf16.msra.mxu0 %v657
    %1334 = vmatpush.bf16.msra.mxu0 %v653
    %1335 = vmatmul.bf16.gmra.mxu0 %v1134
    %v1336 = vpop.f32.mrf.mxu0
    %v1337 = vadd.f32 %v1323, %v1336
    %v1338 = vpop.f32.mrf.mxu0
    %v1339 = vadd.f32 %v1325, %v1338
    %1340 = vdwg.mxu0
    %1341 = vmatpush.bf16.msra.mxu0 %v713
    %1342 = vmatpush.bf16.msra.mxu0 %v709
    %1343 = vmatpush.bf16.msra.mxu0 %v705
    %1344 = vmatpush.bf16.msra.mxu0 %v701
    %1345 = vmatpush.bf16.msra.mxu0 %v697
    %1346 = vmatpush.bf16.msra.mxu0 %v693
    %1347 = vmatpush.bf16.msra.mxu0 %v689
    %1348 = vmatpush.bf16.msra.mxu0 %v685
    %1349 = vmatmul.bf16.gmra.mxu0 %v1135
    %v1350 = vpop.f32.mrf.mxu0
    %v1351 = vadd.f32 %v1337, %v1350
    %v1352 = vpop.f32.mrf.mxu0
    %v1353 = vadd.f32 %v1339, %v1352
    %1354 = vdwg.mxu0
    %1355 = vmatpush.bf16.msra.mxu0 %v745
    %1356 = vmatpush.bf16.msra.mxu0 %v741
    %1357 = vmatpush.bf16.msra.mxu0 %v737
    %1358 = vmatpush.bf16.msra.mxu0 %v733
    %1359 = vmatpush.bf16.msra.mxu0 %v729
    %1360 = vmatpush.bf16.msra.mxu0 %v725
    %1361 = vmatpush.bf16.msra.mxu0 %v721
    %1362 = vmatpush.bf16.msra.mxu0 %v717
    %1363 = vmatmul.bf16.gmra.mxu0 %v1136
    %v1364 = vpop.f32.mrf.mxu0
    %v1365 = vadd.f32 %v1351, %v1364
    %v1366 = vpop.f32.mrf.mxu0
    %v1367 = vadd.f32 %v1353, %v1366
    %1368 = vdwg.mxu0
    %v1369 = vmul.f32 %v1098, %v1197
    %v1370 = vmul.f32 %v1099, %v1253
    %v1371 = vmul.f32 %v1100, %v1309
    %v1372 = vmul.f32 %v1101, %v1365
    %v1373 = vmul.f32 %v1102, %v1199
    %v1374 = vmul.f32 %v1103, %v1255
    %v1375 = vmul.f32 %v1104, %v1311
    %v1376 = vmul.f32 %v1105, %v1367
    %v1377 = vadd.f32 %v1369, %v1370
    %v1378 = vadd.f32 %v1377, %v1371
    %v1379 = vadd.f32 %v1378, %v1372
    %1380 = vadd.xlane.f32.xlu0 %v1379
    %v1381 = vpop.xlane.xlu0 %1380
    %v1382 = vadd.f32 %v1373, %v1374
    %v1383 = vadd.f32 %v1382, %v1375
    %v1384 = vadd.f32 %v1383, %v1376
    %1385 = vadd.xlane.f32.xlu0 %v1384
    %v1386 = vpop.xlane.xlu0 %1385
    %v1387 = vrcp.pop %v1381
    %v1388 = vrcp.pop %v1386
    %v1389 = vmul.f32 %v1381, %v1387
    %v1390 = vmul.f32 %v1386, %v1388
    %v1391 = vsub.f32 2.0, %v1389
    %v1392 = vsub.f32 2.0, %v1390
    %v1393 = vmul.f32 %v1387, %v1391
    %v1394 = vmul.f32 %v1388, %v1392
    %v1395 = vmul.f32 %v1118, %v1393
    %v1396 = vmul.f32 %v1123, %v1394
    %s1397 = scalar_select %p1132, 1, 0
    %v1398 = vstv %s1397
    %vm1399 = vcmp.eq.s32.totalorder %v1398, 1
    %v1400 = vsel %vm1399, %v1395, 0.0
    %v1401 = vsel %vm1399, %v1396, 0.0
    %v1402 = vmul.f32 %v1400, %v1098
    %v1403 = vmul.f32 %v1400, %v1099
    %v1404 = vmul.f32 %v1400, %v1100
    %v1405 = vmul.f32 %v1400, %v1101
    %v1406 = vmul.f32 %v1401, %v1102
    %v1407 = vmul.f32 %v1401, %v1103
    %v1408 = vmul.f32 %v1401, %v1104
    %v1409 = vmul.f32 %v1401, %v1105
    %v1410 = vadd.f32 %v86, %v1402
    %v1411 = vadd.f32 %v87, %v1403
    %v1412 = vadd.f32 %v88, %v1404
    %v1413 = vadd.f32 %v89, %v1405
    %v1414 = vadd.f32 %v90, %v1406
    %v1415 = vadd.f32 %v91, %v1407
    %v1416 = vadd.f32 %v92, %v1408
    %v1417 = vadd.f32 %v93, %v1409
    %v1418 = vmul.f32 %v1400, %v1197
    %v1419 = vmul.f32 %v1400, %v1253
    %v1420 = vmul.f32 %v1400, %v1309
    %v1421 = vmul.f32 %v1400, %v1365
    %v1422 = vmul.f32 %v1401, %v1199
    %v1423 = vmul.f32 %v1401, %v1255
    %v1424 = vmul.f32 %v1401, %v1311
    %v1425 = vmul.f32 %v1401, %v1367
    %v1426 = vsub.f32 %v1098, %v1418
    %v1427 = vsub.f32 %v1099, %v1419
    %v1428 = vsub.f32 %v1100, %v1420
    %v1429 = vsub.f32 %v1101, %v1421
    %v1430 = vsub.f32 %v1102, %v1422
    %v1431 = vsub.f32 %v1103, %v1423
    %v1432 = vsub.f32 %v1104, %v1424
    %v1433 = vsub.f32 %v1105, %v1425
    %v1434 = vmul.f32 %v1426, %v1426
    %v1435 = vmul.f32 %v1427, %v1427
    %v1436 = vmul.f32 %v1428, %v1428
    %v1437 = vmul.f32 %v1429, %v1429
    %v1438 = vmul.f32 %v1430, %v1430
    %v1439 = vmul.f32 %v1431, %v1431
    %v1440 = vmul.f32 %v1432, %v1432
    %v1441 = vmul.f32 %v1433, %v1433
    %v1442 = vadd.f32 %v1434, %v1435
    %v1443 = vadd.f32 %v1442, %v1436
    %v1444 = vadd.f32 %v1443, %v1437
    %1445 = vadd.xlane.f32.xlu0 %v1444
    %v1446 = vpop.xlane.xlu0 %1445
    %v1447 = vadd.f32 %v1438, %v1439
    %v1448 = vadd.f32 %v1447, %v1440
    %v1449 = vadd.f32 %v1448, %v1441
    %1450 = vadd.xlane.f32.xlu0 %v1449
    %v1451 = vpop.xlane.xlu0 %1450
    %v1452 = vrcp.pop %v1118
    %v1453 = vrcp.pop %v1123
    %v1454 = vmul.f32 %v1118, %v1452
    %v1455 = vmul.f32 %v1123, %v1453
    %v1456 = vsub.f32 2.0, %v1454
    %v1457 = vsub.f32 2.0, %v1455
    %v1458 = vmul.f32 %v1452, %v1456
    %v1459 = vmul.f32 %v1453, %v1457
    %v1460 = vmul.f32 %v1446, %v1458
    %v1461 = vmul.f32 %v1451, %v1459
    %v1462 = vmul.f32 %v1460, %v1098
    %v1463 = vmul.f32 %v1460, %v1099
    %v1464 = vmul.f32 %v1460, %v1100
    %v1465 = vmul.f32 %v1460, %v1101
    %v1466 = vmul.f32 %v1461, %v1102
    %v1467 = vmul.f32 %v1461, %v1103
    %v1468 = vmul.f32 %v1461, %v1104
    %v1469 = vmul.f32 %v1461, %v1105
    %v1470 = vadd.f32 %v1462, %v1426
    %v1471 = vadd.f32 %v1463, %v1427
    %v1472 = vadd.f32 %v1464, %v1428
    %v1473 = vadd.f32 %v1465, %v1429
    %v1474 = vadd.f32 %v1466, %v1430
    %v1475 = vadd.f32 %v1467, %v1431
    %v1476 = vadd.f32 %v1468, %v1432
    %v1477 = vadd.f32 %v1469, %v1433
    %v1478 = vsel %vm1399, %v1470, %v1098
    %v1479 = vsel %vm1399, %v1471, %v1099
    %v1480 = vsel %vm1399, %v1472, %v1100
    %v1481 = vsel %vm1399, %v1473, %v1101
    %v1482 = vsel %vm1399, %v1474, %v1102
    %v1483 = vsel %vm1399, %v1475, %v1103
    %v1484 = vsel %vm1399, %v1476, %v1104
    %v1485 = vsel %vm1399, %v1477, %v1105
    %v1486 = vmax.f32 %v1446, %v1451
    %v1487 = vrot.slane %v1486, 4
    %v1488 = vmax.f32 %v1486, %v1487
    %v1489 = vrot.slane %v1488, 2
    %v1490 = vmax.f32 %v1488, %v1489
    %v1491 = vrot.slane %v1490, 1
    %v1492 = vmax.f32 %v1490, %v1491
    %s1493 = vtos %v1492
    %p1494 = scmp.ge.f32.partialorder %s1493, 1e-12
    %v1495 = vpack.c.bf16 %v1482, %v1478
    %v1496 = vpack.c.bf16 %v1483, %v1479
    %v1497 = vpack.c.bf16 %v1484, %v1480
    %v1498 = vpack.c.bf16 %v1485, %v1481
    %v1499 = vmul.f32 %v1478, 0.05
    %v1500 = vmul.f32 %v1479, 0.05
    %v1501 = vmul.f32 %v1480, 0.05
    %v1502 = vmul.f32 %v1481, 0.05
    %v1503 = vmul.f32 %v1482, 0.05
    %v1504 = vmul.f32 %v1483, 0.05
    %v1505 = vmul.f32 %v1484, 0.05
    %v1506 = vmul.f32 %v1485, 0.05
    %1507 = vmatpush.bf16.msra.mxu0 %v646
    %1508 = vmatpush.bf16.msra.mxu0 %v642
    %1509 = vmatpush.bf16.msra.mxu0 %v638
    %1510 = vmatpush.bf16.msra.mxu0 %v634
    %1511 = vmatpush.bf16.msra.mxu0 %v630
    %1512 = vmatpush.bf16.msra.mxu0 %v626
    %1513 = vmatpush.bf16.msra.mxu0 %v622
    %1514 = vmatpush.bf16.msra.mxu0 %v618
    %1515 = vmatmul.bf16.gmra.mxu0 %v1495
    %v1516 = vpop.f32.mrf.mxu0
    %v1517 = vadd.f32 %v1499, %v1516
    %v1518 = vpop.f32.mrf.mxu0
    %v1519 = vadd.f32 %v1503, %v1518
    %1520 = vdwg.mxu0
    %1521 = vmatpush.bf16.msra.mxu0 %v678
    %1522 = vmatpush.bf16.msra.mxu0 %v674
    %1523 = vmatpush.bf16.msra.mxu0 %v670
    %1524 = vmatpush.bf16.msra.mxu0 %v666
    %1525 = vmatpush.bf16.msra.mxu0 %v662
    %1526 = vmatpush.bf16.msra.mxu0 %v658
    %1527 = vmatpush.bf16.msra.mxu0 %v654
    %1528 = vmatpush.bf16.msra.mxu0 %v650
    %1529 = vmatmul.bf16.gmra.mxu0 %v1496
    %v1530 = vpop.f32.mrf.mxu0
    %v1531 = vadd.f32 %v1517, %v1530
    %v1532 = vpop.f32.mrf.mxu0
    %v1533 = vadd.f32 %v1519, %v1532
    %1534 = vdwg.mxu0
    %1535 = vmatpush.bf16.msra.mxu0 %v710
    %1536 = vmatpush.bf16.msra.mxu0 %v706
    %1537 = vmatpush.bf16.msra.mxu0 %v702
    %1538 = vmatpush.bf16.msra.mxu0 %v698
    %1539 = vmatpush.bf16.msra.mxu0 %v694
    %1540 = vmatpush.bf16.msra.mxu0 %v690
    %1541 = vmatpush.bf16.msra.mxu0 %v686
    %1542 = vmatpush.bf16.msra.mxu0 %v682
    %1543 = vmatmul.bf16.gmra.mxu0 %v1497
    %v1544 = vpop.f32.mrf.mxu0
    %v1545 = vadd.f32 %v1531, %v1544
    %v1546 = vpop.f32.mrf.mxu0
    %v1547 = vadd.f32 %v1533, %v1546
    %1548 = vdwg.mxu0
    %1549 = vmatpush.bf16.msra.mxu0 %v742
    %1550 = vmatpush.bf16.msra.mxu0 %v738
    %1551 = vmatpush.bf16.msra.mxu0 %v734
    %1552 = vmatpush.bf16.msra.mxu0 %v730
    %1553 = vmatpush.bf16.msra.mxu0 %v726
    %1554 = vmatpush.bf16.msra.mxu0 %v722
    %1555 = vmatpush.bf16.msra.mxu0 %v718
    %1556 = vmatpush.bf16.msra.mxu0 %v714
    %1557 = vmatmul.bf16.gmra.mxu0 %v1498
    %v1558 = vpop.f32.mrf.mxu0
    %v1559 = vadd.f32 %v1545, %v1558
    %v1560 = vpop.f32.mrf.mxu0
    %v1561 = vadd.f32 %v1547, %v1560
    %1562 = vdwg.mxu0
    %1563 = vmatpush.bf16.msra.mxu0 %v647
    %1564 = vmatpush.bf16.msra.mxu0 %v643
    %1565 = vmatpush.bf16.msra.mxu0 %v639
    %1566 = vmatpush.bf16.msra.mxu0 %v635
    %1567 = vmatpush.bf16.msra.mxu0 %v631
    %1568 = vmatpush.bf16.msra.mxu0 %v627
    %1569 = vmatpush.bf16.msra.mxu0 %v623
    %1570 = vmatpush.bf16.msra.mxu0 %v619
    %1571 = vmatmul.bf16.gmra.mxu0 %v1495
    %v1572 = vpop.f32.mrf.mxu0
    %v1573 = vadd.f32 %v1500, %v1572
    %v1574 = vpop.f32.mrf.mxu0
    %v1575 = vadd.f32 %v1504, %v1574
    %1576 = vdwg.mxu0
    %1577 = vmatpush.bf16.msra.mxu0 %v679
    %1578 = vmatpush.bf16.msra.mxu0 %v675
    %1579 = vmatpush.bf16.msra.mxu0 %v671
    %1580 = vmatpush.bf16.msra.mxu0 %v667
    %1581 = vmatpush.bf16.msra.mxu0 %v663
    %1582 = vmatpush.bf16.msra.mxu0 %v659
    %1583 = vmatpush.bf16.msra.mxu0 %v655
    %1584 = vmatpush.bf16.msra.mxu0 %v651
    %1585 = vmatmul.bf16.gmra.mxu0 %v1496
    %v1586 = vpop.f32.mrf.mxu0
    %v1587 = vadd.f32 %v1573, %v1586
    %v1588 = vpop.f32.mrf.mxu0
    %v1589 = vadd.f32 %v1575, %v1588
    %1590 = vdwg.mxu0
    %1591 = vmatpush.bf16.msra.mxu0 %v711
    %1592 = vmatpush.bf16.msra.mxu0 %v707
    %1593 = vmatpush.bf16.msra.mxu0 %v703
    %1594 = vmatpush.bf16.msra.mxu0 %v699
    %1595 = vmatpush.bf16.msra.mxu0 %v695
    %1596 = vmatpush.bf16.msra.mxu0 %v691
    %1597 = vmatpush.bf16.msra.mxu0 %v687
    %1598 = vmatpush.bf16.msra.mxu0 %v683
    %1599 = vmatmul.bf16.gmra.mxu0 %v1497
    %v1600 = vpop.f32.mrf.mxu0
    %v1601 = vadd.f32 %v1587, %v1600
    %v1602 = vpop.f32.mrf.mxu0
    %v1603 = vadd.f32 %v1589, %v1602
    %1604 = vdwg.mxu0
    %1605 = vmatpush.bf16.msra.mxu0 %v743
    %1606 = vmatpush.bf16.msra.mxu0 %v739
    %1607 = vmatpush.bf16.msra.mxu0 %v735
    %1608 = vmatpush.bf16.msra.mxu0 %v731
    %1609 = vmatpush.bf16.msra.mxu0 %v727
    %1610 = vmatpush.bf16.msra.mxu0 %v723
    %1611 = vmatpush.bf16.msra.mxu0 %v719
    %1612 = vmatpush.bf16.msra.mxu0 %v715
    %1613 = vmatmul.bf16.gmra.mxu0 %v1498
    %v1614 = vpop.f32.mrf.mxu0
    %v1615 = vadd.f32 %v1601, %v1614
    %v1616 = vpop.f32.mrf.mxu0
    %v1617 = vadd.f32 %v1603, %v1616
    %1618 = vdwg.mxu0
    %1619 = vmatpush.bf16.msra.mxu0 %v648
    %1620 = vmatpush.bf16.msra.mxu0 %v644
    %1621 = vmatpush.bf16.msra.mxu0 %v640
    %1622 = vmatpush.bf16.msra.mxu0 %v636
    %1623 = vmatpush.bf16.msra.mxu0 %v632
    %1624 = vmatpush.bf16.msra.mxu0 %v628
    %1625 = vmatpush.bf16.msra.mxu0 %v624
    %1626 = vmatpush.bf16.msra.mxu0 %v620
    %1627 = vmatmul.bf16.gmra.mxu0 %v1495
    %v1628 = vpop.f32.mrf.mxu0
    %v1629 = vadd.f32 %v1501, %v1628
    %v1630 = vpop.f32.mrf.mxu0
    %v1631 = vadd.f32 %v1505, %v1630
    %1632 = vdwg.mxu0
    %1633 = vmatpush.bf16.msra.mxu0 %v680
    %1634 = vmatpush.bf16.msra.mxu0 %v676
    %1635 = vmatpush.bf16.msra.mxu0 %v672
    %1636 = vmatpush.bf16.msra.mxu0 %v668
    %1637 = vmatpush.bf16.msra.mxu0 %v664
    %1638 = vmatpush.bf16.msra.mxu0 %v660
    %1639 = vmatpush.bf16.msra.mxu0 %v656
    %1640 = vmatpush.bf16.msra.mxu0 %v652
    %1641 = vmatmul.bf16.gmra.mxu0 %v1496
    %v1642 = vpop.f32.mrf.mxu0
    %v1643 = vadd.f32 %v1629, %v1642
    %v1644 = vpop.f32.mrf.mxu0
    %v1645 = vadd.f32 %v1631, %v1644
    %1646 = vdwg.mxu0
    %1647 = vmatpush.bf16.msra.mxu0 %v712
    %1648 = vmatpush.bf16.msra.mxu0 %v708
    %1649 = vmatpush.bf16.msra.mxu0 %v704
    %1650 = vmatpush.bf16.msra.mxu0 %v700
    %1651 = vmatpush.bf16.msra.mxu0 %v696
    %1652 = vmatpush.bf16.msra.mxu0 %v692
    %1653 = vmatpush.bf16.msra.mxu0 %v688
    %1654 = vmatpush.bf16.msra.mxu0 %v684
    %1655 = vmatmul.bf16.gmra.mxu0 %v1497
    %v1656 = vpop.f32.mrf.mxu0
    %v1657 = vadd.f32 %v1643, %v1656
    %v1658 = vpop.f32.mrf.mxu0
    %v1659 = vadd.f32 %v1645, %v1658
    %1660 = vdwg.mxu0
    %1661 = vmatpush.bf16.msra.mxu0 %v744
    %1662 = vmatpush.bf16.msra.mxu0 %v740
    %1663 = vmatpush.bf16.msra.mxu0 %v736
    %1664 = vmatpush.bf16.msra.mxu0 %v732
    %1665 = vmatpush.bf16.msra.mxu0 %v728
    %1666 = vmatpush.bf16.msra.mxu0 %v724
    %1667 = vmatpush.bf16.msra.mxu0 %v720
    %1668 = vmatpush.bf16.msra.mxu0 %v716
    %1669 = vmatmul.bf16.gmra.mxu0 %v1498
    %v1670 = vpop.f32.mrf.mxu0
    %v1671 = vadd.f32 %v1657, %v1670
    %v1672 = vpop.f32.mrf.mxu0
    %v1673 = vadd.f32 %v1659, %v1672
    %1674 = vdwg.mxu0
    %1675 = vmatpush.bf16.msra.mxu0 %v649
    %1676 = vmatpush.bf16.msra.mxu0 %v645
    %1677 = vmatpush.bf16.msra.mxu0 %v641
    %1678 = vmatpush.bf16.msra.mxu0 %v637
    %1679 = vmatpush.bf16.msra.mxu0 %v633
    %1680 = vmatpush.bf16.msra.mxu0 %v629
    %1681 = vmatpush.bf16.msra.mxu0 %v625
    %1682 = vmatpush.bf16.msra.mxu0 %v621
    %1683 = vmatmul.bf16.gmra.mxu0 %v1495
    %v1684 = vpop.f32.mrf.mxu0
    %v1685 = vadd.f32 %v1502, %v1684
    %v1686 = vpop.f32.mrf.mxu0
    %v1687 = vadd.f32 %v1506, %v1686
    %1688 = vdwg.mxu0
    %1689 = vmatpush.bf16.msra.mxu0 %v681
    %1690 = vmatpush.bf16.msra.mxu0 %v677
    %1691 = vmatpush.bf16.msra.mxu0 %v673
    %1692 = vmatpush.bf16.msra.mxu0 %v669
    %1693 = vmatpush.bf16.msra.mxu0 %v665
    %1694 = vmatpush.bf16.msra.mxu0 %v661
    %1695 = vmatpush.bf16.msra.mxu0 %v657
    %1696 = vmatpush.bf16.msra.mxu0 %v653
    %1697 = vmatmul.bf16.gmra.mxu0 %v1496
    %v1698 = vpop.f32.mrf.mxu0
    %v1699 = vadd.f32 %v1685, %v1698
    %v1700 = vpop.f32.mrf.mxu0
    %v1701 = vadd.f32 %v1687, %v1700
    %1702 = vdwg.mxu0
    %1703 = vmatpush.bf16.msra.mxu0 %v713
    %1704 = vmatpush.bf16.msra.mxu0 %v709
    %1705 = vmatpush.bf16.msra.mxu0 %v705
    %1706 = vmatpush.bf16.msra.mxu0 %v701
    %1707 = vmatpush.bf16.msra.mxu0 %v697
    %1708 = vmatpush.bf16.msra.mxu0 %v693
    %1709 = vmatpush.bf16.msra.mxu0 %v689
    %1710 = vmatpush.bf16.msra.mxu0 %v685
    %1711 = vmatmul.bf16.gmra.mxu0 %v1497
    %v1712 = vpop.f32.mrf.mxu0
    %v1713 = vadd.f32 %v1699, %v1712
    %v1714 = vpop.f32.mrf.mxu0
    %v1715 = vadd.f32 %v1701, %v1714
    %1716 = vdwg.mxu0
    %1717 = vmatpush.bf16.msra.mxu0 %v745
    %1718 = vmatpush.bf16.msra.mxu0 %v741
    %1719 = vmatpush.bf16.msra.mxu0 %v737
    %1720 = vmatpush.bf16.msra.mxu0 %v733
    %1721 = vmatpush.bf16.msra.mxu0 %v729
    %1722 = vmatpush.bf16.msra.mxu0 %v725
    %1723 = vmatpush.bf16.msra.mxu0 %v721
    %1724 = vmatpush.bf16.msra.mxu0 %v717
    %1725 = vmatmul.bf16.gmra.mxu0 %v1498
    %v1726 = vpop.f32.mrf.mxu0
    %v1727 = vadd.f32 %v1713, %v1726
    %v1728 = vpop.f32.mrf.mxu0
    %v1729 = vadd.f32 %v1715, %v1728
    %1730 = vdwg.mxu0
    %v1731 = vmul.f32 %v1478, %v1559
    %v1732 = vmul.f32 %v1479, %v1615
    %v1733 = vmul.f32 %v1480, %v1671
    %v1734 = vmul.f32 %v1481, %v1727
    %v1735 = vmul.f32 %v1482, %v1561
    %v1736 = vmul.f32 %v1483, %v1617
    %v1737 = vmul.f32 %v1484, %v1673
    %v1738 = vmul.f32 %v1485, %v1729
    %v1739 = vadd.f32 %v1731, %v1732
    %v1740 = vadd.f32 %v1739, %v1733
    %v1741 = vadd.f32 %v1740, %v1734
    %1742 = vadd.xlane.f32.xlu0 %v1741
    %v1743 = vpop.xlane.xlu0 %1742
    %v1744 = vadd.f32 %v1735, %v1736
    %v1745 = vadd.f32 %v1744, %v1737
    %v1746 = vadd.f32 %v1745, %v1738
    %1747 = vadd.xlane.f32.xlu0 %v1746
    %v1748 = vpop.xlane.xlu0 %1747
    %v1749 = vrcp.pop %v1743
    %v1750 = vrcp.pop %v1748
    %v1751 = vmul.f32 %v1743, %v1749
    %v1752 = vmul.f32 %v1748, %v1750
    %v1753 = vsub.f32 2.0, %v1751
    %v1754 = vsub.f32 2.0, %v1752
    %v1755 = vmul.f32 %v1749, %v1753
    %v1756 = vmul.f32 %v1750, %v1754
    %v1757 = vmul.f32 %v1446, %v1755
    %v1758 = vmul.f32 %v1451, %v1756
    %s1759 = scalar_select %p1494, 1, 0
    %v1760 = vstv %s1759
    %vm1761 = vcmp.eq.s32.totalorder %v1760, 1
    %v1762 = vsel %vm1761, %v1757, 0.0
    %v1763 = vsel %vm1761, %v1758, 0.0
    %v1764 = vmul.f32 %v1762, %v1478
    %v1765 = vmul.f32 %v1762, %v1479
    %v1766 = vmul.f32 %v1762, %v1480
    %v1767 = vmul.f32 %v1762, %v1481
    %v1768 = vmul.f32 %v1763, %v1482
    %v1769 = vmul.f32 %v1763, %v1483
    %v1770 = vmul.f32 %v1763, %v1484
    %v1771 = vmul.f32 %v1763, %v1485
    %v1772 = vadd.f32 %v1410, %v1764
    %v1773 = vadd.f32 %v1411, %v1765
    %v1774 = vadd.f32 %v1412, %v1766
    %v1775 = vadd.f32 %v1413, %v1767
    %v1776 = vadd.f32 %v1414, %v1768
    %v1777 = vadd.f32 %v1415, %v1769
    %v1778 = vadd.f32 %v1416, %v1770
    %v1779 = vadd.f32 %v1417, %v1771
    %v1780 = vmul.f32 %v1762, %v1559
    %v1781 = vmul.f32 %v1762, %v1615
    %v1782 = vmul.f32 %v1762, %v1671
    %v1783 = vmul.f32 %v1762, %v1727
    %v1784 = vmul.f32 %v1763, %v1561
    %v1785 = vmul.f32 %v1763, %v1617
    %v1786 = vmul.f32 %v1763, %v1673
    %v1787 = vmul.f32 %v1763, %v1729
    %v1788 = vsub.f32 %v1426, %v1780
    %v1789 = vsub.f32 %v1427, %v1781
    %v1790 = vsub.f32 %v1428, %v1782
    %v1791 = vsub.f32 %v1429, %v1783
    %v1792 = vsub.f32 %v1430, %v1784
    %v1793 = vsub.f32 %v1431, %v1785
    %v1794 = vsub.f32 %v1432, %v1786
    %v1795 = vsub.f32 %v1433, %v1787
    %v1796 = vmul.f32 %v1788, %v1788
    %v1797 = vmul.f32 %v1789, %v1789
    %v1798 = vmul.f32 %v1790, %v1790
    %v1799 = vmul.f32 %v1791, %v1791
    %v1800 = vmul.f32 %v1792, %v1792
    %v1801 = vmul.f32 %v1793, %v1793
    %v1802 = vmul.f32 %v1794, %v1794
    %v1803 = vmul.f32 %v1795, %v1795
    %v1804 = vadd.f32 %v1796, %v1797
    %v1805 = vadd.f32 %v1804, %v1798
    %v1806 = vadd.f32 %v1805, %v1799
    %1807 = vadd.xlane.f32.xlu0 %v1806
    %v1808 = vpop.xlane.xlu0 %1807
    %v1809 = vadd.f32 %v1800, %v1801
    %v1810 = vadd.f32 %v1809, %v1802
    %v1811 = vadd.f32 %v1810, %v1803
    %1812 = vadd.xlane.f32.xlu0 %v1811
    %v1813 = vpop.xlane.xlu0 %1812
    %v1814 = vrcp.pop %v1446
    %v1815 = vrcp.pop %v1451
    %v1816 = vmul.f32 %v1446, %v1814
    %v1817 = vmul.f32 %v1451, %v1815
    %v1818 = vsub.f32 2.0, %v1816
    %v1819 = vsub.f32 2.0, %v1817
    %v1820 = vmul.f32 %v1814, %v1818
    %v1821 = vmul.f32 %v1815, %v1819
    %v1822 = vmul.f32 %v1808, %v1820
    %v1823 = vmul.f32 %v1813, %v1821
    %v1824 = vmul.f32 %v1822, %v1478
    %v1825 = vmul.f32 %v1822, %v1479
    %v1826 = vmul.f32 %v1822, %v1480
    %v1827 = vmul.f32 %v1822, %v1481
    %v1828 = vmul.f32 %v1823, %v1482
    %v1829 = vmul.f32 %v1823, %v1483
    %v1830 = vmul.f32 %v1823, %v1484
    %v1831 = vmul.f32 %v1823, %v1485
    %v1832 = vadd.f32 %v1824, %v1788
    %v1833 = vadd.f32 %v1825, %v1789
    %v1834 = vadd.f32 %v1826, %v1790
    %v1835 = vadd.f32 %v1827, %v1791
    %v1836 = vadd.f32 %v1828, %v1792
    %v1837 = vadd.f32 %v1829, %v1793
    %v1838 = vadd.f32 %v1830, %v1794
    %v1839 = vadd.f32 %v1831, %v1795
    %v1840 = vsel %vm1761, %v1832, %v1478
    %v1841 = vsel %vm1761, %v1833, %v1479
    %v1842 = vsel %vm1761, %v1834, %v1480
    %v1843 = vsel %vm1761, %v1835, %v1481
    %v1844 = vsel %vm1761, %v1836, %v1482
    %v1845 = vsel %vm1761, %v1837, %v1483
    %v1846 = vsel %vm1761, %v1838, %v1484
    %v1847 = vsel %vm1761, %v1839, %v1485
    %v1848 = vmax.f32 %v1808, %v1813
    %v1849 = vrot.slane %v1848, 4
    %v1850 = vmax.f32 %v1848, %v1849
    %v1851 = vrot.slane %v1850, 2
    %v1852 = vmax.f32 %v1850, %v1851
    %v1853 = vrot.slane %v1852, 1
    %v1854 = vmax.f32 %v1852, %v1853
    %s1855 = vtos %v1854
    %p1856 = scmp.ge.f32.partialorder %s1855, 1e-12
    %v1857 = vpack.c.bf16 %v1844, %v1840
    %v1858 = vpack.c.bf16 %v1845, %v1841
    %v1859 = vpack.c.bf16 %v1846, %v1842
    %v1860 = vpack.c.bf16 %v1847, %v1843
    %v1861 = vmul.f32 %v1840, 0.05
    %v1862 = vmul.f32 %v1841, 0.05
    %v1863 = vmul.f32 %v1842, 0.05
    %v1864 = vmul.f32 %v1843, 0.05
    %v1865 = vmul.f32 %v1844, 0.05
    %v1866 = vmul.f32 %v1845, 0.05
    %v1867 = vmul.f32 %v1846, 0.05
    %v1868 = vmul.f32 %v1847, 0.05
    %1869 = vmatpush.bf16.msra.mxu0 %v646
    %1870 = vmatpush.bf16.msra.mxu0 %v642
    %1871 = vmatpush.bf16.msra.mxu0 %v638
    %1872 = vmatpush.bf16.msra.mxu0 %v634
    %1873 = vmatpush.bf16.msra.mxu0 %v630
    %1874 = vmatpush.bf16.msra.mxu0 %v626
    %1875 = vmatpush.bf16.msra.mxu0 %v622
    %1876 = vmatpush.bf16.msra.mxu0 %v618
    %1877 = vmatmul.bf16.gmra.mxu0 %v1857
    %v1878 = vpop.f32.mrf.mxu0
    %v1879 = vadd.f32 %v1861, %v1878
    %v1880 = vpop.f32.mrf.mxu0
    %v1881 = vadd.f32 %v1865, %v1880
    %1882 = vdwg.mxu0
    %1883 = vmatpush.bf16.msra.mxu0 %v678
    %1884 = vmatpush.bf16.msra.mxu0 %v674
    %1885 = vmatpush.bf16.msra.mxu0 %v670
    %1886 = vmatpush.bf16.msra.mxu0 %v666
    %1887 = vmatpush.bf16.msra.mxu0 %v662
    %1888 = vmatpush.bf16.msra.mxu0 %v658
    %1889 = vmatpush.bf16.msra.mxu0 %v654
    %1890 = vmatpush.bf16.msra.mxu0 %v650
    %1891 = vmatmul.bf16.gmra.mxu0 %v1858
    %v1892 = vpop.f32.mrf.mxu0
    %v1893 = vadd.f32 %v1879, %v1892
    %v1894 = vpop.f32.mrf.mxu0
    %v1895 = vadd.f32 %v1881, %v1894
    %1896 = vdwg.mxu0
    %1897 = vmatpush.bf16.msra.mxu0 %v710
    %1898 = vmatpush.bf16.msra.mxu0 %v706
    %1899 = vmatpush.bf16.msra.mxu0 %v702
    %1900 = vmatpush.bf16.msra.mxu0 %v698
    %1901 = vmatpush.bf16.msra.mxu0 %v694
    %1902 = vmatpush.bf16.msra.mxu0 %v690
    %1903 = vmatpush.bf16.msra.mxu0 %v686
    %1904 = vmatpush.bf16.msra.mxu0 %v682
    %1905 = vmatmul.bf16.gmra.mxu0 %v1859
    %v1906 = vpop.f32.mrf.mxu0
    %v1907 = vadd.f32 %v1893, %v1906
    %v1908 = vpop.f32.mrf.mxu0
    %v1909 = vadd.f32 %v1895, %v1908
    %1910 = vdwg.mxu0
    %1911 = vmatpush.bf16.msra.mxu0 %v742
    %1912 = vmatpush.bf16.msra.mxu0 %v738
    %1913 = vmatpush.bf16.msra.mxu0 %v734
    %1914 = vmatpush.bf16.msra.mxu0 %v730
    %1915 = vmatpush.bf16.msra.mxu0 %v726
    %1916 = vmatpush.bf16.msra.mxu0 %v722
    %1917 = vmatpush.bf16.msra.mxu0 %v718
    %1918 = vmatpush.bf16.msra.mxu0 %v714
    %1919 = vmatmul.bf16.gmra.mxu0 %v1860
    %v1920 = vpop.f32.mrf.mxu0
    %v1921 = vadd.f32 %v1907, %v1920
    %v1922 = vpop.f32.mrf.mxu0
    %v1923 = vadd.f32 %v1909, %v1922
    %1924 = vdwg.mxu0
    %1925 = vmatpush.bf16.msra.mxu0 %v647
    %1926 = vmatpush.bf16.msra.mxu0 %v643
    %1927 = vmatpush.bf16.msra.mxu0 %v639
    %1928 = vmatpush.bf16.msra.mxu0 %v635
    %1929 = vmatpush.bf16.msra.mxu0 %v631
    %1930 = vmatpush.bf16.msra.mxu0 %v627
    %1931 = vmatpush.bf16.msra.mxu0 %v623
    %1932 = vmatpush.bf16.msra.mxu0 %v619
    %1933 = vmatmul.bf16.gmra.mxu0 %v1857
    %v1934 = vpop.f32.mrf.mxu0
    %v1935 = vadd.f32 %v1862, %v1934
    %v1936 = vpop.f32.mrf.mxu0
    %v1937 = vadd.f32 %v1866, %v1936
    %1938 = vdwg.mxu0
    %1939 = vmatpush.bf16.msra.mxu0 %v679
    %1940 = vmatpush.bf16.msra.mxu0 %v675
    %1941 = vmatpush.bf16.msra.mxu0 %v671
    %1942 = vmatpush.bf16.msra.mxu0 %v667
    %1943 = vmatpush.bf16.msra.mxu0 %v663
    %1944 = vmatpush.bf16.msra.mxu0 %v659
    %1945 = vmatpush.bf16.msra.mxu0 %v655
    %1946 = vmatpush.bf16.msra.mxu0 %v651
    %1947 = vmatmul.bf16.gmra.mxu0 %v1858
    %v1948 = vpop.f32.mrf.mxu0
    %v1949 = vadd.f32 %v1935, %v1948
    %v1950 = vpop.f32.mrf.mxu0
    %v1951 = vadd.f32 %v1937, %v1950
    %1952 = vdwg.mxu0
    %1953 = vmatpush.bf16.msra.mxu0 %v711
    %1954 = vmatpush.bf16.msra.mxu0 %v707
    %1955 = vmatpush.bf16.msra.mxu0 %v703
    %1956 = vmatpush.bf16.msra.mxu0 %v699
    %1957 = vmatpush.bf16.msra.mxu0 %v695
    %1958 = vmatpush.bf16.msra.mxu0 %v691
    %1959 = vmatpush.bf16.msra.mxu0 %v687
    %1960 = vmatpush.bf16.msra.mxu0 %v683
    %1961 = vmatmul.bf16.gmra.mxu0 %v1859
    %v1962 = vpop.f32.mrf.mxu0
    %v1963 = vadd.f32 %v1949, %v1962
    %v1964 = vpop.f32.mrf.mxu0
    %v1965 = vadd.f32 %v1951, %v1964
    %1966 = vdwg.mxu0
    %1967 = vmatpush.bf16.msra.mxu0 %v743
    %1968 = vmatpush.bf16.msra.mxu0 %v739
    %1969 = vmatpush.bf16.msra.mxu0 %v735
    %1970 = vmatpush.bf16.msra.mxu0 %v731
    %1971 = vmatpush.bf16.msra.mxu0 %v727
    %1972 = vmatpush.bf16.msra.mxu0 %v723
    %1973 = vmatpush.bf16.msra.mxu0 %v719
    %1974 = vmatpush.bf16.msra.mxu0 %v715
    %1975 = vmatmul.bf16.gmra.mxu0 %v1860
    %v1976 = vpop.f32.mrf.mxu0
    %v1977 = vadd.f32 %v1963, %v1976
    %v1978 = vpop.f32.mrf.mxu0
    %v1979 = vadd.f32 %v1965, %v1978
    %1980 = vdwg.mxu0
    %1981 = vmatpush.bf16.msra.mxu0 %v648
    %1982 = vmatpush.bf16.msra.mxu0 %v644
    %1983 = vmatpush.bf16.msra.mxu0 %v640
    %1984 = vmatpush.bf16.msra.mxu0 %v636
    %1985 = vmatpush.bf16.msra.mxu0 %v632
    %1986 = vmatpush.bf16.msra.mxu0 %v628
    %1987 = vmatpush.bf16.msra.mxu0 %v624
    %1988 = vmatpush.bf16.msra.mxu0 %v620
    %1989 = vmatmul.bf16.gmra.mxu0 %v1857
    %v1990 = vpop.f32.mrf.mxu0
    %v1991 = vadd.f32 %v1863, %v1990
    %v1992 = vpop.f32.mrf.mxu0
    %v1993 = vadd.f32 %v1867, %v1992
    %1994 = vdwg.mxu0
    %1995 = vmatpush.bf16.msra.mxu0 %v680
    %1996 = vmatpush.bf16.msra.mxu0 %v676
    %1997 = vmatpush.bf16.msra.mxu0 %v672
    %1998 = vmatpush.bf16.msra.mxu0 %v668
    %1999 = vmatpush.bf16.msra.mxu0 %v664
    %2000 = vmatpush.bf16.msra.mxu0 %v660
    %2001 = vmatpush.bf16.msra.mxu0 %v656
    %2002 = vmatpush.bf16.msra.mxu0 %v652
    %2003 = vmatmul.bf16.gmra.mxu0 %v1858
    %v2004 = vpop.f32.mrf.mxu0
    %v2005 = vadd.f32 %v1991, %v2004
    %v2006 = vpop.f32.mrf.mxu0
    %v2007 = vadd.f32 %v1993, %v2006
    %2008 = vdwg.mxu0
    %2009 = vmatpush.bf16.msra.mxu0 %v712
    %2010 = vmatpush.bf16.msra.mxu0 %v708
    %2011 = vmatpush.bf16.msra.mxu0 %v704
    %2012 = vmatpush.bf16.msra.mxu0 %v700
    %2013 = vmatpush.bf16.msra.mxu0 %v696
    %2014 = vmatpush.bf16.msra.mxu0 %v692
    %2015 = vmatpush.bf16.msra.mxu0 %v688
    %2016 = vmatpush.bf16.msra.mxu0 %v684
    %2017 = vmatmul.bf16.gmra.mxu0 %v1859
    %v2018 = vpop.f32.mrf.mxu0
    %v2019 = vadd.f32 %v2005, %v2018
    %v2020 = vpop.f32.mrf.mxu0
    %v2021 = vadd.f32 %v2007, %v2020
    %2022 = vdwg.mxu0
    %2023 = vmatpush.bf16.msra.mxu0 %v744
    %2024 = vmatpush.bf16.msra.mxu0 %v740
    %2025 = vmatpush.bf16.msra.mxu0 %v736
    %2026 = vmatpush.bf16.msra.mxu0 %v732
    %2027 = vmatpush.bf16.msra.mxu0 %v728
    %2028 = vmatpush.bf16.msra.mxu0 %v724
    %2029 = vmatpush.bf16.msra.mxu0 %v720
    %2030 = vmatpush.bf16.msra.mxu0 %v716
    %2031 = vmatmul.bf16.gmra.mxu0 %v1860
    %v2032 = vpop.f32.mrf.mxu0
    %v2033 = vadd.f32 %v2019, %v2032
    %v2034 = vpop.f32.mrf.mxu0
    %v2035 = vadd.f32 %v2021, %v2034
    %2036 = vdwg.mxu0
    %2037 = vmatpush.bf16.msra.mxu0 %v649
    %2038 = vmatpush.bf16.msra.mxu0 %v645
    %2039 = vmatpush.bf16.msra.mxu0 %v641
    %2040 = vmatpush.bf16.msra.mxu0 %v637
    %2041 = vmatpush.bf16.msra.mxu0 %v633
    %2042 = vmatpush.bf16.msra.mxu0 %v629
    %2043 = vmatpush.bf16.msra.mxu0 %v625
    %2044 = vmatpush.bf16.msra.mxu0 %v621
    %2045 = vmatmul.bf16.gmra.mxu0 %v1857
    %v2046 = vpop.f32.mrf.mxu0
    %v2047 = vadd.f32 %v1864, %v2046
    %v2048 = vpop.f32.mrf.mxu0
    %v2049 = vadd.f32 %v1868, %v2048
    %2050 = vdwg.mxu0
    %2051 = vmatpush.bf16.msra.mxu0 %v681
    %2052 = vmatpush.bf16.msra.mxu0 %v677
    %2053 = vmatpush.bf16.msra.mxu0 %v673
    %2054 = vmatpush.bf16.msra.mxu0 %v669
    %2055 = vmatpush.bf16.msra.mxu0 %v665
    %2056 = vmatpush.bf16.msra.mxu0 %v661
    %2057 = vmatpush.bf16.msra.mxu0 %v657
    %2058 = vmatpush.bf16.msra.mxu0 %v653
    %2059 = vmatmul.bf16.gmra.mxu0 %v1858
    %v2060 = vpop.f32.mrf.mxu0
    %v2061 = vadd.f32 %v2047, %v2060
    %v2062 = vpop.f32.mrf.mxu0
    %v2063 = vadd.f32 %v2049, %v2062
    %2064 = vdwg.mxu0
    %2065 = vmatpush.bf16.msra.mxu0 %v713
    %2066 = vmatpush.bf16.msra.mxu0 %v709
    %2067 = vmatpush.bf16.msra.mxu0 %v705
    %2068 = vmatpush.bf16.msra.mxu0 %v701
    %2069 = vmatpush.bf16.msra.mxu0 %v697
    %2070 = vmatpush.bf16.msra.mxu0 %v693
    %2071 = vmatpush.bf16.msra.mxu0 %v689
    %2072 = vmatpush.bf16.msra.mxu0 %v685
    %2073 = vmatmul.bf16.gmra.mxu0 %v1859
    %v2074 = vpop.f32.mrf.mxu0
    %v2075 = vadd.f32 %v2061, %v2074
    %v2076 = vpop.f32.mrf.mxu0
    %v2077 = vadd.f32 %v2063, %v2076
    %2078 = vdwg.mxu0
    %2079 = vmatpush.bf16.msra.mxu0 %v745
    %2080 = vmatpush.bf16.msra.mxu0 %v741
    %2081 = vmatpush.bf16.msra.mxu0 %v737
    %2082 = vmatpush.bf16.msra.mxu0 %v733
    %2083 = vmatpush.bf16.msra.mxu0 %v729
    %2084 = vmatpush.bf16.msra.mxu0 %v725
    %2085 = vmatpush.bf16.msra.mxu0 %v721
    %2086 = vmatpush.bf16.msra.mxu0 %v717
    %2087 = vmatmul.bf16.gmra.mxu0 %v1860
    %v2088 = vpop.f32.mrf.mxu0
    %v2089 = vadd.f32 %v2075, %v2088
    %v2090 = vpop.f32.mrf.mxu0
    %v2091 = vadd.f32 %v2077, %v2090
    %2092 = vdwg.mxu0
    %v2093 = vmul.f32 %v1840, %v1921
    %v2094 = vmul.f32 %v1841, %v1977
    %v2095 = vmul.f32 %v1842, %v2033
    %v2096 = vmul.f32 %v1843, %v2089
    %v2097 = vmul.f32 %v1844, %v1923
    %v2098 = vmul.f32 %v1845, %v1979
    %v2099 = vmul.f32 %v1846, %v2035
    %v2100 = vmul.f32 %v1847, %v2091
    %v2101 = vadd.f32 %v2093, %v2094
    %v2102 = vadd.f32 %v2101, %v2095
    %v2103 = vadd.f32 %v2102, %v2096
    %2104 = vadd.xlane.f32.xlu0 %v2103
    %v2105 = vpop.xlane.xlu0 %2104
    %v2106 = vadd.f32 %v2097, %v2098
    %v2107 = vadd.f32 %v2106, %v2099
    %v2108 = vadd.f32 %v2107, %v2100
    %2109 = vadd.xlane.f32.xlu0 %v2108
    %v2110 = vpop.xlane.xlu0 %2109
    %v2111 = vrcp.pop %v2105
    %v2112 = vrcp.pop %v2110
    %v2113 = vmul.f32 %v2105, %v2111
    %v2114 = vmul.f32 %v2110, %v2112
    %v2115 = vsub.f32 2.0, %v2113
    %v2116 = vsub.f32 2.0, %v2114
    %v2117 = vmul.f32 %v2111, %v2115
    %v2118 = vmul.f32 %v2112, %v2116
    %v2119 = vmul.f32 %v1808, %v2117
    %v2120 = vmul.f32 %v1813, %v2118
    %s2121 = scalar_select %p1856, 1, 0
    %v2122 = vstv %s2121
    %vm2123 = vcmp.eq.s32.totalorder %v2122, 1
    %v2124 = vsel %vm2123, %v2119, 0.0
    %v2125 = vsel %vm2123, %v2120, 0.0
    %v2126 = vmul.f32 %v2124, %v1840
    %v2127 = vmul.f32 %v2124, %v1841
    %v2128 = vmul.f32 %v2124, %v1842
    %v2129 = vmul.f32 %v2124, %v1843
    %v2130 = vmul.f32 %v2125, %v1844
    %v2131 = vmul.f32 %v2125, %v1845
    %v2132 = vmul.f32 %v2125, %v1846
    %v2133 = vmul.f32 %v2125, %v1847
    %v2134 = vadd.f32 %v1772, %v2126
    %v2135 = vadd.f32 %v1773, %v2127
    %v2136 = vadd.f32 %v1774, %v2128
    %v2137 = vadd.f32 %v1775, %v2129
    %v2138 = vadd.f32 %v1776, %v2130
    %v2139 = vadd.f32 %v1777, %v2131
    %v2140 = vadd.f32 %v1778, %v2132
    %v2141 = vadd.f32 %v1779, %v2133
    %v2142 = vmul.f32 %v2124, %v1921
    %v2143 = vmul.f32 %v2124, %v1977
    %v2144 = vmul.f32 %v2124, %v2033
    %v2145 = vmul.f32 %v2124, %v2089
    %v2146 = vmul.f32 %v2125, %v1923
    %v2147 = vmul.f32 %v2125, %v1979
    %v2148 = vmul.f32 %v2125, %v2035
    %v2149 = vmul.f32 %v2125, %v2091
    %v2150 = vsub.f32 %v1788, %v2142
    %v2151 = vsub.f32 %v1789, %v2143
    %v2152 = vsub.f32 %v1790, %v2144
    %v2153 = vsub.f32 %v1791, %v2145
    %v2154 = vsub.f32 %v1792, %v2146
    %v2155 = vsub.f32 %v1793, %v2147
    %v2156 = vsub.f32 %v1794, %v2148
    %v2157 = vsub.f32 %v1795, %v2149
    %v2158 = vmul.f32 %v2150, %v2150
    %v2159 = vmul.f32 %v2151, %v2151
    %v2160 = vmul.f32 %v2152, %v2152
    %v2161 = vmul.f32 %v2153, %v2153
    %v2162 = vmul.f32 %v2154, %v2154
    %v2163 = vmul.f32 %v2155, %v2155
    %v2164 = vmul.f32 %v2156, %v2156
    %v2165 = vmul.f32 %v2157, %v2157
    %v2166 = vadd.f32 %v2158, %v2159
    %v2167 = vadd.f32 %v2166, %v2160
    %v2168 = vadd.f32 %v2167, %v2161
    %2169 = vadd.xlane.f32.xlu0 %v2168
    %v2170 = vpop.xlane.xlu0 %2169
    %v2171 = vadd.f32 %v2162, %v2163
    %v2172 = vadd.f32 %v2171, %v2164
    %v2173 = vadd.f32 %v2172, %v2165
    %2174 = vadd.xlane.f32.xlu0 %v2173
    %v2175 = vpop.xlane.xlu0 %2174
    %v2176 = vrcp.pop %v1808
    %v2177 = vrcp.pop %v1813
    %v2178 = vmul.f32 %v1808, %v2176
    %v2179 = vmul.f32 %v1813, %v2177
    %v2180 = vsub.f32 2.0, %v2178
    %v2181 = vsub.f32 2.0, %v2179
    %v2182 = vmul.f32 %v2176, %v2180
    %v2183 = vmul.f32 %v2177, %v2181
    %v2184 = vmul.f32 %v2170, %v2182
    %v2185 = vmul.f32 %v2175, %v2183
    %v2186 = vmul.f32 %v2184, %v1840
    %v2187 = vmul.f32 %v2184, %v1841
    %v2188 = vmul.f32 %v2184, %v1842
    %v2189 = vmul.f32 %v2184, %v1843
    %v2190 = vmul.f32 %v2185, %v1844
    %v2191 = vmul.f32 %v2185, %v1845
    %v2192 = vmul.f32 %v2185, %v1846
    %v2193 = vmul.f32 %v2185, %v1847
    %v2194 = vadd.f32 %v2186, %v2150
    %v2195 = vadd.f32 %v2187, %v2151
    %v2196 = vadd.f32 %v2188, %v2152
    %v2197 = vadd.f32 %v2189, %v2153
    %v2198 = vadd.f32 %v2190, %v2154
    %v2199 = vadd.f32 %v2191, %v2155
    %v2200 = vadd.f32 %v2192, %v2156
    %v2201 = vadd.f32 %v2193, %v2157
    %v2202 = vsel %vm2123, %v2194, %v1840
    %v2203 = vsel %vm2123, %v2195, %v1841
    %v2204 = vsel %vm2123, %v2196, %v1842
    %v2205 = vsel %vm2123, %v2197, %v1843
    %v2206 = vsel %vm2123, %v2198, %v1844
    %v2207 = vsel %vm2123, %v2199, %v1845
    %v2208 = vsel %vm2123, %v2200, %v1846
    %v2209 = vsel %vm2123, %v2201, %v1847
    %v2210 = vmax.f32 %v2170, %v2175
    %v2211 = vrot.slane %v2210, 4
    %v2212 = vmax.f32 %v2210, %v2211
    %v2213 = vrot.slane %v2212, 2
    %v2214 = vmax.f32 %v2212, %v2213
    %v2215 = vrot.slane %v2214, 1
    %v2216 = vmax.f32 %v2214, %v2215
    %s2217 = vtos %v2216
    %p2218 = scmp.ge.f32.partialorder %s2217, 1e-12
    %v2219 = vpack.c.bf16 %v2206, %v2202
    %v2220 = vpack.c.bf16 %v2207, %v2203
    %v2221 = vpack.c.bf16 %v2208, %v2204
    %v2222 = vpack.c.bf16 %v2209, %v2205
    %v2223 = vmul.f32 %v2202, 0.05
    %v2224 = vmul.f32 %v2203, 0.05
    %v2225 = vmul.f32 %v2204, 0.05
    %v2226 = vmul.f32 %v2205, 0.05
    %v2227 = vmul.f32 %v2206, 0.05
    %v2228 = vmul.f32 %v2207, 0.05
    %v2229 = vmul.f32 %v2208, 0.05
    %v2230 = vmul.f32 %v2209, 0.05
    %2231 = vmatpush.bf16.msra.mxu0 %v646
    %2232 = vmatpush.bf16.msra.mxu0 %v642
    %2233 = vmatpush.bf16.msra.mxu0 %v638
    %2234 = vmatpush.bf16.msra.mxu0 %v634
    %2235 = vmatpush.bf16.msra.mxu0 %v630
    %2236 = vmatpush.bf16.msra.mxu0 %v626
    %2237 = vmatpush.bf16.msra.mxu0 %v622
    %2238 = vmatpush.bf16.msra.mxu0 %v618
    %2239 = vmatmul.bf16.gmra.mxu0 %v2219
    %v2240 = vpop.f32.mrf.mxu0
    %v2241 = vadd.f32 %v2223, %v2240
    %v2242 = vpop.f32.mrf.mxu0
    %v2243 = vadd.f32 %v2227, %v2242
    %2244 = vdwg.mxu0
    %2245 = vmatpush.bf16.msra.mxu0 %v678
    %2246 = vmatpush.bf16.msra.mxu0 %v674
    %2247 = vmatpush.bf16.msra.mxu0 %v670
    %2248 = vmatpush.bf16.msra.mxu0 %v666
    %2249 = vmatpush.bf16.msra.mxu0 %v662
    %2250 = vmatpush.bf16.msra.mxu0 %v658
    %2251 = vmatpush.bf16.msra.mxu0 %v654
    %2252 = vmatpush.bf16.msra.mxu0 %v650
    %2253 = vmatmul.bf16.gmra.mxu0 %v2220
    %v2254 = vpop.f32.mrf.mxu0
    %v2255 = vadd.f32 %v2241, %v2254
    %v2256 = vpop.f32.mrf.mxu0
    %v2257 = vadd.f32 %v2243, %v2256
    %2258 = vdwg.mxu0
    %2259 = vmatpush.bf16.msra.mxu0 %v710
    %2260 = vmatpush.bf16.msra.mxu0 %v706
    %2261 = vmatpush.bf16.msra.mxu0 %v702
    %2262 = vmatpush.bf16.msra.mxu0 %v698
    %2263 = vmatpush.bf16.msra.mxu0 %v694
    %2264 = vmatpush.bf16.msra.mxu0 %v690
    %2265 = vmatpush.bf16.msra.mxu0 %v686
    %2266 = vmatpush.bf16.msra.mxu0 %v682
    %2267 = vmatmul.bf16.gmra.mxu0 %v2221
    %v2268 = vpop.f32.mrf.mxu0
    %v2269 = vadd.f32 %v2255, %v2268
    %v2270 = vpop.f32.mrf.mxu0
    %v2271 = vadd.f32 %v2257, %v2270
    %2272 = vdwg.mxu0
    %2273 = vmatpush.bf16.msra.mxu0 %v742
    %2274 = vmatpush.bf16.msra.mxu0 %v738
    %2275 = vmatpush.bf16.msra.mxu0 %v734
    %2276 = vmatpush.bf16.msra.mxu0 %v730
    %2277 = vmatpush.bf16.msra.mxu0 %v726
    %2278 = vmatpush.bf16.msra.mxu0 %v722
    %2279 = vmatpush.bf16.msra.mxu0 %v718
    %2280 = vmatpush.bf16.msra.mxu0 %v714
    %2281 = vmatmul.bf16.gmra.mxu0 %v2222
    %v2282 = vpop.f32.mrf.mxu0
    %v2283 = vadd.f32 %v2269, %v2282
    %v2284 = vpop.f32.mrf.mxu0
    %v2285 = vadd.f32 %v2271, %v2284
    %2286 = vdwg.mxu0
    %2287 = vmatpush.bf16.msra.mxu0 %v647
    %2288 = vmatpush.bf16.msra.mxu0 %v643
    %2289 = vmatpush.bf16.msra.mxu0 %v639
    %2290 = vmatpush.bf16.msra.mxu0 %v635
    %2291 = vmatpush.bf16.msra.mxu0 %v631
    %2292 = vmatpush.bf16.msra.mxu0 %v627
    %2293 = vmatpush.bf16.msra.mxu0 %v623
    %2294 = vmatpush.bf16.msra.mxu0 %v619
    %2295 = vmatmul.bf16.gmra.mxu0 %v2219
    %v2296 = vpop.f32.mrf.mxu0
    %v2297 = vadd.f32 %v2224, %v2296
    %v2298 = vpop.f32.mrf.mxu0
    %v2299 = vadd.f32 %v2228, %v2298
    %2300 = vdwg.mxu0
    %2301 = vmatpush.bf16.msra.mxu0 %v679
    %2302 = vmatpush.bf16.msra.mxu0 %v675
    %2303 = vmatpush.bf16.msra.mxu0 %v671
    %2304 = vmatpush.bf16.msra.mxu0 %v667
    %2305 = vmatpush.bf16.msra.mxu0 %v663
    %2306 = vmatpush.bf16.msra.mxu0 %v659
    %2307 = vmatpush.bf16.msra.mxu0 %v655
    %2308 = vmatpush.bf16.msra.mxu0 %v651
    %2309 = vmatmul.bf16.gmra.mxu0 %v2220
    %v2310 = vpop.f32.mrf.mxu0
    %v2311 = vadd.f32 %v2297, %v2310
    %v2312 = vpop.f32.mrf.mxu0
    %v2313 = vadd.f32 %v2299, %v2312
    %2314 = vdwg.mxu0
    %2315 = vmatpush.bf16.msra.mxu0 %v711
    %2316 = vmatpush.bf16.msra.mxu0 %v707
    %2317 = vmatpush.bf16.msra.mxu0 %v703
    %2318 = vmatpush.bf16.msra.mxu0 %v699
    %2319 = vmatpush.bf16.msra.mxu0 %v695
    %2320 = vmatpush.bf16.msra.mxu0 %v691
    %2321 = vmatpush.bf16.msra.mxu0 %v687
    %2322 = vmatpush.bf16.msra.mxu0 %v683
    %2323 = vmatmul.bf16.gmra.mxu0 %v2221
    %v2324 = vpop.f32.mrf.mxu0
    %v2325 = vadd.f32 %v2311, %v2324
    %v2326 = vpop.f32.mrf.mxu0
    %v2327 = vadd.f32 %v2313, %v2326
    %2328 = vdwg.mxu0
    %2329 = vmatpush.bf16.msra.mxu0 %v743
    %2330 = vmatpush.bf16.msra.mxu0 %v739
    %2331 = vmatpush.bf16.msra.mxu0 %v735
    %2332 = vmatpush.bf16.msra.mxu0 %v731
    %2333 = vmatpush.bf16.msra.mxu0 %v727
    %2334 = vmatpush.bf16.msra.mxu0 %v723
    %2335 = vmatpush.bf16.msra.mxu0 %v719
    %2336 = vmatpush.bf16.msra.mxu0 %v715
    %2337 = vmatmul.bf16.gmra.mxu0 %v2222
    %v2338 = vpop.f32.mrf.mxu0
    %v2339 = vadd.f32 %v2325, %v2338
    %v2340 = vpop.f32.mrf.mxu0
    %v2341 = vadd.f32 %v2327, %v2340
    %2342 = vdwg.mxu0
    %2343 = vmatpush.bf16.msra.mxu0 %v648
    %2344 = vmatpush.bf16.msra.mxu0 %v644
    %2345 = vmatpush.bf16.msra.mxu0 %v640
    %2346 = vmatpush.bf16.msra.mxu0 %v636
    %2347 = vmatpush.bf16.msra.mxu0 %v632
    %2348 = vmatpush.bf16.msra.mxu0 %v628
    %2349 = vmatpush.bf16.msra.mxu0 %v624
    %2350 = vmatpush.bf16.msra.mxu0 %v620
    %2351 = vmatmul.bf16.gmra.mxu0 %v2219
    %v2352 = vpop.f32.mrf.mxu0
    %v2353 = vadd.f32 %v2225, %v2352
    %v2354 = vpop.f32.mrf.mxu0
    %v2355 = vadd.f32 %v2229, %v2354
    %2356 = vdwg.mxu0
    %2357 = vmatpush.bf16.msra.mxu0 %v680
    %2358 = vmatpush.bf16.msra.mxu0 %v676
    %2359 = vmatpush.bf16.msra.mxu0 %v672
    %2360 = vmatpush.bf16.msra.mxu0 %v668
    %2361 = vmatpush.bf16.msra.mxu0 %v664
    %2362 = vmatpush.bf16.msra.mxu0 %v660
    %2363 = vmatpush.bf16.msra.mxu0 %v656
    %2364 = vmatpush.bf16.msra.mxu0 %v652
    %2365 = vmatmul.bf16.gmra.mxu0 %v2220
    %v2366 = vpop.f32.mrf.mxu0
    %v2367 = vadd.f32 %v2353, %v2366
    %v2368 = vpop.f32.mrf.mxu0
    %v2369 = vadd.f32 %v2355, %v2368
    %2370 = vdwg.mxu0
    %2371 = vmatpush.bf16.msra.mxu0 %v712
    %2372 = vmatpush.bf16.msra.mxu0 %v708
    %2373 = vmatpush.bf16.msra.mxu0 %v704
    %2374 = vmatpush.bf16.msra.mxu0 %v700
    %2375 = vmatpush.bf16.msra.mxu0 %v696
    %2376 = vmatpush.bf16.msra.mxu0 %v692
    %2377 = vmatpush.bf16.msra.mxu0 %v688
    %2378 = vmatpush.bf16.msra.mxu0 %v684
    %2379 = vmatmul.bf16.gmra.mxu0 %v2221
    %v2380 = vpop.f32.mrf.mxu0
    %v2381 = vadd.f32 %v2367, %v2380
    %v2382 = vpop.f32.mrf.mxu0
    %v2383 = vadd.f32 %v2369, %v2382
    %2384 = vdwg.mxu0
    %2385 = vmatpush.bf16.msra.mxu0 %v744
    %2386 = vmatpush.bf16.msra.mxu0 %v740
    %2387 = vmatpush.bf16.msra.mxu0 %v736
    %2388 = vmatpush.bf16.msra.mxu0 %v732
    %2389 = vmatpush.bf16.msra.mxu0 %v728
    %2390 = vmatpush.bf16.msra.mxu0 %v724
    %2391 = vmatpush.bf16.msra.mxu0 %v720
    %2392 = vmatpush.bf16.msra.mxu0 %v716
    %2393 = vmatmul.bf16.gmra.mxu0 %v2222
    %v2394 = vpop.f32.mrf.mxu0
    %v2395 = vadd.f32 %v2381, %v2394
    %v2396 = vpop.f32.mrf.mxu0
    %v2397 = vadd.f32 %v2383, %v2396
    %2398 = vdwg.mxu0
    %2399 = vmatpush.bf16.msra.mxu0 %v649
    %2400 = vmatpush.bf16.msra.mxu0 %v645
    %2401 = vmatpush.bf16.msra.mxu0 %v641
    %2402 = vmatpush.bf16.msra.mxu0 %v637
    %2403 = vmatpush.bf16.msra.mxu0 %v633
    %2404 = vmatpush.bf16.msra.mxu0 %v629
    %2405 = vmatpush.bf16.msra.mxu0 %v625
    %2406 = vmatpush.bf16.msra.mxu0 %v621
    %2407 = vmatmul.bf16.gmra.mxu0 %v2219
    %v2408 = vpop.f32.mrf.mxu0
    %v2409 = vadd.f32 %v2226, %v2408
    %v2410 = vpop.f32.mrf.mxu0
    %v2411 = vadd.f32 %v2230, %v2410
    %2412 = vdwg.mxu0
    %2413 = vmatpush.bf16.msra.mxu0 %v681
    %2414 = vmatpush.bf16.msra.mxu0 %v677
    %2415 = vmatpush.bf16.msra.mxu0 %v673
    %2416 = vmatpush.bf16.msra.mxu0 %v669
    %2417 = vmatpush.bf16.msra.mxu0 %v665
    %2418 = vmatpush.bf16.msra.mxu0 %v661
    %2419 = vmatpush.bf16.msra.mxu0 %v657
    %2420 = vmatpush.bf16.msra.mxu0 %v653
    %2421 = vmatmul.bf16.gmra.mxu0 %v2220
    %v2422 = vpop.f32.mrf.mxu0
    %v2423 = vadd.f32 %v2409, %v2422
    %v2424 = vpop.f32.mrf.mxu0
    %v2425 = vadd.f32 %v2411, %v2424
    %2426 = vdwg.mxu0
    %2427 = vmatpush.bf16.msra.mxu0 %v713
    %2428 = vmatpush.bf16.msra.mxu0 %v709
    %2429 = vmatpush.bf16.msra.mxu0 %v705
    %2430 = vmatpush.bf16.msra.mxu0 %v701
    %2431 = vmatpush.bf16.msra.mxu0 %v697
    %2432 = vmatpush.bf16.msra.mxu0 %v693
    %2433 = vmatpush.bf16.msra.mxu0 %v689
    %2434 = vmatpush.bf16.msra.mxu0 %v685
    %2435 = vmatmul.bf16.gmra.mxu0 %v2221
    %v2436 = vpop.f32.mrf.mxu0
    %v2437 = vadd.f32 %v2423, %v2436
    %v2438 = vpop.f32.mrf.mxu0
    %v2439 = vadd.f32 %v2425, %v2438
    %2440 = vdwg.mxu0
    %2441 = vmatpush.bf16.msra.mxu0 %v745
    %2442 = vmatpush.bf16.msra.mxu0 %v741
    %2443 = vmatpush.bf16.msra.mxu0 %v737
    %2444 = vmatpush.bf16.msra.mxu0 %v733
    %2445 = vmatpush.bf16.msra.mxu0 %v729
    %2446 = vmatpush.bf16.msra.mxu0 %v725
    %2447 = vmatpush.bf16.msra.mxu0 %v721
    %2448 = vmatpush.bf16.msra.mxu0 %v717
    %2449 = vmatmul.bf16.gmra.mxu0 %v2222
    %v2450 = vpop.f32.mrf.mxu0
    %v2451 = vadd.f32 %v2437, %v2450
    %v2452 = vpop.f32.mrf.mxu0
    %v2453 = vadd.f32 %v2439, %v2452
    %2454 = vdwg.mxu0
    %v2455 = vmul.f32 %v2202, %v2283
    %v2456 = vmul.f32 %v2203, %v2339
    %v2457 = vmul.f32 %v2204, %v2395
    %v2458 = vmul.f32 %v2205, %v2451
    %v2459 = vmul.f32 %v2206, %v2285
    %v2460 = vmul.f32 %v2207, %v2341
    %v2461 = vmul.f32 %v2208, %v2397
    %v2462 = vmul.f32 %v2209, %v2453
    %v2463 = vadd.f32 %v2455, %v2456
    %v2464 = vadd.f32 %v2463, %v2457
    %v2465 = vadd.f32 %v2464, %v2458
    %2466 = vadd.xlane.f32.xlu0 %v2465
    %v2467 = vpop.xlane.xlu0 %2466
    %v2468 = vadd.f32 %v2459, %v2460
    %v2469 = vadd.f32 %v2468, %v2461
    %v2470 = vadd.f32 %v2469, %v2462
    %2471 = vadd.xlane.f32.xlu0 %v2470
    %v2472 = vpop.xlane.xlu0 %2471
    %v2473 = vrcp.pop %v2467
    %v2474 = vrcp.pop %v2472
    %v2475 = vmul.f32 %v2467, %v2473
    %v2476 = vmul.f32 %v2472, %v2474
    %v2477 = vsub.f32 2.0, %v2475
    %v2478 = vsub.f32 2.0, %v2476
    %v2479 = vmul.f32 %v2473, %v2477
    %v2480 = vmul.f32 %v2474, %v2478
    %v2481 = vmul.f32 %v2170, %v2479
    %v2482 = vmul.f32 %v2175, %v2480
    %s2483 = scalar_select %p2218, 1, 0
    %v2484 = vstv %s2483
    %vm2485 = vcmp.eq.s32.totalorder %v2484, 1
    %v2486 = vsel %vm2485, %v2481, 0.0
    %v2487 = vsel %vm2485, %v2482, 0.0
    %v2488 = vmul.f32 %v2486, %v2202
    %v2489 = vmul.f32 %v2486, %v2203
    %v2490 = vmul.f32 %v2486, %v2204
    %v2491 = vmul.f32 %v2486, %v2205
    %v2492 = vmul.f32 %v2487, %v2206
    %v2493 = vmul.f32 %v2487, %v2207
    %v2494 = vmul.f32 %v2487, %v2208
    %v2495 = vmul.f32 %v2487, %v2209
    %v2496 = vadd.f32 %v2134, %v2488
    %v2497 = vadd.f32 %v2135, %v2489
    %v2498 = vadd.f32 %v2136, %v2490
    %v2499 = vadd.f32 %v2137, %v2491
    %v2500 = vadd.f32 %v2138, %v2492
    %v2501 = vadd.f32 %v2139, %v2493
    %v2502 = vadd.f32 %v2140, %v2494
    %v2503 = vadd.f32 %v2141, %v2495
    %v2504 = vmul.f32 %v2486, %v2283
    %v2505 = vmul.f32 %v2486, %v2339
    %v2506 = vmul.f32 %v2486, %v2395
    %v2507 = vmul.f32 %v2486, %v2451
    %v2508 = vmul.f32 %v2487, %v2285
    %v2509 = vmul.f32 %v2487, %v2341
    %v2510 = vmul.f32 %v2487, %v2397
    %v2511 = vmul.f32 %v2487, %v2453
    %v2512 = vsub.f32 %v2150, %v2504
    %v2513 = vsub.f32 %v2151, %v2505
    %v2514 = vsub.f32 %v2152, %v2506
    %v2515 = vsub.f32 %v2153, %v2507
    %v2516 = vsub.f32 %v2154, %v2508
    %v2517 = vsub.f32 %v2155, %v2509
    %v2518 = vsub.f32 %v2156, %v2510
    %v2519 = vsub.f32 %v2157, %v2511
    %v2520 = vmul.f32 %v2512, %v2512
    %v2521 = vmul.f32 %v2513, %v2513
    %v2522 = vmul.f32 %v2514, %v2514
    %v2523 = vmul.f32 %v2515, %v2515
    %v2524 = vmul.f32 %v2516, %v2516
    %v2525 = vmul.f32 %v2517, %v2517
    %v2526 = vmul.f32 %v2518, %v2518
    %v2527 = vmul.f32 %v2519, %v2519
    %v2528 = vadd.f32 %v2520, %v2521
    %v2529 = vadd.f32 %v2528, %v2522
    %v2530 = vadd.f32 %v2529, %v2523
    %2531 = vadd.xlane.f32.xlu0 %v2530
    %v2532 = vpop.xlane.xlu0 %2531
    %v2533 = vadd.f32 %v2524, %v2525
    %v2534 = vadd.f32 %v2533, %v2526
    %v2535 = vadd.f32 %v2534, %v2527
    %2536 = vadd.xlane.f32.xlu0 %v2535
    %v2537 = vpop.xlane.xlu0 %2536
    %v2538 = vrcp.pop %v2170
    %v2539 = vrcp.pop %v2175
    %v2540 = vmul.f32 %v2170, %v2538
    %v2541 = vmul.f32 %v2175, %v2539
    %v2542 = vsub.f32 2.0, %v2540
    %v2543 = vsub.f32 2.0, %v2541
    %v2544 = vmul.f32 %v2538, %v2542
    %v2545 = vmul.f32 %v2539, %v2543
    %v2546 = vmul.f32 %v2532, %v2544
    %v2547 = vmul.f32 %v2537, %v2545
    %v2548 = vmul.f32 %v2546, %v2202
    %v2549 = vmul.f32 %v2546, %v2203
    %v2550 = vmul.f32 %v2546, %v2204
    %v2551 = vmul.f32 %v2546, %v2205
    %v2552 = vmul.f32 %v2547, %v2206
    %v2553 = vmul.f32 %v2547, %v2207
    %v2554 = vmul.f32 %v2547, %v2208
    %v2555 = vmul.f32 %v2547, %v2209
    %v2556 = vadd.f32 %v2548, %v2512
    %v2557 = vadd.f32 %v2549, %v2513
    %v2558 = vadd.f32 %v2550, %v2514
    %v2559 = vadd.f32 %v2551, %v2515
    %v2560 = vadd.f32 %v2552, %v2516
    %v2561 = vadd.f32 %v2553, %v2517
    %v2562 = vadd.f32 %v2554, %v2518
    %v2563 = vadd.f32 %v2555, %v2519
    %v2564 = vsel %vm2485, %v2556, %v2202
    %v2565 = vsel %vm2485, %v2557, %v2203
    %v2566 = vsel %vm2485, %v2558, %v2204
    %v2567 = vsel %vm2485, %v2559, %v2205
    %v2568 = vsel %vm2485, %v2560, %v2206
    %v2569 = vsel %vm2485, %v2561, %v2207
    %v2570 = vsel %vm2485, %v2562, %v2208
    %v2571 = vsel %vm2485, %v2563, %v2209
    %v2572 = vmax.f32 %v2532, %v2537
    %v2573 = vrot.slane %v2572, 4
    %v2574 = vmax.f32 %v2572, %v2573
    %v2575 = vrot.slane %v2574, 2
    %v2576 = vmax.f32 %v2574, %v2575
    %v2577 = vrot.slane %v2576, 1
    %v2578 = vmax.f32 %v2576, %v2577
    %s2579 = vtos %v2578
    %p2580 = scmp.ge.f32.partialorder %s2579, 1e-12
    %v2581 = vpack.c.bf16 %v2568, %v2564
    %v2582 = vpack.c.bf16 %v2569, %v2565
    %v2583 = vpack.c.bf16 %v2570, %v2566
    %v2584 = vpack.c.bf16 %v2571, %v2567
    %v2585 = vmul.f32 %v2564, 0.05
    %v2586 = vmul.f32 %v2565, 0.05
    %v2587 = vmul.f32 %v2566, 0.05
    %v2588 = vmul.f32 %v2567, 0.05
    %v2589 = vmul.f32 %v2568, 0.05
    %v2590 = vmul.f32 %v2569, 0.05
    %v2591 = vmul.f32 %v2570, 0.05
    %v2592 = vmul.f32 %v2571, 0.05
    %2593 = vmatpush.bf16.msra.mxu0 %v646
    %2594 = vmatpush.bf16.msra.mxu0 %v642
    %2595 = vmatpush.bf16.msra.mxu0 %v638
    %2596 = vmatpush.bf16.msra.mxu0 %v634
    %2597 = vmatpush.bf16.msra.mxu0 %v630
    %2598 = vmatpush.bf16.msra.mxu0 %v626
    %2599 = vmatpush.bf16.msra.mxu0 %v622
    %2600 = vmatpush.bf16.msra.mxu0 %v618
    %2601 = vmatmul.bf16.gmra.mxu0 %v2581
    %v2602 = vpop.f32.mrf.mxu0
    %v2603 = vadd.f32 %v2585, %v2602
    %v2604 = vpop.f32.mrf.mxu0
    %v2605 = vadd.f32 %v2589, %v2604
    %2606 = vdwg.mxu0
    %2607 = vmatpush.bf16.msra.mxu0 %v678
    %2608 = vmatpush.bf16.msra.mxu0 %v674
    %2609 = vmatpush.bf16.msra.mxu0 %v670
    %2610 = vmatpush.bf16.msra.mxu0 %v666
    %2611 = vmatpush.bf16.msra.mxu0 %v662
    %2612 = vmatpush.bf16.msra.mxu0 %v658
    %2613 = vmatpush.bf16.msra.mxu0 %v654
    %2614 = vmatpush.bf16.msra.mxu0 %v650
    %2615 = vmatmul.bf16.gmra.mxu0 %v2582
    %v2616 = vpop.f32.mrf.mxu0
    %v2617 = vadd.f32 %v2603, %v2616
    %v2618 = vpop.f32.mrf.mxu0
    %v2619 = vadd.f32 %v2605, %v2618
    %2620 = vdwg.mxu0
    %2621 = vmatpush.bf16.msra.mxu0 %v710
    %2622 = vmatpush.bf16.msra.mxu0 %v706
    %2623 = vmatpush.bf16.msra.mxu0 %v702
    %2624 = vmatpush.bf16.msra.mxu0 %v698
    %2625 = vmatpush.bf16.msra.mxu0 %v694
    %2626 = vmatpush.bf16.msra.mxu0 %v690
    %2627 = vmatpush.bf16.msra.mxu0 %v686
    %2628 = vmatpush.bf16.msra.mxu0 %v682
    %2629 = vmatmul.bf16.gmra.mxu0 %v2583
    %v2630 = vpop.f32.mrf.mxu0
    %v2631 = vadd.f32 %v2617, %v2630
    %v2632 = vpop.f32.mrf.mxu0
    %v2633 = vadd.f32 %v2619, %v2632
    %2634 = vdwg.mxu0
    %2635 = vmatpush.bf16.msra.mxu0 %v742
    %2636 = vmatpush.bf16.msra.mxu0 %v738
    %2637 = vmatpush.bf16.msra.mxu0 %v734
    %2638 = vmatpush.bf16.msra.mxu0 %v730
    %2639 = vmatpush.bf16.msra.mxu0 %v726
    %2640 = vmatpush.bf16.msra.mxu0 %v722
    %2641 = vmatpush.bf16.msra.mxu0 %v718
    %2642 = vmatpush.bf16.msra.mxu0 %v714
    %2643 = vmatmul.bf16.gmra.mxu0 %v2584
    %v2644 = vpop.f32.mrf.mxu0
    %v2645 = vadd.f32 %v2631, %v2644
    %v2646 = vpop.f32.mrf.mxu0
    %v2647 = vadd.f32 %v2633, %v2646
    %2648 = vdwg.mxu0
    %2649 = vmatpush.bf16.msra.mxu0 %v647
    %2650 = vmatpush.bf16.msra.mxu0 %v643
    %2651 = vmatpush.bf16.msra.mxu0 %v639
    %2652 = vmatpush.bf16.msra.mxu0 %v635
    %2653 = vmatpush.bf16.msra.mxu0 %v631
    %2654 = vmatpush.bf16.msra.mxu0 %v627
    %2655 = vmatpush.bf16.msra.mxu0 %v623
    %2656 = vmatpush.bf16.msra.mxu0 %v619
    %2657 = vmatmul.bf16.gmra.mxu0 %v2581
    %v2658 = vpop.f32.mrf.mxu0
    %v2659 = vadd.f32 %v2586, %v2658
    %v2660 = vpop.f32.mrf.mxu0
    %v2661 = vadd.f32 %v2590, %v2660
    %2662 = vdwg.mxu0
    %2663 = vmatpush.bf16.msra.mxu0 %v679
    %2664 = vmatpush.bf16.msra.mxu0 %v675
    %2665 = vmatpush.bf16.msra.mxu0 %v671
    %2666 = vmatpush.bf16.msra.mxu0 %v667
    %2667 = vmatpush.bf16.msra.mxu0 %v663
    %2668 = vmatpush.bf16.msra.mxu0 %v659
    %2669 = vmatpush.bf16.msra.mxu0 %v655
    %2670 = vmatpush.bf16.msra.mxu0 %v651
    %2671 = vmatmul.bf16.gmra.mxu0 %v2582
    %v2672 = vpop.f32.mrf.mxu0
    %v2673 = vadd.f32 %v2659, %v2672
    %v2674 = vpop.f32.mrf.mxu0
    %v2675 = vadd.f32 %v2661, %v2674
    %2676 = vdwg.mxu0
    %2677 = vmatpush.bf16.msra.mxu0 %v711
    %2678 = vmatpush.bf16.msra.mxu0 %v707
    %2679 = vmatpush.bf16.msra.mxu0 %v703
    %2680 = vmatpush.bf16.msra.mxu0 %v699
    %2681 = vmatpush.bf16.msra.mxu0 %v695
    %2682 = vmatpush.bf16.msra.mxu0 %v691
    %2683 = vmatpush.bf16.msra.mxu0 %v687
    %2684 = vmatpush.bf16.msra.mxu0 %v683
    %2685 = vmatmul.bf16.gmra.mxu0 %v2583
    %v2686 = vpop.f32.mrf.mxu0
    %v2687 = vadd.f32 %v2673, %v2686
    %v2688 = vpop.f32.mrf.mxu0
    %v2689 = vadd.f32 %v2675, %v2688
    %2690 = vdwg.mxu0
    %2691 = vmatpush.bf16.msra.mxu0 %v743
    %2692 = vmatpush.bf16.msra.mxu0 %v739
    %2693 = vmatpush.bf16.msra.mxu0 %v735
    %2694 = vmatpush.bf16.msra.mxu0 %v731
    %2695 = vmatpush.bf16.msra.mxu0 %v727
    %2696 = vmatpush.bf16.msra.mxu0 %v723
    %2697 = vmatpush.bf16.msra.mxu0 %v719
    %2698 = vmatpush.bf16.msra.mxu0 %v715
    %2699 = vmatmul.bf16.gmra.mxu0 %v2584
    %v2700 = vpop.f32.mrf.mxu0
    %v2701 = vadd.f32 %v2687, %v2700
    %v2702 = vpop.f32.mrf.mxu0
    %v2703 = vadd.f32 %v2689, %v2702
    %2704 = vdwg.mxu0
    %2705 = vmatpush.bf16.msra.mxu0 %v648
    %2706 = vmatpush.bf16.msra.mxu0 %v644
    %2707 = vmatpush.bf16.msra.mxu0 %v640
    %2708 = vmatpush.bf16.msra.mxu0 %v636
    %2709 = vmatpush.bf16.msra.mxu0 %v632
    %2710 = vmatpush.bf16.msra.mxu0 %v628
    %2711 = vmatpush.bf16.msra.mxu0 %v624
    %2712 = vmatpush.bf16.msra.mxu0 %v620
    %2713 = vmatmul.bf16.gmra.mxu0 %v2581
    %v2714 = vpop.f32.mrf.mxu0
    %v2715 = vadd.f32 %v2587, %v2714
    %v2716 = vpop.f32.mrf.mxu0
    %v2717 = vadd.f32 %v2591, %v2716
    %2718 = vdwg.mxu0
    %2719 = vmatpush.bf16.msra.mxu0 %v680
    %2720 = vmatpush.bf16.msra.mxu0 %v676
    %2721 = vmatpush.bf16.msra.mxu0 %v672
    %2722 = vmatpush.bf16.msra.mxu0 %v668
    %2723 = vmatpush.bf16.msra.mxu0 %v664
    %2724 = vmatpush.bf16.msra.mxu0 %v660
    %2725 = vmatpush.bf16.msra.mxu0 %v656
    %2726 = vmatpush.bf16.msra.mxu0 %v652
    %2727 = vmatmul.bf16.gmra.mxu0 %v2582
    %v2728 = vpop.f32.mrf.mxu0
    %v2729 = vadd.f32 %v2715, %v2728
    %v2730 = vpop.f32.mrf.mxu0
    %v2731 = vadd.f32 %v2717, %v2730
    %2732 = vdwg.mxu0
    %2733 = vmatpush.bf16.msra.mxu0 %v712
    %2734 = vmatpush.bf16.msra.mxu0 %v708
    %2735 = vmatpush.bf16.msra.mxu0 %v704
    %2736 = vmatpush.bf16.msra.mxu0 %v700
    %2737 = vmatpush.bf16.msra.mxu0 %v696
    %2738 = vmatpush.bf16.msra.mxu0 %v692
    %2739 = vmatpush.bf16.msra.mxu0 %v688
    %2740 = vmatpush.bf16.msra.mxu0 %v684
    %2741 = vmatmul.bf16.gmra.mxu0 %v2583
    %v2742 = vpop.f32.mrf.mxu0
    %v2743 = vadd.f32 %v2729, %v2742
    %v2744 = vpop.f32.mrf.mxu0
    %v2745 = vadd.f32 %v2731, %v2744
    %2746 = vdwg.mxu0
    %2747 = vmatpush.bf16.msra.mxu0 %v744
    %2748 = vmatpush.bf16.msra.mxu0 %v740
    %2749 = vmatpush.bf16.msra.mxu0 %v736
    %2750 = vmatpush.bf16.msra.mxu0 %v732
    %2751 = vmatpush.bf16.msra.mxu0 %v728
    %2752 = vmatpush.bf16.msra.mxu0 %v724
    %2753 = vmatpush.bf16.msra.mxu0 %v720
    %2754 = vmatpush.bf16.msra.mxu0 %v716
    %2755 = vmatmul.bf16.gmra.mxu0 %v2584
    %v2756 = vpop.f32.mrf.mxu0
    %v2757 = vadd.f32 %v2743, %v2756
    %v2758 = vpop.f32.mrf.mxu0
    %v2759 = vadd.f32 %v2745, %v2758
    %2760 = vdwg.mxu0
    %2761 = vmatpush.bf16.msra.mxu0 %v649
    %2762 = vmatpush.bf16.msra.mxu0 %v645
    %2763 = vmatpush.bf16.msra.mxu0 %v641
    %2764 = vmatpush.bf16.msra.mxu0 %v637
    %2765 = vmatpush.bf16.msra.mxu0 %v633
    %2766 = vmatpush.bf16.msra.mxu0 %v629
    %2767 = vmatpush.bf16.msra.mxu0 %v625
    %2768 = vmatpush.bf16.msra.mxu0 %v621
    %2769 = vmatmul.bf16.gmra.mxu0 %v2581
    %v2770 = vpop.f32.mrf.mxu0
    %v2771 = vadd.f32 %v2588, %v2770
    %v2772 = vpop.f32.mrf.mxu0
    %v2773 = vadd.f32 %v2592, %v2772
    %2774 = vdwg.mxu0
    %2775 = vmatpush.bf16.msra.mxu0 %v681
    %2776 = vmatpush.bf16.msra.mxu0 %v677
    %2777 = vmatpush.bf16.msra.mxu0 %v673
    %2778 = vmatpush.bf16.msra.mxu0 %v669
    %2779 = vmatpush.bf16.msra.mxu0 %v665
    %2780 = vmatpush.bf16.msra.mxu0 %v661
    %2781 = vmatpush.bf16.msra.mxu0 %v657
    %2782 = vmatpush.bf16.msra.mxu0 %v653
    %2783 = vmatmul.bf16.gmra.mxu0 %v2582
    %v2784 = vpop.f32.mrf.mxu0
    %v2785 = vadd.f32 %v2771, %v2784
    %v2786 = vpop.f32.mrf.mxu0
    %v2787 = vadd.f32 %v2773, %v2786
    %2788 = vdwg.mxu0
    %2789 = vmatpush.bf16.msra.mxu0 %v713
    %2790 = vmatpush.bf16.msra.mxu0 %v709
    %2791 = vmatpush.bf16.msra.mxu0 %v705
    %2792 = vmatpush.bf16.msra.mxu0 %v701
    %2793 = vmatpush.bf16.msra.mxu0 %v697
    %2794 = vmatpush.bf16.msra.mxu0 %v693
    %2795 = vmatpush.bf16.msra.mxu0 %v689
    %2796 = vmatpush.bf16.msra.mxu0 %v685
    %2797 = vmatmul.bf16.gmra.mxu0 %v2583
    %v2798 = vpop.f32.mrf.mxu0
    %v2799 = vadd.f32 %v2785, %v2798
    %v2800 = vpop.f32.mrf.mxu0
    %v2801 = vadd.f32 %v2787, %v2800
    %2802 = vdwg.mxu0
    %2803 = vmatpush.bf16.msra.mxu0 %v745
    %2804 = vmatpush.bf16.msra.mxu0 %v741
    %2805 = vmatpush.bf16.msra.mxu0 %v737
    %2806 = vmatpush.bf16.msra.mxu0 %v733
    %2807 = vmatpush.bf16.msra.mxu0 %v729
    %2808 = vmatpush.bf16.msra.mxu0 %v725
    %2809 = vmatpush.bf16.msra.mxu0 %v721
    %2810 = vmatpush.bf16.msra.mxu0 %v717
    %2811 = vmatmul.bf16.gmra.mxu0 %v2584
    %v2812 = vpop.f32.mrf.mxu0
    %v2813 = vadd.f32 %v2799, %v2812
    %v2814 = vpop.f32.mrf.mxu0
    %v2815 = vadd.f32 %v2801, %v2814
    %2816 = vdwg.mxu0
    %v2817 = vmul.f32 %v2564, %v2645
    %v2818 = vmul.f32 %v2565, %v2701
    %v2819 = vmul.f32 %v2566, %v2757
    %v2820 = vmul.f32 %v2567, %v2813
    %v2821 = vmul.f32 %v2568, %v2647
    %v2822 = vmul.f32 %v2569, %v2703
    %v2823 = vmul.f32 %v2570, %v2759
    %v2824 = vmul.f32 %v2571, %v2815
    %v2825 = vadd.f32 %v2817, %v2818
    %v2826 = vadd.f32 %v2825, %v2819
    %v2827 = vadd.f32 %v2826, %v2820
    %2828 = vadd.xlane.f32.xlu0 %v2827
    %v2829 = vpop.xlane.xlu0 %2828
    %v2830 = vadd.f32 %v2821, %v2822
    %v2831 = vadd.f32 %v2830, %v2823
    %v2832 = vadd.f32 %v2831, %v2824
    %2833 = vadd.xlane.f32.xlu0 %v2832
    %v2834 = vpop.xlane.xlu0 %2833
    %v2835 = vrcp.pop %v2829
    %v2836 = vrcp.pop %v2834
    %v2837 = vmul.f32 %v2829, %v2835
    %v2838 = vmul.f32 %v2834, %v2836
    %v2839 = vsub.f32 2.0, %v2837
    %v2840 = vsub.f32 2.0, %v2838
    %v2841 = vmul.f32 %v2835, %v2839
    %v2842 = vmul.f32 %v2836, %v2840
    %v2843 = vmul.f32 %v2532, %v2841
    %v2844 = vmul.f32 %v2537, %v2842
    %s2845 = scalar_select %p2580, 1, 0
    %v2846 = vstv %s2845
    %vm2847 = vcmp.eq.s32.totalorder %v2846, 1
    %v2848 = vsel %vm2847, %v2843, 0.0
    %v2849 = vsel %vm2847, %v2844, 0.0
    %v2850 = vmul.f32 %v2848, %v2564
    %v2851 = vmul.f32 %v2848, %v2565
    %v2852 = vmul.f32 %v2848, %v2566
    %v2853 = vmul.f32 %v2848, %v2567
    %v2854 = vmul.f32 %v2849, %v2568
    %v2855 = vmul.f32 %v2849, %v2569
    %v2856 = vmul.f32 %v2849, %v2570
    %v2857 = vmul.f32 %v2849, %v2571
    %v2858 = vadd.f32 %v2496, %v2850
    %v2859 = vadd.f32 %v2497, %v2851
    %v2860 = vadd.f32 %v2498, %v2852
    %v2861 = vadd.f32 %v2499, %v2853
    %v2862 = vadd.f32 %v2500, %v2854
    %v2863 = vadd.f32 %v2501, %v2855
    %v2864 = vadd.f32 %v2502, %v2856
    %v2865 = vadd.f32 %v2503, %v2857
    %v2866 = vmul.f32 %v2848, %v2645
    %v2867 = vmul.f32 %v2848, %v2701
    %v2868 = vmul.f32 %v2848, %v2757
    %v2869 = vmul.f32 %v2848, %v2813
    %v2870 = vmul.f32 %v2849, %v2647
    %v2871 = vmul.f32 %v2849, %v2703
    %v2872 = vmul.f32 %v2849, %v2759
    %v2873 = vmul.f32 %v2849, %v2815
    %v2874 = vsub.f32 %v2512, %v2866
    %v2875 = vsub.f32 %v2513, %v2867
    %v2876 = vsub.f32 %v2514, %v2868
    %v2877 = vsub.f32 %v2515, %v2869
    %v2878 = vsub.f32 %v2516, %v2870
    %v2879 = vsub.f32 %v2517, %v2871
    %v2880 = vsub.f32 %v2518, %v2872
    %v2881 = vsub.f32 %v2519, %v2873
    %v2882 = vmul.f32 %v2874, %v2874
    %v2883 = vmul.f32 %v2875, %v2875
    %v2884 = vmul.f32 %v2876, %v2876
    %v2885 = vmul.f32 %v2877, %v2877
    %v2886 = vmul.f32 %v2878, %v2878
    %v2887 = vmul.f32 %v2879, %v2879
    %v2888 = vmul.f32 %v2880, %v2880
    %v2889 = vmul.f32 %v2881, %v2881
    %v2890 = vadd.f32 %v2882, %v2883
    %v2891 = vadd.f32 %v2890, %v2884
    %v2892 = vadd.f32 %v2891, %v2885
    %2893 = vadd.xlane.f32.xlu0 %v2892
    %v2894 = vpop.xlane.xlu0 %2893
    %v2895 = vadd.f32 %v2886, %v2887
    %v2896 = vadd.f32 %v2895, %v2888
    %v2897 = vadd.f32 %v2896, %v2889
    %2898 = vadd.xlane.f32.xlu0 %v2897
    %v2899 = vpop.xlane.xlu0 %2898
    %v2900 = vrcp.pop %v2532
    %v2901 = vrcp.pop %v2537
    %v2902 = vmul.f32 %v2532, %v2900
    %v2903 = vmul.f32 %v2537, %v2901
    %v2904 = vsub.f32 2.0, %v2902
    %v2905 = vsub.f32 2.0, %v2903
    %v2906 = vmul.f32 %v2900, %v2904
    %v2907 = vmul.f32 %v2901, %v2905
    %v2908 = vmul.f32 %v2894, %v2906
    %v2909 = vmul.f32 %v2899, %v2907
    %v2910 = vmul.f32 %v2908, %v2564
    %v2911 = vmul.f32 %v2908, %v2565
    %v2912 = vmul.f32 %v2908, %v2566
    %v2913 = vmul.f32 %v2908, %v2567
    %v2914 = vmul.f32 %v2909, %v2568
    %v2915 = vmul.f32 %v2909, %v2569
    %v2916 = vmul.f32 %v2909, %v2570
    %v2917 = vmul.f32 %v2909, %v2571
    %v2918 = vadd.f32 %v2910, %v2874
    %v2919 = vadd.f32 %v2911, %v2875
    %v2920 = vadd.f32 %v2912, %v2876
    %v2921 = vadd.f32 %v2913, %v2877
    %v2922 = vadd.f32 %v2914, %v2878
    %v2923 = vadd.f32 %v2915, %v2879
    %v2924 = vadd.f32 %v2916, %v2880
    %v2925 = vadd.f32 %v2917, %v2881
    %v2926 = vsel %vm2847, %v2918, %v2564
    %v2927 = vsel %vm2847, %v2919, %v2565
    %v2928 = vsel %vm2847, %v2920, %v2566
    %v2929 = vsel %vm2847, %v2921, %v2567
    %v2930 = vsel %vm2847, %v2922, %v2568
    %v2931 = vsel %vm2847, %v2923, %v2569
    %v2932 = vsel %vm2847, %v2924, %v2570
    %v2933 = vsel %vm2847, %v2925, %v2571
    %v2934 = vmax.f32 %v2894, %v2899
    %v2935 = vrot.slane %v2934, 4
    %v2936 = vmax.f32 %v2934, %v2935
    %v2937 = vrot.slane %v2936, 2
    %v2938 = vmax.f32 %v2936, %v2937
    %v2939 = vrot.slane %v2938, 1
    %v2940 = vmax.f32 %v2938, %v2939
    %s2941 = vtos %v2940
    %p2942 = scmp.ge.f32.partialorder %s2941, 1e-12
    %v2943 = vpack.c.bf16 %v2930, %v2926
    %v2944 = vpack.c.bf16 %v2931, %v2927
    %v2945 = vpack.c.bf16 %v2932, %v2928
    %v2946 = vpack.c.bf16 %v2933, %v2929
    %v2947 = vmul.f32 %v2926, 0.05
    %v2948 = vmul.f32 %v2927, 0.05
    %v2949 = vmul.f32 %v2928, 0.05
    %v2950 = vmul.f32 %v2929, 0.05
    %v2951 = vmul.f32 %v2930, 0.05
    %v2952 = vmul.f32 %v2931, 0.05
    %v2953 = vmul.f32 %v2932, 0.05
    %v2954 = vmul.f32 %v2933, 0.05
    %2955 = vmatpush.bf16.msra.mxu0 %v646
    %2956 = vmatpush.bf16.msra.mxu0 %v642
    %2957 = vmatpush.bf16.msra.mxu0 %v638
    %2958 = vmatpush.bf16.msra.mxu0 %v634
    %2959 = vmatpush.bf16.msra.mxu0 %v630
    %2960 = vmatpush.bf16.msra.mxu0 %v626
    %2961 = vmatpush.bf16.msra.mxu0 %v622
    %2962 = vmatpush.bf16.msra.mxu0 %v618
    %2963 = vmatmul.bf16.gmra.mxu0 %v2943
    %v2964 = vpop.f32.mrf.mxu0
    %v2965 = vadd.f32 %v2947, %v2964
    %v2966 = vpop.f32.mrf.mxu0
    %v2967 = vadd.f32 %v2951, %v2966
    %2968 = vdwg.mxu0
    %2969 = vmatpush.bf16.msra.mxu0 %v678
    %2970 = vmatpush.bf16.msra.mxu0 %v674
    %2971 = vmatpush.bf16.msra.mxu0 %v670
    %2972 = vmatpush.bf16.msra.mxu0 %v666
    %2973 = vmatpush.bf16.msra.mxu0 %v662
    %2974 = vmatpush.bf16.msra.mxu0 %v658
    %2975 = vmatpush.bf16.msra.mxu0 %v654
    %2976 = vmatpush.bf16.msra.mxu0 %v650
    %2977 = vmatmul.bf16.gmra.mxu0 %v2944
    %v2978 = vpop.f32.mrf.mxu0
    %v2979 = vadd.f32 %v2965, %v2978
    %v2980 = vpop.f32.mrf.mxu0
    %v2981 = vadd.f32 %v2967, %v2980
    %2982 = vdwg.mxu0
    %2983 = vmatpush.bf16.msra.mxu0 %v710
    %2984 = vmatpush.bf16.msra.mxu0 %v706
    %2985 = vmatpush.bf16.msra.mxu0 %v702
    %2986 = vmatpush.bf16.msra.mxu0 %v698
    %2987 = vmatpush.bf16.msra.mxu0 %v694
    %2988 = vmatpush.bf16.msra.mxu0 %v690
    %2989 = vmatpush.bf16.msra.mxu0 %v686
    %2990 = vmatpush.bf16.msra.mxu0 %v682
    %2991 = vmatmul.bf16.gmra.mxu0 %v2945
    %v2992 = vpop.f32.mrf.mxu0
    %v2993 = vadd.f32 %v2979, %v2992
    %v2994 = vpop.f32.mrf.mxu0
    %v2995 = vadd.f32 %v2981, %v2994
    %2996 = vdwg.mxu0
    %2997 = vmatpush.bf16.msra.mxu0 %v742
    %2998 = vmatpush.bf16.msra.mxu0 %v738
    %2999 = vmatpush.bf16.msra.mxu0 %v734
    %3000 = vmatpush.bf16.msra.mxu0 %v730
    %3001 = vmatpush.bf16.msra.mxu0 %v726
    %3002 = vmatpush.bf16.msra.mxu0 %v722
    %3003 = vmatpush.bf16.msra.mxu0 %v718
    %3004 = vmatpush.bf16.msra.mxu0 %v714
    %3005 = vmatmul.bf16.gmra.mxu0 %v2946
    %v3006 = vpop.f32.mrf.mxu0
    %v3007 = vadd.f32 %v2993, %v3006
    %v3008 = vpop.f32.mrf.mxu0
    %v3009 = vadd.f32 %v2995, %v3008
    %3010 = vdwg.mxu0
    %3011 = vmatpush.bf16.msra.mxu0 %v647
    %3012 = vmatpush.bf16.msra.mxu0 %v643
    %3013 = vmatpush.bf16.msra.mxu0 %v639
    %3014 = vmatpush.bf16.msra.mxu0 %v635
    %3015 = vmatpush.bf16.msra.mxu0 %v631
    %3016 = vmatpush.bf16.msra.mxu0 %v627
    %3017 = vmatpush.bf16.msra.mxu0 %v623
    %3018 = vmatpush.bf16.msra.mxu0 %v619
    %3019 = vmatmul.bf16.gmra.mxu0 %v2943
    %v3020 = vpop.f32.mrf.mxu0
    %v3021 = vadd.f32 %v2948, %v3020
    %v3022 = vpop.f32.mrf.mxu0
    %v3023 = vadd.f32 %v2952, %v3022
    %3024 = vdwg.mxu0
    %3025 = vmatpush.bf16.msra.mxu0 %v679
    %3026 = vmatpush.bf16.msra.mxu0 %v675
    %3027 = vmatpush.bf16.msra.mxu0 %v671
    %3028 = vmatpush.bf16.msra.mxu0 %v667
    %3029 = vmatpush.bf16.msra.mxu0 %v663
    %3030 = vmatpush.bf16.msra.mxu0 %v659
    %3031 = vmatpush.bf16.msra.mxu0 %v655
    %3032 = vmatpush.bf16.msra.mxu0 %v651
    %3033 = vmatmul.bf16.gmra.mxu0 %v2944
    %v3034 = vpop.f32.mrf.mxu0
    %v3035 = vadd.f32 %v3021, %v3034
    %v3036 = vpop.f32.mrf.mxu0
    %v3037 = vadd.f32 %v3023, %v3036
    %3038 = vdwg.mxu0
    %3039 = vmatpush.bf16.msra.mxu0 %v711
    %3040 = vmatpush.bf16.msra.mxu0 %v707
    %3041 = vmatpush.bf16.msra.mxu0 %v703
    %3042 = vmatpush.bf16.msra.mxu0 %v699
    %3043 = vmatpush.bf16.msra.mxu0 %v695
    %3044 = vmatpush.bf16.msra.mxu0 %v691
    %3045 = vmatpush.bf16.msra.mxu0 %v687
    %3046 = vmatpush.bf16.msra.mxu0 %v683
    %3047 = vmatmul.bf16.gmra.mxu0 %v2945
    %v3048 = vpop.f32.mrf.mxu0
    %v3049 = vadd.f32 %v3035, %v3048
    %v3050 = vpop.f32.mrf.mxu0
    %v3051 = vadd.f32 %v3037, %v3050
    %3052 = vdwg.mxu0
    %3053 = vmatpush.bf16.msra.mxu0 %v743
    %3054 = vmatpush.bf16.msra.mxu0 %v739
    %3055 = vmatpush.bf16.msra.mxu0 %v735
    %3056 = vmatpush.bf16.msra.mxu0 %v731
    %3057 = vmatpush.bf16.msra.mxu0 %v727
    %3058 = vmatpush.bf16.msra.mxu0 %v723
    %3059 = vmatpush.bf16.msra.mxu0 %v719
    %3060 = vmatpush.bf16.msra.mxu0 %v715
    %3061 = vmatmul.bf16.gmra.mxu0 %v2946
    %v3062 = vpop.f32.mrf.mxu0
    %v3063 = vadd.f32 %v3049, %v3062
    %v3064 = vpop.f32.mrf.mxu0
    %v3065 = vadd.f32 %v3051, %v3064
    %3066 = vdwg.mxu0
    %3067 = vmatpush.bf16.msra.mxu0 %v648
    %3068 = vmatpush.bf16.msra.mxu0 %v644
    %3069 = vmatpush.bf16.msra.mxu0 %v640
    %3070 = vmatpush.bf16.msra.mxu0 %v636
    %3071 = vmatpush.bf16.msra.mxu0 %v632
    %3072 = vmatpush.bf16.msra.mxu0 %v628
    %3073 = vmatpush.bf16.msra.mxu0 %v624
    %3074 = vmatpush.bf16.msra.mxu0 %v620
    %3075 = vmatmul.bf16.gmra.mxu0 %v2943
    %v3076 = vpop.f32.mrf.mxu0
    %v3077 = vadd.f32 %v2949, %v3076
    %v3078 = vpop.f32.mrf.mxu0
    %v3079 = vadd.f32 %v2953, %v3078
    %3080 = vdwg.mxu0
    %3081 = vmatpush.bf16.msra.mxu0 %v680
    %3082 = vmatpush.bf16.msra.mxu0 %v676
    %3083 = vmatpush.bf16.msra.mxu0 %v672
    %3084 = vmatpush.bf16.msra.mxu0 %v668
    %3085 = vmatpush.bf16.msra.mxu0 %v664
    %3086 = vmatpush.bf16.msra.mxu0 %v660
    %3087 = vmatpush.bf16.msra.mxu0 %v656
    %3088 = vmatpush.bf16.msra.mxu0 %v652
    %3089 = vmatmul.bf16.gmra.mxu0 %v2944
    %v3090 = vpop.f32.mrf.mxu0
    %v3091 = vadd.f32 %v3077, %v3090
    %v3092 = vpop.f32.mrf.mxu0
    %v3093 = vadd.f32 %v3079, %v3092
    %3094 = vdwg.mxu0
    %3095 = vmatpush.bf16.msra.mxu0 %v712
    %3096 = vmatpush.bf16.msra.mxu0 %v708
    %3097 = vmatpush.bf16.msra.mxu0 %v704
    %3098 = vmatpush.bf16.msra.mxu0 %v700
    %3099 = vmatpush.bf16.msra.mxu0 %v696
    %3100 = vmatpush.bf16.msra.mxu0 %v692
    %3101 = vmatpush.bf16.msra.mxu0 %v688
    %3102 = vmatpush.bf16.msra.mxu0 %v684
    %3103 = vmatmul.bf16.gmra.mxu0 %v2945
    %v3104 = vpop.f32.mrf.mxu0
    %v3105 = vadd.f32 %v3091, %v3104
    %v3106 = vpop.f32.mrf.mxu0
    %v3107 = vadd.f32 %v3093, %v3106
    %3108 = vdwg.mxu0
    %3109 = vmatpush.bf16.msra.mxu0 %v744
    %3110 = vmatpush.bf16.msra.mxu0 %v740
    %3111 = vmatpush.bf16.msra.mxu0 %v736
    %3112 = vmatpush.bf16.msra.mxu0 %v732
    %3113 = vmatpush.bf16.msra.mxu0 %v728
    %3114 = vmatpush.bf16.msra.mxu0 %v724
    %3115 = vmatpush.bf16.msra.mxu0 %v720
    %3116 = vmatpush.bf16.msra.mxu0 %v716
    %3117 = vmatmul.bf16.gmra.mxu0 %v2946
    %v3118 = vpop.f32.mrf.mxu0
    %v3119 = vadd.f32 %v3105, %v3118
    %v3120 = vpop.f32.mrf.mxu0
    %v3121 = vadd.f32 %v3107, %v3120
    %3122 = vdwg.mxu0
    %3123 = vmatpush.bf16.msra.mxu0 %v649
    %3124 = vmatpush.bf16.msra.mxu0 %v645
    %3125 = vmatpush.bf16.msra.mxu0 %v641
    %3126 = vmatpush.bf16.msra.mxu0 %v637
    %3127 = vmatpush.bf16.msra.mxu0 %v633
    %3128 = vmatpush.bf16.msra.mxu0 %v629
    %3129 = vmatpush.bf16.msra.mxu0 %v625
    %3130 = vmatpush.bf16.msra.mxu0 %v621
    %3131 = vmatmul.bf16.gmra.mxu0 %v2943
    %v3132 = vpop.f32.mrf.mxu0
    %v3133 = vadd.f32 %v2950, %v3132
    %v3134 = vpop.f32.mrf.mxu0
    %v3135 = vadd.f32 %v2954, %v3134
    %3136 = vdwg.mxu0
    %3137 = vmatpush.bf16.msra.mxu0 %v681
    %3138 = vmatpush.bf16.msra.mxu0 %v677
    %3139 = vmatpush.bf16.msra.mxu0 %v673
    %3140 = vmatpush.bf16.msra.mxu0 %v669
    %3141 = vmatpush.bf16.msra.mxu0 %v665
    %3142 = vmatpush.bf16.msra.mxu0 %v661
    %3143 = vmatpush.bf16.msra.mxu0 %v657
    %3144 = vmatpush.bf16.msra.mxu0 %v653
    %3145 = vmatmul.bf16.gmra.mxu0 %v2944
    %v3146 = vpop.f32.mrf.mxu0
    %v3147 = vadd.f32 %v3133, %v3146
    %v3148 = vpop.f32.mrf.mxu0
    %v3149 = vadd.f32 %v3135, %v3148
    %3150 = vdwg.mxu0
    %3151 = vmatpush.bf16.msra.mxu0 %v713
    %3152 = vmatpush.bf16.msra.mxu0 %v709
    %3153 = vmatpush.bf16.msra.mxu0 %v705
    %3154 = vmatpush.bf16.msra.mxu0 %v701
    %3155 = vmatpush.bf16.msra.mxu0 %v697
    %3156 = vmatpush.bf16.msra.mxu0 %v693
    %3157 = vmatpush.bf16.msra.mxu0 %v689
    %3158 = vmatpush.bf16.msra.mxu0 %v685
    %3159 = vmatmul.bf16.gmra.mxu0 %v2945
    %v3160 = vpop.f32.mrf.mxu0
    %v3161 = vadd.f32 %v3147, %v3160
    %v3162 = vpop.f32.mrf.mxu0
    %v3163 = vadd.f32 %v3149, %v3162
    %3164 = vdwg.mxu0
    %3165 = vmatpush.bf16.msra.mxu0 %v745
    %3166 = vmatpush.bf16.msra.mxu0 %v741
    %3167 = vmatpush.bf16.msra.mxu0 %v737
    %3168 = vmatpush.bf16.msra.mxu0 %v733
    %3169 = vmatpush.bf16.msra.mxu0 %v729
    %3170 = vmatpush.bf16.msra.mxu0 %v725
    %3171 = vmatpush.bf16.msra.mxu0 %v721
    %3172 = vmatpush.bf16.msra.mxu0 %v717
    %3173 = vmatmul.bf16.gmra.mxu0 %v2946
    %v3174 = vpop.f32.mrf.mxu0
    %v3175 = vadd.f32 %v3161, %v3174
    %v3176 = vpop.f32.mrf.mxu0
    %v3177 = vadd.f32 %v3163, %v3176
    %3178 = vdwg.mxu0
    %v3179 = vmul.f32 %v2926, %v3007
    %v3180 = vmul.f32 %v2927, %v3063
    %v3181 = vmul.f32 %v2928, %v3119
    %v3182 = vmul.f32 %v2929, %v3175
    %v3183 = vmul.f32 %v2930, %v3009
    %v3184 = vmul.f32 %v2931, %v3065
    %v3185 = vmul.f32 %v2932, %v3121
    %v3186 = vmul.f32 %v2933, %v3177
    %v3187 = vadd.f32 %v3179, %v3180
    %v3188 = vadd.f32 %v3187, %v3181
    %v3189 = vadd.f32 %v3188, %v3182
    %3190 = vadd.xlane.f32.xlu0 %v3189
    %v3191 = vpop.xlane.xlu0 %3190
    %v3192 = vadd.f32 %v3183, %v3184
    %v3193 = vadd.f32 %v3192, %v3185
    %v3194 = vadd.f32 %v3193, %v3186
    %3195 = vadd.xlane.f32.xlu0 %v3194
    %v3196 = vpop.xlane.xlu0 %3195
    %v3197 = vrcp.pop %v3191
    %v3198 = vrcp.pop %v3196
    %v3199 = vmul.f32 %v3191, %v3197
    %v3200 = vmul.f32 %v3196, %v3198
    %v3201 = vsub.f32 2.0, %v3199
    %v3202 = vsub.f32 2.0, %v3200
    %v3203 = vmul.f32 %v3197, %v3201
    %v3204 = vmul.f32 %v3198, %v3202
    %v3205 = vmul.f32 %v2894, %v3203
    %v3206 = vmul.f32 %v2899, %v3204
    %s3207 = scalar_select %p2942, 1, 0
    %v3208 = vstv %s3207
    %vm3209 = vcmp.eq.s32.totalorder %v3208, 1
    %v3210 = vsel %vm3209, %v3205, 0.0
    %v3211 = vsel %vm3209, %v3206, 0.0
    %v3212 = vmul.f32 %v3210, %v2926
    %v3213 = vmul.f32 %v3210, %v2927
    %v3214 = vmul.f32 %v3210, %v2928
    %v3215 = vmul.f32 %v3210, %v2929
    %v3216 = vmul.f32 %v3211, %v2930
    %v3217 = vmul.f32 %v3211, %v2931
    %v3218 = vmul.f32 %v3211, %v2932
    %v3219 = vmul.f32 %v3211, %v2933
    %v3220 = vadd.f32 %v2858, %v3212
    %v3221 = vadd.f32 %v2859, %v3213
    %v3222 = vadd.f32 %v2860, %v3214
    %v3223 = vadd.f32 %v2861, %v3215
    %v3224 = vadd.f32 %v2862, %v3216
    %v3225 = vadd.f32 %v2863, %v3217
    %v3226 = vadd.f32 %v2864, %v3218
    %v3227 = vadd.f32 %v2865, %v3219
    %v3228 = vmul.f32 %v3210, %v3007
    %v3229 = vmul.f32 %v3210, %v3063
    %v3230 = vmul.f32 %v3210, %v3119
    %v3231 = vmul.f32 %v3210, %v3175
    %v3232 = vmul.f32 %v3211, %v3009
    %v3233 = vmul.f32 %v3211, %v3065
    %v3234 = vmul.f32 %v3211, %v3121
    %v3235 = vmul.f32 %v3211, %v3177
    %v3236 = vsub.f32 %v2874, %v3228
    %v3237 = vsub.f32 %v2875, %v3229
    %v3238 = vsub.f32 %v2876, %v3230
    %v3239 = vsub.f32 %v2877, %v3231
    %v3240 = vsub.f32 %v2878, %v3232
    %v3241 = vsub.f32 %v2879, %v3233
    %v3242 = vsub.f32 %v2880, %v3234
    %v3243 = vsub.f32 %v2881, %v3235
    %v3244 = vmul.f32 %v3236, %v3236
    %v3245 = vmul.f32 %v3237, %v3237
    %v3246 = vmul.f32 %v3238, %v3238
    %v3247 = vmul.f32 %v3239, %v3239
    %v3248 = vmul.f32 %v3240, %v3240
    %v3249 = vmul.f32 %v3241, %v3241
    %v3250 = vmul.f32 %v3242, %v3242
    %v3251 = vmul.f32 %v3243, %v3243
    %v3252 = vadd.f32 %v3244, %v3245
    %v3253 = vadd.f32 %v3252, %v3246
    %v3254 = vadd.f32 %v3253, %v3247
    %3255 = vadd.xlane.f32.xlu0 %v3254
    %v3256 = vpop.xlane.xlu0 %3255
    %v3257 = vadd.f32 %v3248, %v3249
    %v3258 = vadd.f32 %v3257, %v3250
    %v3259 = vadd.f32 %v3258, %v3251
    %3260 = vadd.xlane.f32.xlu0 %v3259
    %v3261 = vpop.xlane.xlu0 %3260
    %v3262 = vrcp.pop %v2894
    %v3263 = vrcp.pop %v2899
    %v3264 = vmul.f32 %v2894, %v3262
    %v3265 = vmul.f32 %v2899, %v3263
    %v3266 = vsub.f32 2.0, %v3264
    %v3267 = vsub.f32 2.0, %v3265
    %v3268 = vmul.f32 %v3262, %v3266
    %v3269 = vmul.f32 %v3263, %v3267
    %v3270 = vmul.f32 %v3256, %v3268
    %v3271 = vmul.f32 %v3261, %v3269
    %v3272 = vmul.f32 %v3270, %v2926
    %v3273 = vmul.f32 %v3270, %v2927
    %v3274 = vmul.f32 %v3270, %v2928
    %v3275 = vmul.f32 %v3270, %v2929
    %v3276 = vmul.f32 %v3271, %v2930
    %v3277 = vmul.f32 %v3271, %v2931
    %v3278 = vmul.f32 %v3271, %v2932
    %v3279 = vmul.f32 %v3271, %v2933
    %v3280 = vadd.f32 %v3272, %v3236
    %v3281 = vadd.f32 %v3273, %v3237
    %v3282 = vadd.f32 %v3274, %v3238
    %v3283 = vadd.f32 %v3275, %v3239
    %v3284 = vadd.f32 %v3276, %v3240
    %v3285 = vadd.f32 %v3277, %v3241
    %v3286 = vadd.f32 %v3278, %v3242
    %v3287 = vadd.f32 %v3279, %v3243
    %v3288 = vsel %vm3209, %v3280, %v2926
    %v3289 = vsel %vm3209, %v3281, %v2927
    %v3290 = vsel %vm3209, %v3282, %v2928
    %v3291 = vsel %vm3209, %v3283, %v2929
    %v3292 = vsel %vm3209, %v3284, %v2930
    %v3293 = vsel %vm3209, %v3285, %v2931
    %v3294 = vsel %vm3209, %v3286, %v2932
    %v3295 = vsel %vm3209, %v3287, %v2933
    %v3296 = vmax.f32 %v3256, %v3261
    %v3297 = vrot.slane %v3296, 4
    %v3298 = vmax.f32 %v3296, %v3297
    %v3299 = vrot.slane %v3298, 2
    %v3300 = vmax.f32 %v3298, %v3299
    %v3301 = vrot.slane %v3300, 1
    %v3302 = vmax.f32 %v3300, %v3301
    %s3303 = vtos %v3302
    %p3304 = scmp.ge.f32.partialorder %s3303, 1e-12
    %v3305 = vpack.c.bf16 %v3292, %v3288
    %v3306 = vpack.c.bf16 %v3293, %v3289
    %v3307 = vpack.c.bf16 %v3294, %v3290
    %v3308 = vpack.c.bf16 %v3295, %v3291
    %v3309 = vmul.f32 %v3288, 0.05
    %v3310 = vmul.f32 %v3289, 0.05
    %v3311 = vmul.f32 %v3290, 0.05
    %v3312 = vmul.f32 %v3291, 0.05
    %v3313 = vmul.f32 %v3292, 0.05
    %v3314 = vmul.f32 %v3293, 0.05
    %v3315 = vmul.f32 %v3294, 0.05
    %v3316 = vmul.f32 %v3295, 0.05
    %3317 = vmatpush.bf16.msra.mxu0 %v646
    %3318 = vmatpush.bf16.msra.mxu0 %v642
    %3319 = vmatpush.bf16.msra.mxu0 %v638
    %3320 = vmatpush.bf16.msra.mxu0 %v634
    %3321 = vmatpush.bf16.msra.mxu0 %v630
    %3322 = vmatpush.bf16.msra.mxu0 %v626
    %3323 = vmatpush.bf16.msra.mxu0 %v622
    %3324 = vmatpush.bf16.msra.mxu0 %v618
    %3325 = vmatmul.bf16.gmra.mxu0 %v3305
    %v3326 = vpop.f32.mrf.mxu0
    %v3327 = vadd.f32 %v3309, %v3326
    %v3328 = vpop.f32.mrf.mxu0
    %v3329 = vadd.f32 %v3313, %v3328
    %3330 = vdwg.mxu0
    %3331 = vmatpush.bf16.msra.mxu0 %v678
    %3332 = vmatpush.bf16.msra.mxu0 %v674
    %3333 = vmatpush.bf16.msra.mxu0 %v670
    %3334 = vmatpush.bf16.msra.mxu0 %v666
    %3335 = vmatpush.bf16.msra.mxu0 %v662
    %3336 = vmatpush.bf16.msra.mxu0 %v658
    %3337 = vmatpush.bf16.msra.mxu0 %v654
    %3338 = vmatpush.bf16.msra.mxu0 %v650
    %3339 = vmatmul.bf16.gmra.mxu0 %v3306
    %v3340 = vpop.f32.mrf.mxu0
    %v3341 = vadd.f32 %v3327, %v3340
    %v3342 = vpop.f32.mrf.mxu0
    %v3343 = vadd.f32 %v3329, %v3342
    %3344 = vdwg.mxu0
    %3345 = vmatpush.bf16.msra.mxu0 %v710
    %3346 = vmatpush.bf16.msra.mxu0 %v706
    %3347 = vmatpush.bf16.msra.mxu0 %v702
    %3348 = vmatpush.bf16.msra.mxu0 %v698
    %3349 = vmatpush.bf16.msra.mxu0 %v694
    %3350 = vmatpush.bf16.msra.mxu0 %v690
    %3351 = vmatpush.bf16.msra.mxu0 %v686
    %3352 = vmatpush.bf16.msra.mxu0 %v682
    %3353 = vmatmul.bf16.gmra.mxu0 %v3307
    %v3354 = vpop.f32.mrf.mxu0
    %v3355 = vadd.f32 %v3341, %v3354
    %v3356 = vpop.f32.mrf.mxu0
    %v3357 = vadd.f32 %v3343, %v3356
    %3358 = vdwg.mxu0
    %3359 = vmatpush.bf16.msra.mxu0 %v742
    %3360 = vmatpush.bf16.msra.mxu0 %v738
    %3361 = vmatpush.bf16.msra.mxu0 %v734
    %3362 = vmatpush.bf16.msra.mxu0 %v730
    %3363 = vmatpush.bf16.msra.mxu0 %v726
    %3364 = vmatpush.bf16.msra.mxu0 %v722
    %3365 = vmatpush.bf16.msra.mxu0 %v718
    %3366 = vmatpush.bf16.msra.mxu0 %v714
    %3367 = vmatmul.bf16.gmra.mxu0 %v3308
    %v3368 = vpop.f32.mrf.mxu0
    %v3369 = vadd.f32 %v3355, %v3368
    %v3370 = vpop.f32.mrf.mxu0
    %v3371 = vadd.f32 %v3357, %v3370
    %3372 = vdwg.mxu0
    %3373 = vmatpush.bf16.msra.mxu0 %v647
    %3374 = vmatpush.bf16.msra.mxu0 %v643
    %3375 = vmatpush.bf16.msra.mxu0 %v639
    %3376 = vmatpush.bf16.msra.mxu0 %v635
    %3377 = vmatpush.bf16.msra.mxu0 %v631
    %3378 = vmatpush.bf16.msra.mxu0 %v627
    %3379 = vmatpush.bf16.msra.mxu0 %v623
    %3380 = vmatpush.bf16.msra.mxu0 %v619
    %3381 = vmatmul.bf16.gmra.mxu0 %v3305
    %v3382 = vpop.f32.mrf.mxu0
    %v3383 = vadd.f32 %v3310, %v3382
    %v3384 = vpop.f32.mrf.mxu0
    %v3385 = vadd.f32 %v3314, %v3384
    %3386 = vdwg.mxu0
    %3387 = vmatpush.bf16.msra.mxu0 %v679
    %3388 = vmatpush.bf16.msra.mxu0 %v675
    %3389 = vmatpush.bf16.msra.mxu0 %v671
    %3390 = vmatpush.bf16.msra.mxu0 %v667
    %3391 = vmatpush.bf16.msra.mxu0 %v663
    %3392 = vmatpush.bf16.msra.mxu0 %v659
    %3393 = vmatpush.bf16.msra.mxu0 %v655
    %3394 = vmatpush.bf16.msra.mxu0 %v651
    %3395 = vmatmul.bf16.gmra.mxu0 %v3306
    %v3396 = vpop.f32.mrf.mxu0
    %v3397 = vadd.f32 %v3383, %v3396
    %v3398 = vpop.f32.mrf.mxu0
    %v3399 = vadd.f32 %v3385, %v3398
    %3400 = vdwg.mxu0
    %3401 = vmatpush.bf16.msra.mxu0 %v711
    %3402 = vmatpush.bf16.msra.mxu0 %v707
    %3403 = vmatpush.bf16.msra.mxu0 %v703
    %3404 = vmatpush.bf16.msra.mxu0 %v699
    %3405 = vmatpush.bf16.msra.mxu0 %v695
    %3406 = vmatpush.bf16.msra.mxu0 %v691
    %3407 = vmatpush.bf16.msra.mxu0 %v687
    %3408 = vmatpush.bf16.msra.mxu0 %v683
    %3409 = vmatmul.bf16.gmra.mxu0 %v3307
    %v3410 = vpop.f32.mrf.mxu0
    %v3411 = vadd.f32 %v3397, %v3410
    %v3412 = vpop.f32.mrf.mxu0
    %v3413 = vadd.f32 %v3399, %v3412
    %3414 = vdwg.mxu0
    %3415 = vmatpush.bf16.msra.mxu0 %v743
    %3416 = vmatpush.bf16.msra.mxu0 %v739
    %3417 = vmatpush.bf16.msra.mxu0 %v735
    %3418 = vmatpush.bf16.msra.mxu0 %v731
    %3419 = vmatpush.bf16.msra.mxu0 %v727
    %3420 = vmatpush.bf16.msra.mxu0 %v723
    %3421 = vmatpush.bf16.msra.mxu0 %v719
    %3422 = vmatpush.bf16.msra.mxu0 %v715
    %3423 = vmatmul.bf16.gmra.mxu0 %v3308
    %v3424 = vpop.f32.mrf.mxu0
    %v3425 = vadd.f32 %v3411, %v3424
    %v3426 = vpop.f32.mrf.mxu0
    %v3427 = vadd.f32 %v3413, %v3426
    %3428 = vdwg.mxu0
    %3429 = vmatpush.bf16.msra.mxu0 %v648
    %3430 = vmatpush.bf16.msra.mxu0 %v644
    %3431 = vmatpush.bf16.msra.mxu0 %v640
    %3432 = vmatpush.bf16.msra.mxu0 %v636
    %3433 = vmatpush.bf16.msra.mxu0 %v632
    %3434 = vmatpush.bf16.msra.mxu0 %v628
    %3435 = vmatpush.bf16.msra.mxu0 %v624
    %3436 = vmatpush.bf16.msra.mxu0 %v620
    %3437 = vmatmul.bf16.gmra.mxu0 %v3305
    %v3438 = vpop.f32.mrf.mxu0
    %v3439 = vadd.f32 %v3311, %v3438
    %v3440 = vpop.f32.mrf.mxu0
    %v3441 = vadd.f32 %v3315, %v3440
    %3442 = vdwg.mxu0
    %3443 = vmatpush.bf16.msra.mxu0 %v680
    %3444 = vmatpush.bf16.msra.mxu0 %v676
    %3445 = vmatpush.bf16.msra.mxu0 %v672
    %3446 = vmatpush.bf16.msra.mxu0 %v668
    %3447 = vmatpush.bf16.msra.mxu0 %v664
    %3448 = vmatpush.bf16.msra.mxu0 %v660
    %3449 = vmatpush.bf16.msra.mxu0 %v656
    %3450 = vmatpush.bf16.msra.mxu0 %v652
    %3451 = vmatmul.bf16.gmra.mxu0 %v3306
    %v3452 = vpop.f32.mrf.mxu0
    %v3453 = vadd.f32 %v3439, %v3452
    %v3454 = vpop.f32.mrf.mxu0
    %v3455 = vadd.f32 %v3441, %v3454
    %3456 = vdwg.mxu0
    %3457 = vmatpush.bf16.msra.mxu0 %v712
    %3458 = vmatpush.bf16.msra.mxu0 %v708
    %3459 = vmatpush.bf16.msra.mxu0 %v704
    %3460 = vmatpush.bf16.msra.mxu0 %v700
    %3461 = vmatpush.bf16.msra.mxu0 %v696
    %3462 = vmatpush.bf16.msra.mxu0 %v692
    %3463 = vmatpush.bf16.msra.mxu0 %v688
    %3464 = vmatpush.bf16.msra.mxu0 %v684
    %3465 = vmatmul.bf16.gmra.mxu0 %v3307
    %v3466 = vpop.f32.mrf.mxu0
    %v3467 = vadd.f32 %v3453, %v3466
    %v3468 = vpop.f32.mrf.mxu0
    %v3469 = vadd.f32 %v3455, %v3468
    %3470 = vdwg.mxu0
    %3471 = vmatpush.bf16.msra.mxu0 %v744
    %3472 = vmatpush.bf16.msra.mxu0 %v740
    %3473 = vmatpush.bf16.msra.mxu0 %v736
    %3474 = vmatpush.bf16.msra.mxu0 %v732
    %3475 = vmatpush.bf16.msra.mxu0 %v728
    %3476 = vmatpush.bf16.msra.mxu0 %v724
    %3477 = vmatpush.bf16.msra.mxu0 %v720
    %3478 = vmatpush.bf16.msra.mxu0 %v716
    %3479 = vmatmul.bf16.gmra.mxu0 %v3308
    %v3480 = vpop.f32.mrf.mxu0
    %v3481 = vadd.f32 %v3467, %v3480
    %v3482 = vpop.f32.mrf.mxu0
    %v3483 = vadd.f32 %v3469, %v3482
    %3484 = vdwg.mxu0
    %3485 = vmatpush.bf16.msra.mxu0 %v649
    %3486 = vmatpush.bf16.msra.mxu0 %v645
    %3487 = vmatpush.bf16.msra.mxu0 %v641
    %3488 = vmatpush.bf16.msra.mxu0 %v637
    %3489 = vmatpush.bf16.msra.mxu0 %v633
    %3490 = vmatpush.bf16.msra.mxu0 %v629
    %3491 = vmatpush.bf16.msra.mxu0 %v625
    %3492 = vmatpush.bf16.msra.mxu0 %v621
    %3493 = vmatmul.bf16.gmra.mxu0 %v3305
    %v3494 = vpop.f32.mrf.mxu0
    %v3495 = vadd.f32 %v3312, %v3494
    %v3496 = vpop.f32.mrf.mxu0
    %v3497 = vadd.f32 %v3316, %v3496
    %3498 = vdwg.mxu0
    %3499 = vmatpush.bf16.msra.mxu0 %v681
    %3500 = vmatpush.bf16.msra.mxu0 %v677
    %3501 = vmatpush.bf16.msra.mxu0 %v673
    %3502 = vmatpush.bf16.msra.mxu0 %v669
    %3503 = vmatpush.bf16.msra.mxu0 %v665
    %3504 = vmatpush.bf16.msra.mxu0 %v661
    %3505 = vmatpush.bf16.msra.mxu0 %v657
    %3506 = vmatpush.bf16.msra.mxu0 %v653
    %3507 = vmatmul.bf16.gmra.mxu0 %v3306
    %v3508 = vpop.f32.mrf.mxu0
    %v3509 = vadd.f32 %v3495, %v3508
    %v3510 = vpop.f32.mrf.mxu0
    %v3511 = vadd.f32 %v3497, %v3510
    %3512 = vdwg.mxu0
    %3513 = vmatpush.bf16.msra.mxu0 %v713
    %3514 = vmatpush.bf16.msra.mxu0 %v709
    %3515 = vmatpush.bf16.msra.mxu0 %v705
    %3516 = vmatpush.bf16.msra.mxu0 %v701
    %3517 = vmatpush.bf16.msra.mxu0 %v697
    %3518 = vmatpush.bf16.msra.mxu0 %v693
    %3519 = vmatpush.bf16.msra.mxu0 %v689
    %3520 = vmatpush.bf16.msra.mxu0 %v685
    %3521 = vmatmul.bf16.gmra.mxu0 %v3307
    %v3522 = vpop.f32.mrf.mxu0
    %v3523 = vadd.f32 %v3509, %v3522
    %v3524 = vpop.f32.mrf.mxu0
    %v3525 = vadd.f32 %v3511, %v3524
    %3526 = vdwg.mxu0
    %3527 = vmatpush.bf16.msra.mxu0 %v745
    %3528 = vmatpush.bf16.msra.mxu0 %v741
    %3529 = vmatpush.bf16.msra.mxu0 %v737
    %3530 = vmatpush.bf16.msra.mxu0 %v733
    %3531 = vmatpush.bf16.msra.mxu0 %v729
    %3532 = vmatpush.bf16.msra.mxu0 %v725
    %3533 = vmatpush.bf16.msra.mxu0 %v721
    %3534 = vmatpush.bf16.msra.mxu0 %v717
    %3535 = vmatmul.bf16.gmra.mxu0 %v3308
    %v3536 = vpop.f32.mrf.mxu0
    %v3537 = vadd.f32 %v3523, %v3536
    %v3538 = vpop.f32.mrf.mxu0
    %v3539 = vadd.f32 %v3525, %v3538
    %3540 = vdwg.mxu0
    %v3541 = vmul.f32 %v3288, %v3369
    %v3542 = vmul.f32 %v3289, %v3425
    %v3543 = vmul.f32 %v3290, %v3481
    %v3544 = vmul.f32 %v3291, %v3537
    %v3545 = vmul.f32 %v3292, %v3371
    %v3546 = vmul.f32 %v3293, %v3427
    %v3547 = vmul.f32 %v3294, %v3483
    %v3548 = vmul.f32 %v3295, %v3539
    %v3549 = vadd.f32 %v3541, %v3542
    %v3550 = vadd.f32 %v3549, %v3543
    %v3551 = vadd.f32 %v3550, %v3544
    %3552 = vadd.xlane.f32.xlu0 %v3551
    %v3553 = vpop.xlane.xlu0 %3552
    %v3554 = vadd.f32 %v3545, %v3546
    %v3555 = vadd.f32 %v3554, %v3547
    %v3556 = vadd.f32 %v3555, %v3548
    %3557 = vadd.xlane.f32.xlu0 %v3556
    %v3558 = vpop.xlane.xlu0 %3557
    %v3559 = vrcp.pop %v3553
    %v3560 = vrcp.pop %v3558
    %v3561 = vmul.f32 %v3553, %v3559
    %v3562 = vmul.f32 %v3558, %v3560
    %v3563 = vsub.f32 2.0, %v3561
    %v3564 = vsub.f32 2.0, %v3562
    %v3565 = vmul.f32 %v3559, %v3563
    %v3566 = vmul.f32 %v3560, %v3564
    %v3567 = vmul.f32 %v3256, %v3565
    %v3568 = vmul.f32 %v3261, %v3566
    %s3569 = scalar_select %p3304, 1, 0
    %v3570 = vstv %s3569
    %vm3571 = vcmp.eq.s32.totalorder %v3570, 1
    %v3572 = vsel %vm3571, %v3567, 0.0
    %v3573 = vsel %vm3571, %v3568, 0.0
    %v3574 = vmul.f32 %v3572, %v3288
    %v3575 = vmul.f32 %v3572, %v3289
    %v3576 = vmul.f32 %v3572, %v3290
    %v3577 = vmul.f32 %v3572, %v3291
    %v3578 = vmul.f32 %v3573, %v3292
    %v3579 = vmul.f32 %v3573, %v3293
    %v3580 = vmul.f32 %v3573, %v3294
    %v3581 = vmul.f32 %v3573, %v3295
    %v3582 = vadd.f32 %v3220, %v3574
    %v3583 = vadd.f32 %v3221, %v3575
    %v3584 = vadd.f32 %v3222, %v3576
    %v3585 = vadd.f32 %v3223, %v3577
    %v3586 = vadd.f32 %v3224, %v3578
    %v3587 = vadd.f32 %v3225, %v3579
    %v3588 = vadd.f32 %v3226, %v3580
    %v3589 = vadd.f32 %v3227, %v3581
    %v3590 = vmul.f32 %v3572, %v3369
    %v3591 = vmul.f32 %v3572, %v3425
    %v3592 = vmul.f32 %v3572, %v3481
    %v3593 = vmul.f32 %v3572, %v3537
    %v3594 = vmul.f32 %v3573, %v3371
    %v3595 = vmul.f32 %v3573, %v3427
    %v3596 = vmul.f32 %v3573, %v3483
    %v3597 = vmul.f32 %v3573, %v3539
    %v3598 = vsub.f32 %v3236, %v3590
    %v3599 = vsub.f32 %v3237, %v3591
    %v3600 = vsub.f32 %v3238, %v3592
    %v3601 = vsub.f32 %v3239, %v3593
    %v3602 = vsub.f32 %v3240, %v3594
    %v3603 = vsub.f32 %v3241, %v3595
    %v3604 = vsub.f32 %v3242, %v3596
    %v3605 = vsub.f32 %v3243, %v3597
    %v3606 = vmul.f32 %v3598, %v3598
    %v3607 = vmul.f32 %v3599, %v3599
    %v3608 = vmul.f32 %v3600, %v3600
    %v3609 = vmul.f32 %v3601, %v3601
    %v3610 = vmul.f32 %v3602, %v3602
    %v3611 = vmul.f32 %v3603, %v3603
    %v3612 = vmul.f32 %v3604, %v3604
    %v3613 = vmul.f32 %v3605, %v3605
    %v3614 = vadd.f32 %v3606, %v3607
    %v3615 = vadd.f32 %v3614, %v3608
    %v3616 = vadd.f32 %v3615, %v3609
    %3617 = vadd.xlane.f32.xlu0 %v3616
    %v3618 = vpop.xlane.xlu0 %3617
    %v3619 = vadd.f32 %v3610, %v3611
    %v3620 = vadd.f32 %v3619, %v3612
    %v3621 = vadd.f32 %v3620, %v3613
    %3622 = vadd.xlane.f32.xlu0 %v3621
    %v3623 = vpop.xlane.xlu0 %3622
    %v3624 = vrcp.pop %v3256
    %v3625 = vrcp.pop %v3261
    %v3626 = vmul.f32 %v3256, %v3624
    %v3627 = vmul.f32 %v3261, %v3625
    %v3628 = vsub.f32 2.0, %v3626
    %v3629 = vsub.f32 2.0, %v3627
    %v3630 = vmul.f32 %v3624, %v3628
    %v3631 = vmul.f32 %v3625, %v3629
    %v3632 = vmul.f32 %v3618, %v3630
    %v3633 = vmul.f32 %v3623, %v3631
    %v3634 = vmul.f32 %v3632, %v3288
    %v3635 = vmul.f32 %v3632, %v3289
    %v3636 = vmul.f32 %v3632, %v3290
    %v3637 = vmul.f32 %v3632, %v3291
    %v3638 = vmul.f32 %v3633, %v3292
    %v3639 = vmul.f32 %v3633, %v3293
    %v3640 = vmul.f32 %v3633, %v3294
    %v3641 = vmul.f32 %v3633, %v3295
    %v3642 = vadd.f32 %v3634, %v3598
    %v3643 = vadd.f32 %v3635, %v3599
    %v3644 = vadd.f32 %v3636, %v3600
    %v3645 = vadd.f32 %v3637, %v3601
    %v3646 = vadd.f32 %v3638, %v3602
    %v3647 = vadd.f32 %v3639, %v3603
    %v3648 = vadd.f32 %v3640, %v3604
    %v3649 = vadd.f32 %v3641, %v3605
    %v3650 = vsel %vm3571, %v3642, %v3288
    %v3651 = vsel %vm3571, %v3643, %v3289
    %v3652 = vsel %vm3571, %v3644, %v3290
    %v3653 = vsel %vm3571, %v3645, %v3291
    %v3654 = vsel %vm3571, %v3646, %v3292
    %v3655 = vsel %vm3571, %v3647, %v3293
    %v3656 = vsel %vm3571, %v3648, %v3294
    %v3657 = vsel %vm3571, %v3649, %v3295
    %v3658 = vmax.f32 %v3618, %v3623
    %v3659 = vrot.slane %v3658, 4
    %v3660 = vmax.f32 %v3658, %v3659
    %v3661 = vrot.slane %v3660, 2
    %v3662 = vmax.f32 %v3660, %v3661
    %v3663 = vrot.slane %v3662, 1
    %v3664 = vmax.f32 %v3662, %v3663
    %s3665 = vtos %v3664
    %p3666 = scmp.ge.f32.partialorder %s3665, 1e-12
    %v3667 = vpack.c.bf16 %v3654, %v3650
    %v3668 = vpack.c.bf16 %v3655, %v3651
    %v3669 = vpack.c.bf16 %v3656, %v3652
    %v3670 = vpack.c.bf16 %v3657, %v3653
    %v3671 = vmul.f32 %v3650, 0.05
    %v3672 = vmul.f32 %v3651, 0.05
    %v3673 = vmul.f32 %v3652, 0.05
    %v3674 = vmul.f32 %v3653, 0.05
    %v3675 = vmul.f32 %v3654, 0.05
    %v3676 = vmul.f32 %v3655, 0.05
    %v3677 = vmul.f32 %v3656, 0.05
    %v3678 = vmul.f32 %v3657, 0.05
    %3679 = vmatpush.bf16.msra.mxu0 %v646
    %3680 = vmatpush.bf16.msra.mxu0 %v642
    %3681 = vmatpush.bf16.msra.mxu0 %v638
    %3682 = vmatpush.bf16.msra.mxu0 %v634
    %3683 = vmatpush.bf16.msra.mxu0 %v630
    %3684 = vmatpush.bf16.msra.mxu0 %v626
    %3685 = vmatpush.bf16.msra.mxu0 %v622
    %3686 = vmatpush.bf16.msra.mxu0 %v618
    %3687 = vmatmul.bf16.gmra.mxu0 %v3667
    %v3688 = vpop.f32.mrf.mxu0
    %v3689 = vadd.f32 %v3671, %v3688
    %v3690 = vpop.f32.mrf.mxu0
    %v3691 = vadd.f32 %v3675, %v3690
    %3692 = vdwg.mxu0
    %3693 = vmatpush.bf16.msra.mxu0 %v678
    %3694 = vmatpush.bf16.msra.mxu0 %v674
    %3695 = vmatpush.bf16.msra.mxu0 %v670
    %3696 = vmatpush.bf16.msra.mxu0 %v666
    %3697 = vmatpush.bf16.msra.mxu0 %v662
    %3698 = vmatpush.bf16.msra.mxu0 %v658
    %3699 = vmatpush.bf16.msra.mxu0 %v654
    %3700 = vmatpush.bf16.msra.mxu0 %v650
    %3701 = vmatmul.bf16.gmra.mxu0 %v3668
    %v3702 = vpop.f32.mrf.mxu0
    %v3703 = vadd.f32 %v3689, %v3702
    %v3704 = vpop.f32.mrf.mxu0
    %v3705 = vadd.f32 %v3691, %v3704
    %3706 = vdwg.mxu0
    %3707 = vmatpush.bf16.msra.mxu0 %v710
    %3708 = vmatpush.bf16.msra.mxu0 %v706
    %3709 = vmatpush.bf16.msra.mxu0 %v702
    %3710 = vmatpush.bf16.msra.mxu0 %v698
    %3711 = vmatpush.bf16.msra.mxu0 %v694
    %3712 = vmatpush.bf16.msra.mxu0 %v690
    %3713 = vmatpush.bf16.msra.mxu0 %v686
    %3714 = vmatpush.bf16.msra.mxu0 %v682
    %3715 = vmatmul.bf16.gmra.mxu0 %v3669
    %v3716 = vpop.f32.mrf.mxu0
    %v3717 = vadd.f32 %v3703, %v3716
    %v3718 = vpop.f32.mrf.mxu0
    %v3719 = vadd.f32 %v3705, %v3718
    %3720 = vdwg.mxu0
    %3721 = vmatpush.bf16.msra.mxu0 %v742
    %3722 = vmatpush.bf16.msra.mxu0 %v738
    %3723 = vmatpush.bf16.msra.mxu0 %v734
    %3724 = vmatpush.bf16.msra.mxu0 %v730
    %3725 = vmatpush.bf16.msra.mxu0 %v726
    %3726 = vmatpush.bf16.msra.mxu0 %v722
    %3727 = vmatpush.bf16.msra.mxu0 %v718
    %3728 = vmatpush.bf16.msra.mxu0 %v714
    %3729 = vmatmul.bf16.gmra.mxu0 %v3670
    %v3730 = vpop.f32.mrf.mxu0
    %v3731 = vadd.f32 %v3717, %v3730
    %v3732 = vpop.f32.mrf.mxu0
    %v3733 = vadd.f32 %v3719, %v3732
    %3734 = vdwg.mxu0
    %3735 = vmatpush.bf16.msra.mxu0 %v647
    %3736 = vmatpush.bf16.msra.mxu0 %v643
    %3737 = vmatpush.bf16.msra.mxu0 %v639
    %3738 = vmatpush.bf16.msra.mxu0 %v635
    %3739 = vmatpush.bf16.msra.mxu0 %v631
    %3740 = vmatpush.bf16.msra.mxu0 %v627
    %3741 = vmatpush.bf16.msra.mxu0 %v623
    %3742 = vmatpush.bf16.msra.mxu0 %v619
    %3743 = vmatmul.bf16.gmra.mxu0 %v3667
    %v3744 = vpop.f32.mrf.mxu0
    %v3745 = vadd.f32 %v3672, %v3744
    %v3746 = vpop.f32.mrf.mxu0
    %v3747 = vadd.f32 %v3676, %v3746
    %3748 = vdwg.mxu0
    %3749 = vmatpush.bf16.msra.mxu0 %v679
    %3750 = vmatpush.bf16.msra.mxu0 %v675
    %3751 = vmatpush.bf16.msra.mxu0 %v671
    %3752 = vmatpush.bf16.msra.mxu0 %v667
    %3753 = vmatpush.bf16.msra.mxu0 %v663
    %3754 = vmatpush.bf16.msra.mxu0 %v659
    %3755 = vmatpush.bf16.msra.mxu0 %v655
    %3756 = vmatpush.bf16.msra.mxu0 %v651
    %3757 = vmatmul.bf16.gmra.mxu0 %v3668
    %v3758 = vpop.f32.mrf.mxu0
    %v3759 = vadd.f32 %v3745, %v3758
    %v3760 = vpop.f32.mrf.mxu0
    %v3761 = vadd.f32 %v3747, %v3760
    %3762 = vdwg.mxu0
    %3763 = vmatpush.bf16.msra.mxu0 %v711
    %3764 = vmatpush.bf16.msra.mxu0 %v707
    %3765 = vmatpush.bf16.msra.mxu0 %v703
    %3766 = vmatpush.bf16.msra.mxu0 %v699
    %3767 = vmatpush.bf16.msra.mxu0 %v695
    %3768 = vmatpush.bf16.msra.mxu0 %v691
    %3769 = vmatpush.bf16.msra.mxu0 %v687
    %3770 = vmatpush.bf16.msra.mxu0 %v683
    %3771 = vmatmul.bf16.gmra.mxu0 %v3669
    %v3772 = vpop.f32.mrf.mxu0
    %v3773 = vadd.f32 %v3759, %v3772
    %v3774 = vpop.f32.mrf.mxu0
    %v3775 = vadd.f32 %v3761, %v3774
    %3776 = vdwg.mxu0
    %3777 = vmatpush.bf16.msra.mxu0 %v743
    %3778 = vmatpush.bf16.msra.mxu0 %v739
    %3779 = vmatpush.bf16.msra.mxu0 %v735
    %3780 = vmatpush.bf16.msra.mxu0 %v731
    %3781 = vmatpush.bf16.msra.mxu0 %v727
    %3782 = vmatpush.bf16.msra.mxu0 %v723
    %3783 = vmatpush.bf16.msra.mxu0 %v719
    %3784 = vmatpush.bf16.msra.mxu0 %v715
    %3785 = vmatmul.bf16.gmra.mxu0 %v3670
    %v3786 = vpop.f32.mrf.mxu0
    %v3787 = vadd.f32 %v3773, %v3786
    %v3788 = vpop.f32.mrf.mxu0
    %v3789 = vadd.f32 %v3775, %v3788
    %3790 = vdwg.mxu0
    %3791 = vmatpush.bf16.msra.mxu0 %v648
    %3792 = vmatpush.bf16.msra.mxu0 %v644
    %3793 = vmatpush.bf16.msra.mxu0 %v640
    %3794 = vmatpush.bf16.msra.mxu0 %v636
    %3795 = vmatpush.bf16.msra.mxu0 %v632
    %3796 = vmatpush.bf16.msra.mxu0 %v628
    %3797 = vmatpush.bf16.msra.mxu0 %v624
    %3798 = vmatpush.bf16.msra.mxu0 %v620
    %3799 = vmatmul.bf16.gmra.mxu0 %v3667
    %v3800 = vpop.f32.mrf.mxu0
    %v3801 = vadd.f32 %v3673, %v3800
    %v3802 = vpop.f32.mrf.mxu0
    %v3803 = vadd.f32 %v3677, %v3802
    %3804 = vdwg.mxu0
    %3805 = vmatpush.bf16.msra.mxu0 %v680
    %3806 = vmatpush.bf16.msra.mxu0 %v676
    %3807 = vmatpush.bf16.msra.mxu0 %v672
    %3808 = vmatpush.bf16.msra.mxu0 %v668
    %3809 = vmatpush.bf16.msra.mxu0 %v664
    %3810 = vmatpush.bf16.msra.mxu0 %v660
    %3811 = vmatpush.bf16.msra.mxu0 %v656
    %3812 = vmatpush.bf16.msra.mxu0 %v652
    %3813 = vmatmul.bf16.gmra.mxu0 %v3668
    %v3814 = vpop.f32.mrf.mxu0
    %v3815 = vadd.f32 %v3801, %v3814
    %v3816 = vpop.f32.mrf.mxu0
    %v3817 = vadd.f32 %v3803, %v3816
    %3818 = vdwg.mxu0
    %3819 = vmatpush.bf16.msra.mxu0 %v712
    %3820 = vmatpush.bf16.msra.mxu0 %v708
    %3821 = vmatpush.bf16.msra.mxu0 %v704
    %3822 = vmatpush.bf16.msra.mxu0 %v700
    %3823 = vmatpush.bf16.msra.mxu0 %v696
    %3824 = vmatpush.bf16.msra.mxu0 %v692
    %3825 = vmatpush.bf16.msra.mxu0 %v688
    %3826 = vmatpush.bf16.msra.mxu0 %v684
    %3827 = vmatmul.bf16.gmra.mxu0 %v3669
    %v3828 = vpop.f32.mrf.mxu0
    %v3829 = vadd.f32 %v3815, %v3828
    %v3830 = vpop.f32.mrf.mxu0
    %v3831 = vadd.f32 %v3817, %v3830
    %3832 = vdwg.mxu0
    %3833 = vmatpush.bf16.msra.mxu0 %v744
    %3834 = vmatpush.bf16.msra.mxu0 %v740
    %3835 = vmatpush.bf16.msra.mxu0 %v736
    %3836 = vmatpush.bf16.msra.mxu0 %v732
    %3837 = vmatpush.bf16.msra.mxu0 %v728
    %3838 = vmatpush.bf16.msra.mxu0 %v724
    %3839 = vmatpush.bf16.msra.mxu0 %v720
    %3840 = vmatpush.bf16.msra.mxu0 %v716
    %3841 = vmatmul.bf16.gmra.mxu0 %v3670
    %v3842 = vpop.f32.mrf.mxu0
    %v3843 = vadd.f32 %v3829, %v3842
    %v3844 = vpop.f32.mrf.mxu0
    %v3845 = vadd.f32 %v3831, %v3844
    %3846 = vdwg.mxu0
    %3847 = vmatpush.bf16.msra.mxu0 %v649
    %3848 = vmatpush.bf16.msra.mxu0 %v645
    %3849 = vmatpush.bf16.msra.mxu0 %v641
    %3850 = vmatpush.bf16.msra.mxu0 %v637
    %3851 = vmatpush.bf16.msra.mxu0 %v633
    %3852 = vmatpush.bf16.msra.mxu0 %v629
    %3853 = vmatpush.bf16.msra.mxu0 %v625
    %3854 = vmatpush.bf16.msra.mxu0 %v621
    %3855 = vmatmul.bf16.gmra.mxu0 %v3667
    %v3856 = vpop.f32.mrf.mxu0
    %v3857 = vadd.f32 %v3674, %v3856
    %v3858 = vpop.f32.mrf.mxu0
    %v3859 = vadd.f32 %v3678, %v3858
    %3860 = vdwg.mxu0
    %3861 = vmatpush.bf16.msra.mxu0 %v681
    %3862 = vmatpush.bf16.msra.mxu0 %v677
    %3863 = vmatpush.bf16.msra.mxu0 %v673
    %3864 = vmatpush.bf16.msra.mxu0 %v669
    %3865 = vmatpush.bf16.msra.mxu0 %v665
    %3866 = vmatpush.bf16.msra.mxu0 %v661
    %3867 = vmatpush.bf16.msra.mxu0 %v657
    %3868 = vmatpush.bf16.msra.mxu0 %v653
    %3869 = vmatmul.bf16.gmra.mxu0 %v3668
    %v3870 = vpop.f32.mrf.mxu0
    %v3871 = vadd.f32 %v3857, %v3870
    %v3872 = vpop.f32.mrf.mxu0
    %v3873 = vadd.f32 %v3859, %v3872
    %3874 = vdwg.mxu0
    %3875 = vmatpush.bf16.msra.mxu0 %v713
    %3876 = vmatpush.bf16.msra.mxu0 %v709
    %3877 = vmatpush.bf16.msra.mxu0 %v705
    %3878 = vmatpush.bf16.msra.mxu0 %v701
    %3879 = vmatpush.bf16.msra.mxu0 %v697
    %3880 = vmatpush.bf16.msra.mxu0 %v693
    %3881 = vmatpush.bf16.msra.mxu0 %v689
    %3882 = vmatpush.bf16.msra.mxu0 %v685
    %3883 = vmatmul.bf16.gmra.mxu0 %v3669
    %v3884 = vpop.f32.mrf.mxu0
    %v3885 = vadd.f32 %v3871, %v3884
    %v3886 = vpop.f32.mrf.mxu0
    %v3887 = vadd.f32 %v3873, %v3886
    %3888 = vdwg.mxu0
    %3889 = vmatpush.bf16.msra.mxu0 %v745
    %3890 = vmatpush.bf16.msra.mxu0 %v741
    %3891 = vmatpush.bf16.msra.mxu0 %v737
    %3892 = vmatpush.bf16.msra.mxu0 %v733
    %3893 = vmatpush.bf16.msra.mxu0 %v729
    %3894 = vmatpush.bf16.msra.mxu0 %v725
    %3895 = vmatpush.bf16.msra.mxu0 %v721
    %3896 = vmatpush.bf16.msra.mxu0 %v717
    %3897 = vmatmul.bf16.gmra.mxu0 %v3670
    %v3898 = vpop.f32.mrf.mxu0
    %v3899 = vadd.f32 %v3885, %v3898
    %v3900 = vpop.f32.mrf.mxu0
    %v3901 = vadd.f32 %v3887, %v3900
    %3902 = vdwg.mxu0
    %v3903 = vmul.f32 %v3650, %v3731
    %v3904 = vmul.f32 %v3651, %v3787
    %v3905 = vmul.f32 %v3652, %v3843
    %v3906 = vmul.f32 %v3653, %v3899
    %v3907 = vmul.f32 %v3654, %v3733
    %v3908 = vmul.f32 %v3655, %v3789
    %v3909 = vmul.f32 %v3656, %v3845
    %v3910 = vmul.f32 %v3657, %v3901
    %v3911 = vadd.f32 %v3903, %v3904
    %v3912 = vadd.f32 %v3911, %v3905
    %v3913 = vadd.f32 %v3912, %v3906
    %3914 = vadd.xlane.f32.xlu0 %v3913
    %v3915 = vpop.xlane.xlu0 %3914
    %v3916 = vadd.f32 %v3907, %v3908
    %v3917 = vadd.f32 %v3916, %v3909
    %v3918 = vadd.f32 %v3917, %v3910
    %3919 = vadd.xlane.f32.xlu0 %v3918
    %v3920 = vpop.xlane.xlu0 %3919
    %v3921 = vrcp.pop %v3915
    %v3922 = vrcp.pop %v3920
    %v3923 = vmul.f32 %v3915, %v3921
    %v3924 = vmul.f32 %v3920, %v3922
    %v3925 = vsub.f32 2.0, %v3923
    %v3926 = vsub.f32 2.0, %v3924
    %v3927 = vmul.f32 %v3921, %v3925
    %v3928 = vmul.f32 %v3922, %v3926
    %v3929 = vmul.f32 %v3618, %v3927
    %v3930 = vmul.f32 %v3623, %v3928
    %s3931 = scalar_select %p3666, 1, 0
    %v3932 = vstv %s3931
    %vm3933 = vcmp.eq.s32.totalorder %v3932, 1
    %v3934 = vsel %vm3933, %v3929, 0.0
    %v3935 = vsel %vm3933, %v3930, 0.0
    %v3936 = vmul.f32 %v3934, %v3650
    %v3937 = vmul.f32 %v3934, %v3651
    %v3938 = vmul.f32 %v3934, %v3652
    %v3939 = vmul.f32 %v3934, %v3653
    %v3940 = vmul.f32 %v3935, %v3654
    %v3941 = vmul.f32 %v3935, %v3655
    %v3942 = vmul.f32 %v3935, %v3656
    %v3943 = vmul.f32 %v3935, %v3657
    %v3944 = vadd.f32 %v3582, %v3936
    %v3945 = vadd.f32 %v3583, %v3937
    %v3946 = vadd.f32 %v3584, %v3938
    %v3947 = vadd.f32 %v3585, %v3939
    %v3948 = vadd.f32 %v3586, %v3940
    %v3949 = vadd.f32 %v3587, %v3941
    %v3950 = vadd.f32 %v3588, %v3942
    %v3951 = vadd.f32 %v3589, %v3943
    %v3952 = vmul.f32 %v3934, %v3731
    %v3953 = vmul.f32 %v3934, %v3787
    %v3954 = vmul.f32 %v3934, %v3843
    %v3955 = vmul.f32 %v3934, %v3899
    %v3956 = vmul.f32 %v3935, %v3733
    %v3957 = vmul.f32 %v3935, %v3789
    %v3958 = vmul.f32 %v3935, %v3845
    %v3959 = vmul.f32 %v3935, %v3901
    %v3960 = vsub.f32 %v3598, %v3952
    %v3961 = vsub.f32 %v3599, %v3953
    %v3962 = vsub.f32 %v3600, %v3954
    %v3963 = vsub.f32 %v3601, %v3955
    %v3964 = vsub.f32 %v3602, %v3956
    %v3965 = vsub.f32 %v3603, %v3957
    %v3966 = vsub.f32 %v3604, %v3958
    %v3967 = vsub.f32 %v3605, %v3959
    %v3968 = vmul.f32 %v3960, %v3960
    %v3969 = vmul.f32 %v3961, %v3961
    %v3970 = vmul.f32 %v3962, %v3962
    %v3971 = vmul.f32 %v3963, %v3963
    %v3972 = vmul.f32 %v3964, %v3964
    %v3973 = vmul.f32 %v3965, %v3965
    %v3974 = vmul.f32 %v3966, %v3966
    %v3975 = vmul.f32 %v3967, %v3967
    %v3976 = vadd.f32 %v3968, %v3969
    %v3977 = vadd.f32 %v3976, %v3970
    %v3978 = vadd.f32 %v3977, %v3971
    %3979 = vadd.xlane.f32.xlu0 %v3978
    %v3980 = vpop.xlane.xlu0 %3979
    %v3981 = vadd.f32 %v3972, %v3973
    %v3982 = vadd.f32 %v3981, %v3974
    %v3983 = vadd.f32 %v3982, %v3975
    %3984 = vadd.xlane.f32.xlu0 %v3983
    %v3985 = vpop.xlane.xlu0 %3984
    %v3986 = vrcp.pop %v3618
    %v3987 = vrcp.pop %v3623
    %v3988 = vmul.f32 %v3618, %v3986
    %v3989 = vmul.f32 %v3623, %v3987
    %v3990 = vsub.f32 2.0, %v3988
    %v3991 = vsub.f32 2.0, %v3989
    %v3992 = vmul.f32 %v3986, %v3990
    %v3993 = vmul.f32 %v3987, %v3991
    %v3994 = vmul.f32 %v3980, %v3992
    %v3995 = vmul.f32 %v3985, %v3993
    %v3996 = vmul.f32 %v3994, %v3650
    %v3997 = vmul.f32 %v3994, %v3651
    %v3998 = vmul.f32 %v3994, %v3652
    %v3999 = vmul.f32 %v3994, %v3653
    %v4000 = vmul.f32 %v3995, %v3654
    %v4001 = vmul.f32 %v3995, %v3655
    %v4002 = vmul.f32 %v3995, %v3656
    %v4003 = vmul.f32 %v3995, %v3657
    %v4004 = vadd.f32 %v3996, %v3960
    %v4005 = vadd.f32 %v3997, %v3961
    %v4006 = vadd.f32 %v3998, %v3962
    %v4007 = vadd.f32 %v3999, %v3963
    %v4008 = vadd.f32 %v4000, %v3964
    %v4009 = vadd.f32 %v4001, %v3965
    %v4010 = vadd.f32 %v4002, %v3966
    %v4011 = vadd.f32 %v4003, %v3967
    %v4012 = vsel %vm3933, %v4004, %v3650
    %v4013 = vsel %vm3933, %v4005, %v3651
    %v4014 = vsel %vm3933, %v4006, %v3652
    %v4015 = vsel %vm3933, %v4007, %v3653
    %v4016 = vsel %vm3933, %v4008, %v3654
    %v4017 = vsel %vm3933, %v4009, %v3655
    %v4018 = vsel %vm3933, %v4010, %v3656
    %v4019 = vsel %vm3933, %v4011, %v3657
    %v4020 = vmax.f32 %v3980, %v3985
    %v4021 = vrot.slane %v4020, 4
    %v4022 = vmax.f32 %v4020, %v4021
    %v4023 = vrot.slane %v4022, 2
    %v4024 = vmax.f32 %v4022, %v4023
    %v4025 = vrot.slane %v4024, 1
    %v4026 = vmax.f32 %v4024, %v4025
    %s4027 = vtos %v4026
    %p4028 = scmp.ge.f32.partialorder %s4027, 1e-12
    %v4029 = vpack.c.bf16 %v4016, %v4012
    %v4030 = vpack.c.bf16 %v4017, %v4013
    %v4031 = vpack.c.bf16 %v4018, %v4014
    %v4032 = vpack.c.bf16 %v4019, %v4015
    %v4033 = vmul.f32 %v4012, 0.05
    %v4034 = vmul.f32 %v4013, 0.05
    %v4035 = vmul.f32 %v4014, 0.05
    %v4036 = vmul.f32 %v4015, 0.05
    %v4037 = vmul.f32 %v4016, 0.05
    %v4038 = vmul.f32 %v4017, 0.05
    %v4039 = vmul.f32 %v4018, 0.05
    %v4040 = vmul.f32 %v4019, 0.05
    %4041 = vmatpush.bf16.msra.mxu0 %v646
    %4042 = vmatpush.bf16.msra.mxu0 %v642
    %4043 = vmatpush.bf16.msra.mxu0 %v638
    %4044 = vmatpush.bf16.msra.mxu0 %v634
    %4045 = vmatpush.bf16.msra.mxu0 %v630
    %4046 = vmatpush.bf16.msra.mxu0 %v626
    %4047 = vmatpush.bf16.msra.mxu0 %v622
    %4048 = vmatpush.bf16.msra.mxu0 %v618
    %4049 = vmatmul.bf16.gmra.mxu0 %v4029
    %v4050 = vpop.f32.mrf.mxu0
    %v4051 = vadd.f32 %v4033, %v4050
    %v4052 = vpop.f32.mrf.mxu0
    %v4053 = vadd.f32 %v4037, %v4052
    %4054 = vdwg.mxu0
    %4055 = vmatpush.bf16.msra.mxu0 %v678
    %4056 = vmatpush.bf16.msra.mxu0 %v674
    %4057 = vmatpush.bf16.msra.mxu0 %v670
    %4058 = vmatpush.bf16.msra.mxu0 %v666
    %4059 = vmatpush.bf16.msra.mxu0 %v662
    %4060 = vmatpush.bf16.msra.mxu0 %v658
    %4061 = vmatpush.bf16.msra.mxu0 %v654
    %4062 = vmatpush.bf16.msra.mxu0 %v650
    %4063 = vmatmul.bf16.gmra.mxu0 %v4030
    %v4064 = vpop.f32.mrf.mxu0
    %v4065 = vadd.f32 %v4051, %v4064
    %v4066 = vpop.f32.mrf.mxu0
    %v4067 = vadd.f32 %v4053, %v4066
    %4068 = vdwg.mxu0
    %4069 = vmatpush.bf16.msra.mxu0 %v710
    %4070 = vmatpush.bf16.msra.mxu0 %v706
    %4071 = vmatpush.bf16.msra.mxu0 %v702
    %4072 = vmatpush.bf16.msra.mxu0 %v698
    %4073 = vmatpush.bf16.msra.mxu0 %v694
    %4074 = vmatpush.bf16.msra.mxu0 %v690
    %4075 = vmatpush.bf16.msra.mxu0 %v686
    %4076 = vmatpush.bf16.msra.mxu0 %v682
    %4077 = vmatmul.bf16.gmra.mxu0 %v4031
    %v4078 = vpop.f32.mrf.mxu0
    %v4079 = vadd.f32 %v4065, %v4078
    %v4080 = vpop.f32.mrf.mxu0
    %v4081 = vadd.f32 %v4067, %v4080
    %4082 = vdwg.mxu0
    %4083 = vmatpush.bf16.msra.mxu0 %v742
    %4084 = vmatpush.bf16.msra.mxu0 %v738
    %4085 = vmatpush.bf16.msra.mxu0 %v734
    %4086 = vmatpush.bf16.msra.mxu0 %v730
    %4087 = vmatpush.bf16.msra.mxu0 %v726
    %4088 = vmatpush.bf16.msra.mxu0 %v722
    %4089 = vmatpush.bf16.msra.mxu0 %v718
    %4090 = vmatpush.bf16.msra.mxu0 %v714
    %4091 = vmatmul.bf16.gmra.mxu0 %v4032
    %v4092 = vpop.f32.mrf.mxu0
    %v4093 = vadd.f32 %v4079, %v4092
    %v4094 = vpop.f32.mrf.mxu0
    %v4095 = vadd.f32 %v4081, %v4094
    %4096 = vdwg.mxu0
    %4097 = vmatpush.bf16.msra.mxu0 %v647
    %4098 = vmatpush.bf16.msra.mxu0 %v643
    %4099 = vmatpush.bf16.msra.mxu0 %v639
    %4100 = vmatpush.bf16.msra.mxu0 %v635
    %4101 = vmatpush.bf16.msra.mxu0 %v631
    %4102 = vmatpush.bf16.msra.mxu0 %v627
    %4103 = vmatpush.bf16.msra.mxu0 %v623
    %4104 = vmatpush.bf16.msra.mxu0 %v619
    %4105 = vmatmul.bf16.gmra.mxu0 %v4029
    %v4106 = vpop.f32.mrf.mxu0
    %v4107 = vadd.f32 %v4034, %v4106
    %v4108 = vpop.f32.mrf.mxu0
    %v4109 = vadd.f32 %v4038, %v4108
    %4110 = vdwg.mxu0
    %4111 = vmatpush.bf16.msra.mxu0 %v679
    %4112 = vmatpush.bf16.msra.mxu0 %v675
    %4113 = vmatpush.bf16.msra.mxu0 %v671
    %4114 = vmatpush.bf16.msra.mxu0 %v667
    %4115 = vmatpush.bf16.msra.mxu0 %v663
    %4116 = vmatpush.bf16.msra.mxu0 %v659
    %4117 = vmatpush.bf16.msra.mxu0 %v655
    %4118 = vmatpush.bf16.msra.mxu0 %v651
    %4119 = vmatmul.bf16.gmra.mxu0 %v4030
    %v4120 = vpop.f32.mrf.mxu0
    %v4121 = vadd.f32 %v4107, %v4120
    %v4122 = vpop.f32.mrf.mxu0
    %v4123 = vadd.f32 %v4109, %v4122
    %4124 = vdwg.mxu0
    %4125 = vmatpush.bf16.msra.mxu0 %v711
    %4126 = vmatpush.bf16.msra.mxu0 %v707
    %4127 = vmatpush.bf16.msra.mxu0 %v703
    %4128 = vmatpush.bf16.msra.mxu0 %v699
    %4129 = vmatpush.bf16.msra.mxu0 %v695
    %4130 = vmatpush.bf16.msra.mxu0 %v691
    %4131 = vmatpush.bf16.msra.mxu0 %v687
    %4132 = vmatpush.bf16.msra.mxu0 %v683
    %4133 = vmatmul.bf16.gmra.mxu0 %v4031
    %v4134 = vpop.f32.mrf.mxu0
    %v4135 = vadd.f32 %v4121, %v4134
    %v4136 = vpop.f32.mrf.mxu0
    %v4137 = vadd.f32 %v4123, %v4136
    %4138 = vdwg.mxu0
    %4139 = vmatpush.bf16.msra.mxu0 %v743
    %4140 = vmatpush.bf16.msra.mxu0 %v739
    %4141 = vmatpush.bf16.msra.mxu0 %v735
    %4142 = vmatpush.bf16.msra.mxu0 %v731
    %4143 = vmatpush.bf16.msra.mxu0 %v727
    %4144 = vmatpush.bf16.msra.mxu0 %v723
    %4145 = vmatpush.bf16.msra.mxu0 %v719
    %4146 = vmatpush.bf16.msra.mxu0 %v715
    %4147 = vmatmul.bf16.gmra.mxu0 %v4032
    %v4148 = vpop.f32.mrf.mxu0
    %v4149 = vadd.f32 %v4135, %v4148
    %v4150 = vpop.f32.mrf.mxu0
    %v4151 = vadd.f32 %v4137, %v4150
    %4152 = vdwg.mxu0
    %4153 = vmatpush.bf16.msra.mxu0 %v648
    %4154 = vmatpush.bf16.msra.mxu0 %v644
    %4155 = vmatpush.bf16.msra.mxu0 %v640
    %4156 = vmatpush.bf16.msra.mxu0 %v636
    %4157 = vmatpush.bf16.msra.mxu0 %v632
    %4158 = vmatpush.bf16.msra.mxu0 %v628
    %4159 = vmatpush.bf16.msra.mxu0 %v624
    %4160 = vmatpush.bf16.msra.mxu0 %v620
    %4161 = vmatmul.bf16.gmra.mxu0 %v4029
    %v4162 = vpop.f32.mrf.mxu0
    %v4163 = vadd.f32 %v4035, %v4162
    %v4164 = vpop.f32.mrf.mxu0
    %v4165 = vadd.f32 %v4039, %v4164
    %4166 = vdwg.mxu0
    %4167 = vmatpush.bf16.msra.mxu0 %v680
    %4168 = vmatpush.bf16.msra.mxu0 %v676
    %4169 = vmatpush.bf16.msra.mxu0 %v672
    %4170 = vmatpush.bf16.msra.mxu0 %v668
    %4171 = vmatpush.bf16.msra.mxu0 %v664
    %4172 = vmatpush.bf16.msra.mxu0 %v660
    %4173 = vmatpush.bf16.msra.mxu0 %v656
    %4174 = vmatpush.bf16.msra.mxu0 %v652
    %4175 = vmatmul.bf16.gmra.mxu0 %v4030
    %v4176 = vpop.f32.mrf.mxu0
    %v4177 = vadd.f32 %v4163, %v4176
    %v4178 = vpop.f32.mrf.mxu0
    %v4179 = vadd.f32 %v4165, %v4178
    %4180 = vdwg.mxu0
    %4181 = vmatpush.bf16.msra.mxu0 %v712
    %4182 = vmatpush.bf16.msra.mxu0 %v708
    %4183 = vmatpush.bf16.msra.mxu0 %v704
    %4184 = vmatpush.bf16.msra.mxu0 %v700
    %4185 = vmatpush.bf16.msra.mxu0 %v696
    %4186 = vmatpush.bf16.msra.mxu0 %v692
    %4187 = vmatpush.bf16.msra.mxu0 %v688
    %4188 = vmatpush.bf16.msra.mxu0 %v684
    %4189 = vmatmul.bf16.gmra.mxu0 %v4031
    %v4190 = vpop.f32.mrf.mxu0
    %v4191 = vadd.f32 %v4177, %v4190
    %v4192 = vpop.f32.mrf.mxu0
    %v4193 = vadd.f32 %v4179, %v4192
    %4194 = vdwg.mxu0
    %4195 = vmatpush.bf16.msra.mxu0 %v744
    %4196 = vmatpush.bf16.msra.mxu0 %v740
    %4197 = vmatpush.bf16.msra.mxu0 %v736
    %4198 = vmatpush.bf16.msra.mxu0 %v732
    %4199 = vmatpush.bf16.msra.mxu0 %v728
    %4200 = vmatpush.bf16.msra.mxu0 %v724
    %4201 = vmatpush.bf16.msra.mxu0 %v720
    %4202 = vmatpush.bf16.msra.mxu0 %v716
    %4203 = vmatmul.bf16.gmra.mxu0 %v4032
    %v4204 = vpop.f32.mrf.mxu0
    %v4205 = vadd.f32 %v4191, %v4204
    %v4206 = vpop.f32.mrf.mxu0
    %v4207 = vadd.f32 %v4193, %v4206
    %4208 = vdwg.mxu0
    %4209 = vmatpush.bf16.msra.mxu0 %v649
    %4210 = vmatpush.bf16.msra.mxu0 %v645
    %4211 = vmatpush.bf16.msra.mxu0 %v641
    %4212 = vmatpush.bf16.msra.mxu0 %v637
    %4213 = vmatpush.bf16.msra.mxu0 %v633
    %4214 = vmatpush.bf16.msra.mxu0 %v629
    %4215 = vmatpush.bf16.msra.mxu0 %v625
    %4216 = vmatpush.bf16.msra.mxu0 %v621
    %4217 = vmatmul.bf16.gmra.mxu0 %v4029
    %v4218 = vpop.f32.mrf.mxu0
    %v4219 = vadd.f32 %v4036, %v4218
    %v4220 = vpop.f32.mrf.mxu0
    %v4221 = vadd.f32 %v4040, %v4220
    %4222 = vdwg.mxu0
    %4223 = vmatpush.bf16.msra.mxu0 %v681
    %4224 = vmatpush.bf16.msra.mxu0 %v677
    %4225 = vmatpush.bf16.msra.mxu0 %v673
    %4226 = vmatpush.bf16.msra.mxu0 %v669
    %4227 = vmatpush.bf16.msra.mxu0 %v665
    %4228 = vmatpush.bf16.msra.mxu0 %v661
    %4229 = vmatpush.bf16.msra.mxu0 %v657
    %4230 = vmatpush.bf16.msra.mxu0 %v653
    %4231 = vmatmul.bf16.gmra.mxu0 %v4030
    %v4232 = vpop.f32.mrf.mxu0
    %v4233 = vadd.f32 %v4219, %v4232
    %v4234 = vpop.f32.mrf.mxu0
    %v4235 = vadd.f32 %v4221, %v4234
    %4236 = vdwg.mxu0
    %4237 = vmatpush.bf16.msra.mxu0 %v713
    %4238 = vmatpush.bf16.msra.mxu0 %v709
    %4239 = vmatpush.bf16.msra.mxu0 %v705
    %4240 = vmatpush.bf16.msra.mxu0 %v701
    %4241 = vmatpush.bf16.msra.mxu0 %v697
    %4242 = vmatpush.bf16.msra.mxu0 %v693
    %4243 = vmatpush.bf16.msra.mxu0 %v689
    %4244 = vmatpush.bf16.msra.mxu0 %v685
    %4245 = vmatmul.bf16.gmra.mxu0 %v4031
    %v4246 = vpop.f32.mrf.mxu0
    %v4247 = vadd.f32 %v4233, %v4246
    %v4248 = vpop.f32.mrf.mxu0
    %v4249 = vadd.f32 %v4235, %v4248
    %4250 = vdwg.mxu0
    %4251 = vmatpush.bf16.msra.mxu0 %v745
    %4252 = vmatpush.bf16.msra.mxu0 %v741
    %4253 = vmatpush.bf16.msra.mxu0 %v737
    %4254 = vmatpush.bf16.msra.mxu0 %v733
    %4255 = vmatpush.bf16.msra.mxu0 %v729
    %4256 = vmatpush.bf16.msra.mxu0 %v725
    %4257 = vmatpush.bf16.msra.mxu0 %v721
    %4258 = vmatpush.bf16.msra.mxu0 %v717
    %4259 = vmatmul.bf16.gmra.mxu0 %v4032
    %v4260 = vpop.f32.mrf.mxu0
    %v4261 = vadd.f32 %v4247, %v4260
    %v4262 = vpop.f32.mrf.mxu0
    %v4263 = vadd.f32 %v4249, %v4262
    %4264 = vdwg.mxu0
    %v4265 = vmul.f32 %v4012, %v4093
    %v4266 = vmul.f32 %v4013, %v4149
    %v4267 = vmul.f32 %v4014, %v4205
    %v4268 = vmul.f32 %v4015, %v4261
    %v4269 = vmul.f32 %v4016, %v4095
    %v4270 = vmul.f32 %v4017, %v4151
    %v4271 = vmul.f32 %v4018, %v4207
    %v4272 = vmul.f32 %v4019, %v4263
    %v4273 = vadd.f32 %v4265, %v4266
    %v4274 = vadd.f32 %v4273, %v4267
    %v4275 = vadd.f32 %v4274, %v4268
    %4276 = vadd.xlane.f32.xlu0 %v4275
    %v4277 = vpop.xlane.xlu0 %4276
    %v4278 = vadd.f32 %v4269, %v4270
    %v4279 = vadd.f32 %v4278, %v4271
    %v4280 = vadd.f32 %v4279, %v4272
    %4281 = vadd.xlane.f32.xlu0 %v4280
    %v4282 = vpop.xlane.xlu0 %4281
    %v4283 = vrcp.pop %v4277
    %v4284 = vrcp.pop %v4282
    %v4285 = vmul.f32 %v4277, %v4283
    %v4286 = vmul.f32 %v4282, %v4284
    %v4287 = vsub.f32 2.0, %v4285
    %v4288 = vsub.f32 2.0, %v4286
    %v4289 = vmul.f32 %v4283, %v4287
    %v4290 = vmul.f32 %v4284, %v4288
    %v4291 = vmul.f32 %v3980, %v4289
    %v4292 = vmul.f32 %v3985, %v4290
    %s4293 = scalar_select %p4028, 1, 0
    %v4294 = vstv %s4293
    %vm4295 = vcmp.eq.s32.totalorder %v4294, 1
    %v4296 = vsel %vm4295, %v4291, 0.0
    %v4297 = vsel %vm4295, %v4292, 0.0
    %v4298 = vmul.f32 %v4296, %v4012
    %v4299 = vmul.f32 %v4296, %v4013
    %v4300 = vmul.f32 %v4296, %v4014
    %v4301 = vmul.f32 %v4296, %v4015
    %v4302 = vmul.f32 %v4297, %v4016
    %v4303 = vmul.f32 %v4297, %v4017
    %v4304 = vmul.f32 %v4297, %v4018
    %v4305 = vmul.f32 %v4297, %v4019
    %v4306 = vadd.f32 %v3944, %v4298
    %v4307 = vadd.f32 %v3945, %v4299
    %v4308 = vadd.f32 %v3946, %v4300
    %v4309 = vadd.f32 %v3947, %v4301
    %v4310 = vadd.f32 %v3948, %v4302
    %v4311 = vadd.f32 %v3949, %v4303
    %v4312 = vadd.f32 %v3950, %v4304
    %v4313 = vadd.f32 %v3951, %v4305
    %v4314 = vmul.f32 %v4296, %v4093
    %v4315 = vmul.f32 %v4296, %v4149
    %v4316 = vmul.f32 %v4296, %v4205
    %v4317 = vmul.f32 %v4296, %v4261
    %v4318 = vmul.f32 %v4297, %v4095
    %v4319 = vmul.f32 %v4297, %v4151
    %v4320 = vmul.f32 %v4297, %v4207
    %v4321 = vmul.f32 %v4297, %v4263
    %v4322 = vsub.f32 %v3960, %v4314
    %v4323 = vsub.f32 %v3961, %v4315
    %v4324 = vsub.f32 %v3962, %v4316
    %v4325 = vsub.f32 %v3963, %v4317
    %v4326 = vsub.f32 %v3964, %v4318
    %v4327 = vsub.f32 %v3965, %v4319
    %v4328 = vsub.f32 %v3966, %v4320
    %v4329 = vsub.f32 %v3967, %v4321
    %v4330 = vmul.f32 %v4322, %v4322
    %v4331 = vmul.f32 %v4323, %v4323
    %v4332 = vmul.f32 %v4324, %v4324
    %v4333 = vmul.f32 %v4325, %v4325
    %v4334 = vmul.f32 %v4326, %v4326
    %v4335 = vmul.f32 %v4327, %v4327
    %v4336 = vmul.f32 %v4328, %v4328
    %v4337 = vmul.f32 %v4329, %v4329
    %v4338 = vadd.f32 %v4330, %v4331
    %v4339 = vadd.f32 %v4338, %v4332
    %v4340 = vadd.f32 %v4339, %v4333
    %4341 = vadd.xlane.f32.xlu0 %v4340
    %v4342 = vpop.xlane.xlu0 %4341
    %v4343 = vadd.f32 %v4334, %v4335
    %v4344 = vadd.f32 %v4343, %v4336
    %v4345 = vadd.f32 %v4344, %v4337
    %4346 = vadd.xlane.f32.xlu0 %v4345
    %v4347 = vpop.xlane.xlu0 %4346
    %v4348 = vrcp.pop %v3980
    %v4349 = vrcp.pop %v3985
    %v4350 = vmul.f32 %v3980, %v4348
    %v4351 = vmul.f32 %v3985, %v4349
    %v4352 = vsub.f32 2.0, %v4350
    %v4353 = vsub.f32 2.0, %v4351
    %v4354 = vmul.f32 %v4348, %v4352
    %v4355 = vmul.f32 %v4349, %v4353
    %v4356 = vmul.f32 %v4342, %v4354
    %v4357 = vmul.f32 %v4347, %v4355
    %v4358 = vmul.f32 %v4356, %v4012
    %v4359 = vmul.f32 %v4356, %v4013
    %v4360 = vmul.f32 %v4356, %v4014
    %v4361 = vmul.f32 %v4356, %v4015
    %v4362 = vmul.f32 %v4357, %v4016
    %v4363 = vmul.f32 %v4357, %v4017
    %v4364 = vmul.f32 %v4357, %v4018
    %v4365 = vmul.f32 %v4357, %v4019
    %v4366 = vadd.f32 %v4358, %v4322
    %v4367 = vadd.f32 %v4359, %v4323
    %v4368 = vadd.f32 %v4360, %v4324
    %v4369 = vadd.f32 %v4361, %v4325
    %v4370 = vadd.f32 %v4362, %v4326
    %v4371 = vadd.f32 %v4363, %v4327
    %v4372 = vadd.f32 %v4364, %v4328
    %v4373 = vadd.f32 %v4365, %v4329
    %v4374 = vsel %vm4295, %v4366, %v4012
    %v4375 = vsel %vm4295, %v4367, %v4013
    %v4376 = vsel %vm4295, %v4368, %v4014
    %v4377 = vsel %vm4295, %v4369, %v4015
    %v4378 = vsel %vm4295, %v4370, %v4016
    %v4379 = vsel %vm4295, %v4371, %v4017
    %v4380 = vsel %vm4295, %v4372, %v4018
    %v4381 = vsel %vm4295, %v4373, %v4019
    %v4382 = vmax.f32 %v4342, %v4347
    %v4383 = vrot.slane %v4382, 4
    %v4384 = vmax.f32 %v4382, %v4383
    %v4385 = vrot.slane %v4384, 2
    %v4386 = vmax.f32 %v4384, %v4385
    %v4387 = vrot.slane %v4386, 1
    %v4388 = vmax.f32 %v4386, %v4387
    %s4389 = vtos %v4388
    %p4390 = scmp.ge.f32.partialorder %s4389, 1e-12
    %v4391 = vpack.c.bf16 %v4378, %v4374
    %v4392 = vpack.c.bf16 %v4379, %v4375
    %v4393 = vpack.c.bf16 %v4380, %v4376
    %v4394 = vpack.c.bf16 %v4381, %v4377
    %v4395 = vmul.f32 %v4374, 0.05
    %v4396 = vmul.f32 %v4375, 0.05
    %v4397 = vmul.f32 %v4376, 0.05
    %v4398 = vmul.f32 %v4377, 0.05
    %v4399 = vmul.f32 %v4378, 0.05
    %v4400 = vmul.f32 %v4379, 0.05
    %v4401 = vmul.f32 %v4380, 0.05
    %v4402 = vmul.f32 %v4381, 0.05
    %4403 = vmatpush.bf16.msra.mxu0 %v646
    %4404 = vmatpush.bf16.msra.mxu0 %v642
    %4405 = vmatpush.bf16.msra.mxu0 %v638
    %4406 = vmatpush.bf16.msra.mxu0 %v634
    %4407 = vmatpush.bf16.msra.mxu0 %v630
    %4408 = vmatpush.bf16.msra.mxu0 %v626
    %4409 = vmatpush.bf16.msra.mxu0 %v622
    %4410 = vmatpush.bf16.msra.mxu0 %v618
    %4411 = vmatmul.bf16.gmra.mxu0 %v4391
    %v4412 = vpop.f32.mrf.mxu0
    %v4413 = vadd.f32 %v4395, %v4412
    %v4414 = vpop.f32.mrf.mxu0
    %v4415 = vadd.f32 %v4399, %v4414
    %4416 = vdwg.mxu0
    %4417 = vmatpush.bf16.msra.mxu0 %v678
    %4418 = vmatpush.bf16.msra.mxu0 %v674
    %4419 = vmatpush.bf16.msra.mxu0 %v670
    %4420 = vmatpush.bf16.msra.mxu0 %v666
    %4421 = vmatpush.bf16.msra.mxu0 %v662
    %4422 = vmatpush.bf16.msra.mxu0 %v658
    %4423 = vmatpush.bf16.msra.mxu0 %v654
    %4424 = vmatpush.bf16.msra.mxu0 %v650
    %4425 = vmatmul.bf16.gmra.mxu0 %v4392
    %v4426 = vpop.f32.mrf.mxu0
    %v4427 = vadd.f32 %v4413, %v4426
    %v4428 = vpop.f32.mrf.mxu0
    %v4429 = vadd.f32 %v4415, %v4428
    %4430 = vdwg.mxu0
    %4431 = vmatpush.bf16.msra.mxu0 %v710
    %4432 = vmatpush.bf16.msra.mxu0 %v706
    %4433 = vmatpush.bf16.msra.mxu0 %v702
    %4434 = vmatpush.bf16.msra.mxu0 %v698
    %4435 = vmatpush.bf16.msra.mxu0 %v694
    %4436 = vmatpush.bf16.msra.mxu0 %v690
    %4437 = vmatpush.bf16.msra.mxu0 %v686
    %4438 = vmatpush.bf16.msra.mxu0 %v682
    %4439 = vmatmul.bf16.gmra.mxu0 %v4393
    %v4440 = vpop.f32.mrf.mxu0
    %v4441 = vadd.f32 %v4427, %v4440
    %v4442 = vpop.f32.mrf.mxu0
    %v4443 = vadd.f32 %v4429, %v4442
    %4444 = vdwg.mxu0
    %4445 = vmatpush.bf16.msra.mxu0 %v742
    %4446 = vmatpush.bf16.msra.mxu0 %v738
    %4447 = vmatpush.bf16.msra.mxu0 %v734
    %4448 = vmatpush.bf16.msra.mxu0 %v730
    %4449 = vmatpush.bf16.msra.mxu0 %v726
    %4450 = vmatpush.bf16.msra.mxu0 %v722
    %4451 = vmatpush.bf16.msra.mxu0 %v718
    %4452 = vmatpush.bf16.msra.mxu0 %v714
    %4453 = vmatmul.bf16.gmra.mxu0 %v4394
    %v4454 = vpop.f32.mrf.mxu0
    %v4455 = vadd.f32 %v4441, %v4454
    %v4456 = vpop.f32.mrf.mxu0
    %v4457 = vadd.f32 %v4443, %v4456
    %4458 = vdwg.mxu0
    %4459 = vmatpush.bf16.msra.mxu0 %v647
    %4460 = vmatpush.bf16.msra.mxu0 %v643
    %4461 = vmatpush.bf16.msra.mxu0 %v639
    %4462 = vmatpush.bf16.msra.mxu0 %v635
    %4463 = vmatpush.bf16.msra.mxu0 %v631
    %4464 = vmatpush.bf16.msra.mxu0 %v627
    %4465 = vmatpush.bf16.msra.mxu0 %v623
    %4466 = vmatpush.bf16.msra.mxu0 %v619
    %4467 = vmatmul.bf16.gmra.mxu0 %v4391
    %v4468 = vpop.f32.mrf.mxu0
    %v4469 = vadd.f32 %v4396, %v4468
    %v4470 = vpop.f32.mrf.mxu0
    %v4471 = vadd.f32 %v4400, %v4470
    %4472 = vdwg.mxu0
    %4473 = vmatpush.bf16.msra.mxu0 %v679
    %4474 = vmatpush.bf16.msra.mxu0 %v675
    %4475 = vmatpush.bf16.msra.mxu0 %v671
    %4476 = vmatpush.bf16.msra.mxu0 %v667
    %4477 = vmatpush.bf16.msra.mxu0 %v663
    %4478 = vmatpush.bf16.msra.mxu0 %v659
    %4479 = vmatpush.bf16.msra.mxu0 %v655
    %4480 = vmatpush.bf16.msra.mxu0 %v651
    %4481 = vmatmul.bf16.gmra.mxu0 %v4392
    %v4482 = vpop.f32.mrf.mxu0
    %v4483 = vadd.f32 %v4469, %v4482
    %v4484 = vpop.f32.mrf.mxu0
    %v4485 = vadd.f32 %v4471, %v4484
    %4486 = vdwg.mxu0
    %4487 = vmatpush.bf16.msra.mxu0 %v711
    %4488 = vmatpush.bf16.msra.mxu0 %v707
    %4489 = vmatpush.bf16.msra.mxu0 %v703
    %4490 = vmatpush.bf16.msra.mxu0 %v699
    %4491 = vmatpush.bf16.msra.mxu0 %v695
    %4492 = vmatpush.bf16.msra.mxu0 %v691
    %4493 = vmatpush.bf16.msra.mxu0 %v687
    %4494 = vmatpush.bf16.msra.mxu0 %v683
    %4495 = vmatmul.bf16.gmra.mxu0 %v4393
    %v4496 = vpop.f32.mrf.mxu0
    %v4497 = vadd.f32 %v4483, %v4496
    %v4498 = vpop.f32.mrf.mxu0
    %v4499 = vadd.f32 %v4485, %v4498
    %4500 = vdwg.mxu0
    %4501 = vmatpush.bf16.msra.mxu0 %v743
    %4502 = vmatpush.bf16.msra.mxu0 %v739
    %4503 = vmatpush.bf16.msra.mxu0 %v735
    %4504 = vmatpush.bf16.msra.mxu0 %v731
    %4505 = vmatpush.bf16.msra.mxu0 %v727
    %4506 = vmatpush.bf16.msra.mxu0 %v723
    %4507 = vmatpush.bf16.msra.mxu0 %v719
    %4508 = vmatpush.bf16.msra.mxu0 %v715
    %4509 = vmatmul.bf16.gmra.mxu0 %v4394
    %v4510 = vpop.f32.mrf.mxu0
    %v4511 = vadd.f32 %v4497, %v4510
    %v4512 = vpop.f32.mrf.mxu0
    %v4513 = vadd.f32 %v4499, %v4512
    %4514 = vdwg.mxu0
    %4515 = vmatpush.bf16.msra.mxu0 %v648
    %4516 = vmatpush.bf16.msra.mxu0 %v644
    %4517 = vmatpush.bf16.msra.mxu0 %v640
    %4518 = vmatpush.bf16.msra.mxu0 %v636
    %4519 = vmatpush.bf16.msra.mxu0 %v632
    %4520 = vmatpush.bf16.msra.mxu0 %v628
    %4521 = vmatpush.bf16.msra.mxu0 %v624
    %4522 = vmatpush.bf16.msra.mxu0 %v620
    %4523 = vmatmul.bf16.gmra.mxu0 %v4391
    %v4524 = vpop.f32.mrf.mxu0
    %v4525 = vadd.f32 %v4397, %v4524
    %v4526 = vpop.f32.mrf.mxu0
    %v4527 = vadd.f32 %v4401, %v4526
    %4528 = vdwg.mxu0
    %4529 = vmatpush.bf16.msra.mxu0 %v680
    %4530 = vmatpush.bf16.msra.mxu0 %v676
    %4531 = vmatpush.bf16.msra.mxu0 %v672
    %4532 = vmatpush.bf16.msra.mxu0 %v668
    %4533 = vmatpush.bf16.msra.mxu0 %v664
    %4534 = vmatpush.bf16.msra.mxu0 %v660
    %4535 = vmatpush.bf16.msra.mxu0 %v656
    %4536 = vmatpush.bf16.msra.mxu0 %v652
    %4537 = vmatmul.bf16.gmra.mxu0 %v4392
    %v4538 = vpop.f32.mrf.mxu0
    %v4539 = vadd.f32 %v4525, %v4538
    %v4540 = vpop.f32.mrf.mxu0
    %v4541 = vadd.f32 %v4527, %v4540
    %4542 = vdwg.mxu0
    %4543 = vmatpush.bf16.msra.mxu0 %v712
    %4544 = vmatpush.bf16.msra.mxu0 %v708
    %4545 = vmatpush.bf16.msra.mxu0 %v704
    %4546 = vmatpush.bf16.msra.mxu0 %v700
    %4547 = vmatpush.bf16.msra.mxu0 %v696
    %4548 = vmatpush.bf16.msra.mxu0 %v692
    %4549 = vmatpush.bf16.msra.mxu0 %v688
    %4550 = vmatpush.bf16.msra.mxu0 %v684
    %4551 = vmatmul.bf16.gmra.mxu0 %v4393
    %v4552 = vpop.f32.mrf.mxu0
    %v4553 = vadd.f32 %v4539, %v4552
    %v4554 = vpop.f32.mrf.mxu0
    %v4555 = vadd.f32 %v4541, %v4554
    %4556 = vdwg.mxu0
    %4557 = vmatpush.bf16.msra.mxu0 %v744
    %4558 = vmatpush.bf16.msra.mxu0 %v740
    %4559 = vmatpush.bf16.msra.mxu0 %v736
    %4560 = vmatpush.bf16.msra.mxu0 %v732
    %4561 = vmatpush.bf16.msra.mxu0 %v728
    %4562 = vmatpush.bf16.msra.mxu0 %v724
    %4563 = vmatpush.bf16.msra.mxu0 %v720
    %4564 = vmatpush.bf16.msra.mxu0 %v716
    %4565 = vmatmul.bf16.gmra.mxu0 %v4394
    %v4566 = vpop.f32.mrf.mxu0
    %v4567 = vadd.f32 %v4553, %v4566
    %v4568 = vpop.f32.mrf.mxu0
    %v4569 = vadd.f32 %v4555, %v4568
    %4570 = vdwg.mxu0
    %4571 = vmatpush.bf16.msra.mxu0 %v649
    %4572 = vmatpush.bf16.msra.mxu0 %v645
    %4573 = vmatpush.bf16.msra.mxu0 %v641
    %4574 = vmatpush.bf16.msra.mxu0 %v637
    %4575 = vmatpush.bf16.msra.mxu0 %v633
    %4576 = vmatpush.bf16.msra.mxu0 %v629
    %4577 = vmatpush.bf16.msra.mxu0 %v625
    %4578 = vmatpush.bf16.msra.mxu0 %v621
    %4579 = vmatmul.bf16.gmra.mxu0 %v4391
    %v4580 = vpop.f32.mrf.mxu0
    %v4581 = vadd.f32 %v4398, %v4580
    %v4582 = vpop.f32.mrf.mxu0
    %v4583 = vadd.f32 %v4402, %v4582
    %4584 = vdwg.mxu0
    %4585 = vmatpush.bf16.msra.mxu0 %v681
    %4586 = vmatpush.bf16.msra.mxu0 %v677
    %4587 = vmatpush.bf16.msra.mxu0 %v673
    %4588 = vmatpush.bf16.msra.mxu0 %v669
    %4589 = vmatpush.bf16.msra.mxu0 %v665
    %4590 = vmatpush.bf16.msra.mxu0 %v661
    %4591 = vmatpush.bf16.msra.mxu0 %v657
    %4592 = vmatpush.bf16.msra.mxu0 %v653
    %4593 = vmatmul.bf16.gmra.mxu0 %v4392
    %v4594 = vpop.f32.mrf.mxu0
    %v4595 = vadd.f32 %v4581, %v4594
    %v4596 = vpop.f32.mrf.mxu0
    %v4597 = vadd.f32 %v4583, %v4596
    %4598 = vdwg.mxu0
    %4599 = vmatpush.bf16.msra.mxu0 %v713
    %4600 = vmatpush.bf16.msra.mxu0 %v709
    %4601 = vmatpush.bf16.msra.mxu0 %v705
    %4602 = vmatpush.bf16.msra.mxu0 %v701
    %4603 = vmatpush.bf16.msra.mxu0 %v697
    %4604 = vmatpush.bf16.msra.mxu0 %v693
    %4605 = vmatpush.bf16.msra.mxu0 %v689
    %4606 = vmatpush.bf16.msra.mxu0 %v685
    %4607 = vmatmul.bf16.gmra.mxu0 %v4393
    %v4608 = vpop.f32.mrf.mxu0
    %v4609 = vadd.f32 %v4595, %v4608
    %v4610 = vpop.f32.mrf.mxu0
    %v4611 = vadd.f32 %v4597, %v4610
    %4612 = vdwg.mxu0
    %4613 = vmatpush.bf16.msra.mxu0 %v745
    %4614 = vmatpush.bf16.msra.mxu0 %v741
    %4615 = vmatpush.bf16.msra.mxu0 %v737
    %4616 = vmatpush.bf16.msra.mxu0 %v733
    %4617 = vmatpush.bf16.msra.mxu0 %v729
    %4618 = vmatpush.bf16.msra.mxu0 %v725
    %4619 = vmatpush.bf16.msra.mxu0 %v721
    %4620 = vmatpush.bf16.msra.mxu0 %v717
    %4621 = vmatmul.bf16.gmra.mxu0 %v4394
    %v4622 = vpop.f32.mrf.mxu0
    %v4623 = vadd.f32 %v4609, %v4622
    %v4624 = vpop.f32.mrf.mxu0
    %v4625 = vadd.f32 %v4611, %v4624
    %4626 = vdwg.mxu0
    %v4627 = vmul.f32 %v4374, %v4455
    %v4628 = vmul.f32 %v4375, %v4511
    %v4629 = vmul.f32 %v4376, %v4567
    %v4630 = vmul.f32 %v4377, %v4623
    %v4631 = vmul.f32 %v4378, %v4457
    %v4632 = vmul.f32 %v4379, %v4513
    %v4633 = vmul.f32 %v4380, %v4569
    %v4634 = vmul.f32 %v4381, %v4625
    %v4635 = vadd.f32 %v4627, %v4628
    %v4636 = vadd.f32 %v4635, %v4629
    %v4637 = vadd.f32 %v4636, %v4630
    %4638 = vadd.xlane.f32.xlu0 %v4637
    %v4639 = vpop.xlane.xlu0 %4638
    %v4640 = vadd.f32 %v4631, %v4632
    %v4641 = vadd.f32 %v4640, %v4633
    %v4642 = vadd.f32 %v4641, %v4634
    %4643 = vadd.xlane.f32.xlu0 %v4642
    %v4644 = vpop.xlane.xlu0 %4643
    %v4645 = vrcp.pop %v4639
    %v4646 = vrcp.pop %v4644
    %v4647 = vmul.f32 %v4639, %v4645
    %v4648 = vmul.f32 %v4644, %v4646
    %v4649 = vsub.f32 2.0, %v4647
    %v4650 = vsub.f32 2.0, %v4648
    %v4651 = vmul.f32 %v4645, %v4649
    %v4652 = vmul.f32 %v4646, %v4650
    %v4653 = vmul.f32 %v4342, %v4651
    %v4654 = vmul.f32 %v4347, %v4652
    %s4655 = scalar_select %p4390, 1, 0
    %v4656 = vstv %s4655
    %vm4657 = vcmp.eq.s32.totalorder %v4656, 1
    %v4658 = vsel %vm4657, %v4653, 0.0
    %v4659 = vsel %vm4657, %v4654, 0.0
    %v4660 = vmul.f32 %v4658, %v4374
    %v4661 = vmul.f32 %v4658, %v4375
    %v4662 = vmul.f32 %v4658, %v4376
    %v4663 = vmul.f32 %v4658, %v4377
    %v4664 = vmul.f32 %v4659, %v4378
    %v4665 = vmul.f32 %v4659, %v4379
    %v4666 = vmul.f32 %v4659, %v4380
    %v4667 = vmul.f32 %v4659, %v4381
    %v4668 = vadd.f32 %v4306, %v4660
    %v4669 = vadd.f32 %v4307, %v4661
    %v4670 = vadd.f32 %v4308, %v4662
    %v4671 = vadd.f32 %v4309, %v4663
    %v4672 = vadd.f32 %v4310, %v4664
    %v4673 = vadd.f32 %v4311, %v4665
    %v4674 = vadd.f32 %v4312, %v4666
    %v4675 = vadd.f32 %v4313, %v4667
    %4676 = vst [vmem:[#allocation8] sm:$0xff] %v4668
    %4677 = vst [vmem:[#allocation8 + $0x8] sm:$0xff] %v4669
    %4678 = vst [vmem:[#allocation8 + $0x10] sm:$0xff] %v4670
    %4679 = vst [vmem:[#allocation8 + $0x18] sm:$0xff] %v4671
    %4680 = vst [vmem:[#allocation8 + $0x20] sm:$0xff] %v4672
    %4681 = vst [vmem:[#allocation8 + $0x28] sm:$0xff] %v4673
    %4682 = vst [vmem:[#allocation8 + $0x30] sm:$0xff] %v4674
    %4683 = vst [vmem:[#allocation8 + $0x38] sm:$0xff] %v4675
    // Predicated region
    $region26: #{tpu_custom_call.1} parent=1 // pred_check
      _
    $region27: #{tpu_custom_call.1} parent=1 // pred_check_branch
      %4685 = sbr.rel (0) target = $region29
    $region28: #{tpu_custom_call.1} parent=1 // pred_region
      %4687 = vsyncadd [#allocation4], 0
      %s4688 = sshll.u32 [#allocation8], 4
      %s4689 = int_to_ptr.vmem [resolvable:$true] %s4688
      %s4690 = sshll.u32 %s3, 4
      %s4691 = int_to_ptr.hbm [resolvable:$true] %s4690
      %4696 = dma.vmem_to_hbm [thread:$0]  %s4689, 1024, %s4691, [#allocation4], 512, 512, 32
    $region29: #{tpu_custom_call.1} parent=1 // pred_fallthru
      _
    // Predicated region
    $region30: #{tpu_custom_call.1} parent=1 // pred_check
      _
    $region31: #{tpu_custom_call.1} parent=1 // pred_check_branch
      %4698 = sbr.rel (0) target = $region33
    $region32: #{tpu_custom_call.1} parent=1 // pred_region
      %4700 = dma.done [#allocation4], 1024
    $region33: #{tpu_custom_call.1} parent=1 // pred_fallthru
      _
    %4701 = vsyncpa [#allocation3], 1
    %4702 = vsyncpa [#allocation6], 1
    %4703 = vsyncpa [#allocation4], 1

</llo_original>
